<compile_context>
chip_gen: v5e
topology: v5e:2x2
jax: 0.10.0
libtpu: 0.0.40
codegen_flags: <defaults>
</compile_context>

<pallas_src>
import jax
import jax.numpy as jnp
from jax.experimental import pallas as pl
from jax.experimental.pallas import tpu as pltpu

LANES = 128  # TPU lane width; hidden/output feature dims are padded to this.


# ---------------------------------------------------------------------------
# Kernel
# ---------------------------------------------------------------------------
def mymodel_kernel(x_ref, w1a_ref, ws_ref, bs_ref, out_ref):
    """One batch tile of the full layer chain.

    x_ref  : (tile, F_pad)      bf16   streamed per grid step
    w1a_ref: (F_pad, 128)       bf16   resident (constant index_map)
    ws_ref : (9, 128, 128)      bf16   resident stacked weights (layers after the first)
    bs_ref : (10, 1, 128)       f32    resident stacked biases
    out_ref: (tile, 128)        f32    lane-dense output tile
    """
    relu = lambda v: jnp.maximum(v, 0.0)

    def lin(x_f32, k):
        # bf16 MXU matmul, f32 accumulation, f32 bias add. Weight k of the stack uses
        # bias k+1 (bias 0 belongs to the first, narrow-K layer).
        return jnp.dot(x_f32.astype(jnp.bfloat16), ws_ref[k],
                       preferred_element_type=jnp.float32) + bs_ref[k + 1]

    x = x_ref[...]  # bf16

    # layer_1: Linear(F->10) ReLU Linear(10->15) ReLU
    h0 = jnp.dot(x, w1a_ref[...], preferred_element_type=jnp.float32) + bs_ref[0]
    p1 = relu(lin(relu(h0), 0))
    # layer_2: 15->10->7
    p2 = relu(lin(relu(lin(p1, 1)), 2))
    # ffn_layer_1 (7->7) + ReLU
    f1 = relu(lin(p2, 3))
    # layer_3 on (f1 + p2)   (padded lanes are exactly zero on both sides)
    p3 = relu(lin(relu(lin(f1 + p2, 4)), 5))
    # layer_4 on (p1 + p3)
    p4 = relu(lin(relu(lin(p1 + p3, 6)), 7))
    # ffn_layer_2 (20->P), no activation; lane-dense store
    out_ref[...] = lin(p4, 8).astype(out_ref.dtype)


# ---------------------------------------------------------------------------
# Parameter construction / packing
# ---------------------------------------------------------------------------
def init_linear(key, inner, outer):
    """Deterministic init mimicking nn.Linear (uniform +/- 1/sqrt(inner)).
    Weight stored as [inner, outer] (y = x @ W + b); bias as [1, outer]."""
    kw, kb = jax.random.split(key)
    bound = 1.0 / jnp.sqrt(jnp.asarray(inner, jnp.float32))
    w = jax.random.uniform(kw, (inner, outer), jnp.float32, -bound, bound)
    b = jax.random.uniform(kb, (1, outer), jnp.float32, -bound, bound)
    return w, b


def make_params(features, predictions, seed=0):
    key = jax.random.PRNGKey(seed)
    keys = jax.random.split(key, 10)
    params = []
    params += init_linear(keys[0], features, 10)     # layer_1.0
    params += init_linear(keys[1], 10, 15)           # layer_1.2
    params += init_linear(keys[2], 15, 10)           # layer_2.0
    params += init_linear(keys[3], 10, 7)            # layer_2.2
    params += init_linear(keys[4], 7, 7)              # ffn_layer_1
    params += init_linear(keys[5], 7, 10)             # layer_3.0
    params += init_linear(keys[6], 10, 15)            # layer_3.2
    params += init_linear(keys[7], 15, 10)             # layer_4.0
    params += init_linear(keys[8], 10, 20)             # layer_4.2
    params += init_linear(keys[9], 20, predictions)    # ffn_layer_2
    return params


def _round_up(x, m):
    return ((x + m - 1) // m) * m


def _pack_params(params, features_pad):
    """Pack 10 (W, b) pairs into (w1a bf16, wstack bf16 (9,128,128), bstack f32 (10,1,128)).
    Zero padding on rows/cols/biases keeps padded lanes exactly zero through ReLU and the
    residual adds."""
    ws = params[0::2]
    bs = params[1::2]

    w0 = ws[0]
    w1a = jnp.zeros((features_pad, LANES), jnp.bfloat16)
    w1a = w1a.at[:w0.shape[0], :w0.shape[1]].set(w0.astype(jnp.bfloat16))

    wstack = jnp.zeros((9, LANES, LANES), jnp.bfloat16)
    for k, w in enumerate(ws[1:]):
        wstack = wstack.at[k, :w.shape[0], :w.shape[1]].set(w.astype(jnp.bfloat16))

    bstack = jnp.zeros((10, 1, LANES), jnp.float32)
    for k, b in enumerate(bs):
        bstack = bstack.at[k, :, :b.shape[1]].set(b)

    return w1a, wstack, bstack


# ---------------------------------------------------------------------------
# Wrapper
# ---------------------------------------------------------------------------
def _choose_tile(batch, tile):
    """Pick a batch tile: no larger than the (padded) batch, and small enough that the
    grid keeps >= 2 steps when the batch allows it (keeps both v7x TensorCores busy)."""
    batch_p = _round_up(batch, 128)
    tile = max(128, min(_round_up(tile, 128), batch_p))
    if batch_p // tile < 2 and batch_p >= 256:
        tile = _round_up(batch_p // 2, 128)
    return tile


def mymodel_forward(x, params, predictions, tile=512, trim_output=True):
    batch, features = x.shape
    assert features <= LANES and predictions <= LANES

    tile = _choose_tile(batch, tile)
    batch_p = _round_up(batch, tile)
    f_pad = _round_up(features, 16)  # bf16 sublane packing multiple; keeps input lanes narrow

    x_p = jnp.pad(x.astype(jnp.bfloat16),
                  ((0, batch_p - batch), (0, f_pad - features)))
    w1a, wstack, bstack = _pack_params(params, f_pad)

    x_spec = pl.BlockSpec((tile, f_pad), lambda i: (i, 0))
    # Parameters: constant index_maps -> DMA'd once, VMEM-resident across all grid steps.
    w1a_spec = pl.BlockSpec((f_pad, LANES), lambda i: (0, 0))
    ws_spec = pl.BlockSpec((9, LANES, LANES), lambda i: (0, 0, 0))
    bs_spec = pl.BlockSpec((10, 1, LANES), lambda i: (0, 0, 0))
    out_spec = pl.BlockSpec((tile, LANES), lambda i: (i, 0))

    out_p = pl.pallas_call(
        mymodel_kernel,
        out_shape=jax.ShapeDtypeStruct((batch_p, LANES), jnp.float32),
        grid=(batch_p // tile,),
        in_specs=[x_spec, w1a_spec, ws_spec, bs_spec],
        out_specs=out_spec,
        compiler_params=pltpu.CompilerParams(
            dimension_semantics=("parallel",)),
    )(x_p, w1a, wstack, bstack)

    if not trim_output:
        # Padded contract: (batch_p, 128) f32; real data is [:batch, :predictions].
        return out_p
    return out_p[:batch, :predictions]


# ---------------------------------------------------------------------------
# References (pure JAX, unpadded) for correctness checks
# ---------------------------------------------------------------------------
def reference_forward(x, params, mixed=False):
    (w1a, b1a, w1b, b1b, w2a, b2a, w2b, b2b, wf1, bf1,
     w3a, b3a, w3b, b3b, w4a, b4a, w4b, b4b, wf2, bf2) = params
    relu = lambda v: jnp.maximum(v, 0.0)

    if mixed:
        def lin(a, w, b):
            return jnp.dot(a.astype(jnp.bfloat16), w.astype(jnp.bfloat16),
                           preferred_element_type=jnp.float32) + b
    else:
        def lin(a, w, b):
            return a @ w + b

    p1 = relu(lin(relu(lin(x, w1a, b1a)), w1b, b1b))
    p2 = relu(lin(relu(lin(p1, w2a, b2a)), w2b, b2b))
    f1 = relu(lin(p2, wf1, bf1))
    p3 = relu(lin(relu(lin(f1 + p2, w3a, b3a)), w3b, b3b))
    p4 = relu(lin(relu(lin(p1 + p3, w4a, b4a)), w4b, b4b))
    return lin(p4, wf2, bf2)


if __name__ == "__main__":
    features = 12
    predictions = 5
    batch = 1024  # with tile=512 this gives a 2-step parallel batch grid

    key = jax.random.PRNGKey(0)
    x = jax.random.normal(key, (batch, features), jnp.float32)
    params = make_params(features, predictions, seed=0)

    out = mymodel_forward(x, params, predictions)
    out = jax.block_until_ready(out)
    assert out.shape == (batch, predictions)

    # Exact-math check against a mixed-precision reference (same bf16 casts, f32 accum).
    ref_mixed = reference_forward(x, params, mixed=True)
    assert jnp.allclose(out, ref_mixed, atol=2e-3, rtol=1e-3), \
        float(jnp.max(jnp.abs(out - ref_mixed)))

    # Fidelity check against the full-f32 reference (loose tolerance: bf16 inputs).
    ref_f32 = reference_forward(x, params, mixed=False)
    assert float(jnp.max(jnp.abs(out - ref_f32))) < 1e-1

    print("KERNEL_OK")
</pallas_src>

<mosaic_0001>
module attributes {stable_mosaic.version = 11 : i64} {
  func.func @mymodel_kernel(%arg0: i32, %arg1: memref<512x16xbf16, #tpu.memory_space<vmem>>, %arg2: memref<16x128xbf16, #tpu.memory_space<vmem>>, %arg3: memref<9x128x128xbf16, #tpu.memory_space<vmem>>, %arg4: memref<10x1x128xf32, #tpu.memory_space<vmem>>, %arg5: memref<512x128xf32, #tpu.memory_space<vmem>>) attributes {dimension_semantics = [#tpu.dimension_semantics<parallel>], iteration_bounds = array<i64: 2>, scalar_prefetch = 0 : i64, scratch_operands = 0 : i64, tpu.core_type = #tpu.core_type<tc>, window_params = [{transform_indices = @transform_0, window_bounds = array<i64: 512, 16>}, {pipeline_mode = #tpu.pipeline_mode<synchronous>, transform_indices = @transform_1, window_bounds = array<i64: 16, 128>}, {pipeline_mode = #tpu.pipeline_mode<synchronous>, transform_indices = @transform_2, window_bounds = array<i64: 9, 128, 128>}, {pipeline_mode = #tpu.pipeline_mode<synchronous>, transform_indices = @transform_3, window_bounds = array<i64: 10, 1, 128>}, {transform_indices = @transform_4, window_bounds = array<i64: 512, 128>}]} {
    %c0 = arith.constant 0 : index
    %c0_0 = arith.constant 0 : index
    %0 = vector.load %arg1[%c0, %c0_0] : memref<512x16xbf16, #tpu.memory_space<vmem>>, vector<512x16xbf16>
    %c0_1 = arith.constant 0 : index
    %c0_2 = arith.constant 0 : index
    %1 = vector.load %arg2[%c0_1, %c0_2] : memref<16x128xbf16, #tpu.memory_space<vmem>>, vector<16x128xbf16>
    %cst = arith.constant dense<0.000000e+00> : vector<512x128xf32>
    %2 = tpu.matmul %0, %1, %cst {dimension_numbers = #tpu.dot_dimension_numbers<[1], [0], [0], [1], [0, 0, 1, 1], [], []>} : vector<512x16xbf16>, vector<16x128xbf16>, vector<512x128xf32> -> vector<512x128xf32>
    %c0_3 = arith.constant 0 : index
    %c0_4 = arith.constant 0 : index
    %c0_5 = arith.constant 0 : index
    %3 = vector.load %arg4[%c0_3, %c0_4, %c0_5] : memref<10x1x128xf32, #tpu.memory_space<vmem>>, vector<1x1x128xf32>
    %4 = vector.shape_cast %3 : vector<1x1x128xf32> to vector<1x128xf32>
    %5 = vector.broadcast %4 : vector<1x128xf32> to vector<512x128xf32>
    %6 = arith.addf %2, %5 : vector<512x128xf32>
    %cst_6 = arith.constant 0.000000e+00 : f32
    %7 = vector.broadcast %cst_6 : f32 to vector<512x128xf32>
    %8 = arith.maximumf %6, %7 : vector<512x128xf32>
    %9 = arith.truncf %8 : vector<512x128xf32> to vector<512x128xbf16>
    %c0_7 = arith.constant 0 : index
    %c0_8 = arith.constant 0 : index
    %c0_9 = arith.constant 0 : index
    %10 = vector.load %arg3[%c0_7, %c0_8, %c0_9] : memref<9x128x128xbf16, #tpu.memory_space<vmem>>, vector<1x128x128xbf16>
    %11 = vector.shape_cast %10 : vector<1x128x128xbf16> to vector<128x128xbf16>
    %cst_10 = arith.constant dense<0.000000e+00> : vector<512x128xf32>
    %12 = tpu.matmul %9, %11, %cst_10 {dimension_numbers = #tpu.dot_dimension_numbers<[1], [0], [0], [1], [0, 0, 1, 1], [], []>} : vector<512x128xbf16>, vector<128x128xbf16>, vector<512x128xf32> -> vector<512x128xf32>
    %c1 = arith.constant 1 : index
    %c0_11 = arith.constant 0 : index
    %c0_12 = arith.constant 0 : index
    %13 = vector.load %arg4[%c1, %c0_11, %c0_12] : memref<10x1x128xf32, #tpu.memory_space<vmem>>, vector<1x1x128xf32>
    %14 = vector.shape_cast %13 : vector<1x1x128xf32> to vector<1x128xf32>
    %15 = vector.broadcast %14 : vector<1x128xf32> to vector<512x128xf32>
    %16 = arith.addf %12, %15 : vector<512x128xf32>
    %cst_13 = arith.constant 0.000000e+00 : f32
    %17 = vector.broadcast %cst_13 : f32 to vector<512x128xf32>
    %18 = arith.maximumf %16, %17 : vector<512x128xf32>
    %19 = arith.truncf %18 : vector<512x128xf32> to vector<512x128xbf16>
    %c1_14 = arith.constant 1 : index
    %c0_15 = arith.constant 0 : index
    %c0_16 = arith.constant 0 : index
    %20 = vector.load %arg3[%c1_14, %c0_15, %c0_16] : memref<9x128x128xbf16, #tpu.memory_space<vmem>>, vector<1x128x128xbf16>
    %21 = vector.shape_cast %20 : vector<1x128x128xbf16> to vector<128x128xbf16>
    %cst_17 = arith.constant dense<0.000000e+00> : vector<512x128xf32>
    %22 = tpu.matmul %19, %21, %cst_17 {dimension_numbers = #tpu.dot_dimension_numbers<[1], [0], [0], [1], [0, 0, 1, 1], [], []>} : vector<512x128xbf16>, vector<128x128xbf16>, vector<512x128xf32> -> vector<512x128xf32>
    %c2 = arith.constant 2 : index
    %c0_18 = arith.constant 0 : index
    %c0_19 = arith.constant 0 : index
    %23 = vector.load %arg4[%c2, %c0_18, %c0_19] : memref<10x1x128xf32, #tpu.memory_space<vmem>>, vector<1x1x128xf32>
    %24 = vector.shape_cast %23 : vector<1x1x128xf32> to vector<1x128xf32>
    %25 = vector.broadcast %24 : vector<1x128xf32> to vector<512x128xf32>
    %26 = arith.addf %22, %25 : vector<512x128xf32>
    %cst_20 = arith.constant 0.000000e+00 : f32
    %27 = vector.broadcast %cst_20 : f32 to vector<512x128xf32>
    %28 = arith.maximumf %26, %27 : vector<512x128xf32>
    %29 = arith.truncf %28 : vector<512x128xf32> to vector<512x128xbf16>
    %c2_21 = arith.constant 2 : index
    %c0_22 = arith.constant 0 : index
    %c0_23 = arith.constant 0 : index
    %30 = vector.load %arg3[%c2_21, %c0_22, %c0_23] : memref<9x128x128xbf16, #tpu.memory_space<vmem>>, vector<1x128x128xbf16>
    %31 = vector.shape_cast %30 : vector<1x128x128xbf16> to vector<128x128xbf16>
    %cst_24 = arith.constant dense<0.000000e+00> : vector<512x128xf32>
    %32 = tpu.matmul %29, %31, %cst_24 {dimension_numbers = #tpu.dot_dimension_numbers<[1], [0], [0], [1], [0, 0, 1, 1], [], []>} : vector<512x128xbf16>, vector<128x128xbf16>, vector<512x128xf32> -> vector<512x128xf32>
    %c3 = arith.constant 3 : index
    %c0_25 = arith.constant 0 : index
    %c0_26 = arith.constant 0 : index
    %33 = vector.load %arg4[%c3, %c0_25, %c0_26] : memref<10x1x128xf32, #tpu.memory_space<vmem>>, vector<1x1x128xf32>
    %34 = vector.shape_cast %33 : vector<1x1x128xf32> to vector<1x128xf32>
    %35 = vector.broadcast %34 : vector<1x128xf32> to vector<512x128xf32>
    %36 = arith.addf %32, %35 : vector<512x128xf32>
    %cst_27 = arith.constant 0.000000e+00 : f32
    %37 = vector.broadcast %cst_27 : f32 to vector<512x128xf32>
    %38 = arith.maximumf %36, %37 : vector<512x128xf32>
    %39 = arith.truncf %38 : vector<512x128xf32> to vector<512x128xbf16>
    %c3_28 = arith.constant 3 : index
    %c0_29 = arith.constant 0 : index
    %c0_30 = arith.constant 0 : index
    %40 = vector.load %arg3[%c3_28, %c0_29, %c0_30] : memref<9x128x128xbf16, #tpu.memory_space<vmem>>, vector<1x128x128xbf16>
    %41 = vector.shape_cast %40 : vector<1x128x128xbf16> to vector<128x128xbf16>
    %cst_31 = arith.constant dense<0.000000e+00> : vector<512x128xf32>
    %42 = tpu.matmul %39, %41, %cst_31 {dimension_numbers = #tpu.dot_dimension_numbers<[1], [0], [0], [1], [0, 0, 1, 1], [], []>} : vector<512x128xbf16>, vector<128x128xbf16>, vector<512x128xf32> -> vector<512x128xf32>
    %c4 = arith.constant 4 : index
    %c0_32 = arith.constant 0 : index
    %c0_33 = arith.constant 0 : index
    %43 = vector.load %arg4[%c4, %c0_32, %c0_33] : memref<10x1x128xf32, #tpu.memory_space<vmem>>, vector<1x1x128xf32>
    %44 = vector.shape_cast %43 : vector<1x1x128xf32> to vector<1x128xf32>
    %45 = vector.broadcast %44 : vector<1x128xf32> to vector<512x128xf32>
    %46 = arith.addf %42, %45 : vector<512x128xf32>
    %cst_34 = arith.constant 0.000000e+00 : f32
    %47 = vector.broadcast %cst_34 : f32 to vector<512x128xf32>
    %48 = arith.maximumf %46, %47 : vector<512x128xf32>
    %49 = arith.addf %48, %38 : vector<512x128xf32>
    %50 = arith.truncf %49 : vector<512x128xf32> to vector<512x128xbf16>
    %c4_35 = arith.constant 4 : index
    %c0_36 = arith.constant 0 : index
    %c0_37 = arith.constant 0 : index
    %51 = vector.load %arg3[%c4_35, %c0_36, %c0_37] : memref<9x128x128xbf16, #tpu.memory_space<vmem>>, vector<1x128x128xbf16>
    %52 = vector.shape_cast %51 : vector<1x128x128xbf16> to vector<128x128xbf16>
    %cst_38 = arith.constant dense<0.000000e+00> : vector<512x128xf32>
    %53 = tpu.matmul %50, %52, %cst_38 {dimension_numbers = #tpu.dot_dimension_numbers<[1], [0], [0], [1], [0, 0, 1, 1], [], []>} : vector<512x128xbf16>, vector<128x128xbf16>, vector<512x128xf32> -> vector<512x128xf32>
    %c5 = arith.constant 5 : index
    %c0_39 = arith.constant 0 : index
    %c0_40 = arith.constant 0 : index
    %54 = vector.load %arg4[%c5, %c0_39, %c0_40] : memref<10x1x128xf32, #tpu.memory_space<vmem>>, vector<1x1x128xf32>
    %55 = vector.shape_cast %54 : vector<1x1x128xf32> to vector<1x128xf32>
    %56 = vector.broadcast %55 : vector<1x128xf32> to vector<512x128xf32>
    %57 = arith.addf %53, %56 : vector<512x128xf32>
    %cst_41 = arith.constant 0.000000e+00 : f32
    %58 = vector.broadcast %cst_41 : f32 to vector<512x128xf32>
    %59 = arith.maximumf %57, %58 : vector<512x128xf32>
    %60 = arith.truncf %59 : vector<512x128xf32> to vector<512x128xbf16>
    %c5_42 = arith.constant 5 : index
    %c0_43 = arith.constant 0 : index
    %c0_44 = arith.constant 0 : index
    %61 = vector.load %arg3[%c5_42, %c0_43, %c0_44] : memref<9x128x128xbf16, #tpu.memory_space<vmem>>, vector<1x128x128xbf16>
    %62 = vector.shape_cast %61 : vector<1x128x128xbf16> to vector<128x128xbf16>
    %cst_45 = arith.constant dense<0.000000e+00> : vector<512x128xf32>
    %63 = tpu.matmul %60, %62, %cst_45 {dimension_numbers = #tpu.dot_dimension_numbers<[1], [0], [0], [1], [0, 0, 1, 1], [], []>} : vector<512x128xbf16>, vector<128x128xbf16>, vector<512x128xf32> -> vector<512x128xf32>
    %c6 = arith.constant 6 : index
    %c0_46 = arith.constant 0 : index
    %c0_47 = arith.constant 0 : index
    %64 = vector.load %arg4[%c6, %c0_46, %c0_47] : memref<10x1x128xf32, #tpu.memory_space<vmem>>, vector<1x1x128xf32>
    %65 = vector.shape_cast %64 : vector<1x1x128xf32> to vector<1x128xf32>
    %66 = vector.broadcast %65 : vector<1x128xf32> to vector<512x128xf32>
    %67 = arith.addf %63, %66 : vector<512x128xf32>
    %cst_48 = arith.constant 0.000000e+00 : f32
    %68 = vector.broadcast %cst_48 : f32 to vector<512x128xf32>
    %69 = arith.maximumf %67, %68 : vector<512x128xf32>
    %70 = arith.addf %18, %69 : vector<512x128xf32>
    %71 = arith.truncf %70 : vector<512x128xf32> to vector<512x128xbf16>
    %c6_49 = arith.constant 6 : index
    %c0_50 = arith.constant 0 : index
    %c0_51 = arith.constant 0 : index
    %72 = vector.load %arg3[%c6_49, %c0_50, %c0_51] : memref<9x128x128xbf16, #tpu.memory_space<vmem>>, vector<1x128x128xbf16>
    %73 = vector.shape_cast %72 : vector<1x128x128xbf16> to vector<128x128xbf16>
    %cst_52 = arith.constant dense<0.000000e+00> : vector<512x128xf32>
    %74 = tpu.matmul %71, %73, %cst_52 {dimension_numbers = #tpu.dot_dimension_numbers<[1], [0], [0], [1], [0, 0, 1, 1], [], []>} : vector<512x128xbf16>, vector<128x128xbf16>, vector<512x128xf32> -> vector<512x128xf32>
    %c7 = arith.constant 7 : index
    %c0_53 = arith.constant 0 : index
    %c0_54 = arith.constant 0 : index
    %75 = vector.load %arg4[%c7, %c0_53, %c0_54] : memref<10x1x128xf32, #tpu.memory_space<vmem>>, vector<1x1x128xf32>
    %76 = vector.shape_cast %75 : vector<1x1x128xf32> to vector<1x128xf32>
    %77 = vector.broadcast %76 : vector<1x128xf32> to vector<512x128xf32>
    %78 = arith.addf %74, %77 : vector<512x128xf32>
    %cst_55 = arith.constant 0.000000e+00 : f32
    %79 = vector.broadcast %cst_55 : f32 to vector<512x128xf32>
    %80 = arith.maximumf %78, %79 : vector<512x128xf32>
    %81 = arith.truncf %80 : vector<512x128xf32> to vector<512x128xbf16>
    %c7_56 = arith.constant 7 : index
    %c0_57 = arith.constant 0 : index
    %c0_58 = arith.constant 0 : index
    %82 = vector.load %arg3[%c7_56, %c0_57, %c0_58] : memref<9x128x128xbf16, #tpu.memory_space<vmem>>, vector<1x128x128xbf16>
    %83 = vector.shape_cast %82 : vector<1x128x128xbf16> to vector<128x128xbf16>
    %cst_59 = arith.constant dense<0.000000e+00> : vector<512x128xf32>
    %84 = tpu.matmul %81, %83, %cst_59 {dimension_numbers = #tpu.dot_dimension_numbers<[1], [0], [0], [1], [0, 0, 1, 1], [], []>} : vector<512x128xbf16>, vector<128x128xbf16>, vector<512x128xf32> -> vector<512x128xf32>
    %c8 = arith.constant 8 : index
    %c0_60 = arith.constant 0 : index
    %c0_61 = arith.constant 0 : index
    %85 = vector.load %arg4[%c8, %c0_60, %c0_61] : memref<10x1x128xf32, #tpu.memory_space<vmem>>, vector<1x1x128xf32>
    %86 = vector.shape_cast %85 : vector<1x1x128xf32> to vector<1x128xf32>
    %87 = vector.broadcast %86 : vector<1x128xf32> to vector<512x128xf32>
    %88 = arith.addf %84, %87 : vector<512x128xf32>
    %cst_62 = arith.constant 0.000000e+00 : f32
    %89 = vector.broadcast %cst_62 : f32 to vector<512x128xf32>
    %90 = arith.maximumf %88, %89 : vector<512x128xf32>
    %91 = arith.truncf %90 : vector<512x128xf32> to vector<512x128xbf16>
    %c8_63 = arith.constant 8 : index
    %c0_64 = arith.constant 0 : index
    %c0_65 = arith.constant 0 : index
    %92 = vector.load %arg3[%c8_63, %c0_64, %c0_65] : memref<9x128x128xbf16, #tpu.memory_space<vmem>>, vector<1x128x128xbf16>
    %93 = vector.shape_cast %92 : vector<1x128x128xbf16> to vector<128x128xbf16>
    %cst_66 = arith.constant dense<0.000000e+00> : vector<512x128xf32>
    %94 = tpu.matmul %91, %93, %cst_66 {dimension_numbers = #tpu.dot_dimension_numbers<[1], [0], [0], [1], [0, 0, 1, 1], [], []>} : vector<512x128xbf16>, vector<128x128xbf16>, vector<512x128xf32> -> vector<512x128xf32>
    %c9 = arith.constant 9 : index
    %c0_67 = arith.constant 0 : index
    %c0_68 = arith.constant 0 : index
    %95 = vector.load %arg4[%c9, %c0_67, %c0_68] : memref<10x1x128xf32, #tpu.memory_space<vmem>>, vector<1x1x128xf32>
    %96 = vector.shape_cast %95 : vector<1x1x128xf32> to vector<1x128xf32>
    %97 = vector.broadcast %96 : vector<1x128xf32> to vector<512x128xf32>
    %98 = arith.addf %94, %97 : vector<512x128xf32>
    %c0_69 = arith.constant 0 : index
    %c0_70 = arith.constant 0 : index
    %99 = vector.load %arg5[%c0_69, %c0_70] : memref<512x128xf32, #tpu.memory_space<vmem>>, vector<512x128xf32>
    tpu.vector_store %arg5[%c0_69, %c0_70], %98 {strides = array<i32>} : memref<512x128xf32, #tpu.memory_space<vmem>>, vector<512x128xf32>,
    return
  }
  func.func @transform_0(%arg0: i32) -> (i32, i32) {
    %c0_i32 = arith.constant 0 : i32
    %c0_i32_0 = arith.constant 0 : i32
    return %arg0, %c0_i32 : i32, i32
  }
  func.func @transform_1(%arg0: i32) -> (i32, i32) {
    %c0_i32 = arith.constant 0 : i32
    %c0_i32_0 = arith.constant 0 : i32
    %c0_i32_1 = arith.constant 0 : i32
    return %c0_i32, %c0_i32_0 : i32, i32
  }
  func.func @transform_2(%arg0: i32) -> (i32, i32, i32) {
    %c0_i32 = arith.constant 0 : i32
    %c0_i32_0 = arith.constant 0 : i32
    %c0_i32_1 = arith.constant 0 : i32
    %c0_i32_2 = arith.constant 0 : i32
    return %c0_i32, %c0_i32_0, %c0_i32_1 : i32, i32, i32
  }
  func.func @transform_3(%arg0: i32) -> (i32, i32, i32) {
    %c0_i32 = arith.constant 0 : i32
    %c0_i32_0 = arith.constant 0 : i32
    %c0_i32_1 = arith.constant 0 : i32
    %c0_i32_2 = arith.constant 0 : i32
    return %c0_i32, %c0_i32_0, %c0_i32_1 : i32, i32, i32
  }
  func.func @transform_4(%arg0: i32) -> (i32, i32) {
    %c0_i32 = arith.constant 0 : i32
    %c0_i32_0 = arith.constant 0 : i32
    return %arg0, %c0_i32 : i32, i32
  }
}

</mosaic_0001>

<llo_original>
// kernel: tpu_custom_call.1
$region0: #{tpu_custom_call.1}
  #allocation0 [shape = 'u32[]', space=smem, size = 0x4, offset = 0x4, fixed_abs, tag = 'smem constant byte address 0x4 - core index']
  #allocation1 [shape = 'u32[72,128]{1,0:T(1,128)}', space=vmem, size = 0x9000, scoped, tag = 'internal scratch']
  %s0 = inlined_call_operand.vmem [shape: bf16[1024,16], index: 0, kind: input, shape index: {}]
  %s1 = inlined_call_operand.hbm [shape: bf16[16,128], index: 1, kind: input, shape index: {}]
  %s2 = inlined_call_operand.vmem [shape: bf16[9,128,128], index: 2, kind: input, shape index: {}]
  %s3 = inlined_call_operand.hbm [shape: f32[10,1,128], index: 3, kind: input, shape index: {}]
  %s4 = inlined_call_operand.hbm [shape: f32[1024,128], index: 4, kind: output, shape index: {}]
  %s5 = sld [smem:[#allocation0]]
  $region57: #{tpu_custom_call.1} parent=0
    _
  %s7 = ssub.s32 1, %s5
  %s8 = scalar_select 0, %s7, %s5
  $region1: #{tpu_custom_call.1} parent=0
    #allocation2 [shape = 'u8[4096]{0}', space=vmem, size = 0x1000, scoped, tag = 'input window, operand 1, single buffered']
    #allocation3 [shape = 's32[2]{0}', space=sflag, size = 0x8, scoped, tag = 'scoped memory for tpu_custom_call.1']
    #allocation4 [shape = 's32[2]{0}', space=sflag, size = 0x8, scoped, tag = 'scoped memory for tpu_custom_call.1']
    #allocation5 [shape = 'u8[5120]{0}', space=vmem, size = 0x1400, scoped, tag = 'input window, operand 3, single buffered']
    #allocation6 [shape = 's32[1]{0}', space=sflag, size = 0x4, scoped, tag = 'scoped memory for tpu_custom_call.1']
    #allocation7 [shape = 'u8[524288]{0}', space=vmem, size = 0x80000, scoped, tag = 'output window, operand 0']
    %9 = vsyncpa [#allocation3], 0
    %10 = vsyncpa [#allocation6], 0
    %11 = vsyncpa [#allocation4], 0
    %s12 = scalar_lea.sflag [#allocation4], 1
    %13 = vsyncpa %s12, 0
    loop: start=0, step=1, limit=4
    $region2: #{tpu_custom_call.1} parent=1 // loop_pre_header
      _
    $region3: #{tpu_custom_call.1} parent=1 // loop_header
      %s15 = sphi 0, %s19
      %p16 = scmp.ge.s32.totalorder %s15, 4
      %s25 = sphi 0, %s27
      %s28 = sphi 0, %s25
      %s29 = sphi 0, %s28
      %s45 = sphi 0, %s29
      %s49 = sphi 0, %s49
      %s51 = sphi 0, %s49
      %s52 = sphi 0, %s51
      %s66 = sphi 0, %s52
      %s70 = sphi 0, %s70
      %s72 = sphi 0, %s70
      %s73 = sphi 0, %s72
      %s87 = sphi 0, %s73
      %s91 = sphi 0, %s91
      %s93 = sphi 0, %s91
      %s94 = sphi 0, %s93
      %s108 = sphi 0, %s94
      %s114 = sphi 0, %s116
      %s117 = sphi 0, %s114
      %s118 = sphi 0, %s117
      %s134 = sphi 0, %s118
    $region4: #{tpu_custom_call.1} parent=1 // loop_header_branch
      %18 = sbr.rel (%p16) target = $region8
    $region5: #{tpu_custom_call.1} parent=1 // loop_body
      %s20 = ssub.s32 %s15, 1
      %s21 = ssub.s32 %s15, 2
      %s22 = sadd.s32 %s15, 1
      %s23 = ssub.s32 %s15, %s22
      %p24 = scmp.eq.s32.totalorder %s23, 0
      %s26 = sadd.s32 %s25, 1
      %s27 = scalar_select %p24, %s25, %s26
      %p30 = pneg %p24
      %p31 = scmp.eq.s32.totalorder %s15, 1
      %p32 = por %p30, %p31
      %p33 = scmp.ne.s32.totalorder %s25, %s28
      %p34 = scmp.eq.s32.totalorder %s15, 0
      %p35 = por %p33, %p34
      %p36 = scmp.ne.s32.totalorder %s25, %s28
      %p37 = scmp.eq.s32.totalorder %s20, 1
      %p38 = por %p36, %p37
      %p39 = scmp.ne.s32.totalorder %s28, %s29
      %p40 = scmp.eq.s32.totalorder %s20, 0
      %p41 = por %p39, %p40
      %p42 = scmp.ne.s32.totalorder %s28, %s29
      %p43 = scmp.eq.s32.totalorder %s21, 1
      %p44 = por %p42, %p43
      %p46 = scmp.ne.s32.totalorder %s29, %s45
      %p47 = scmp.eq.s32.totalorder %s21, 0
      %p48 = por %p46, %p47
      %s50 = sadd.s32 %s49, 1
      %p53 = scmp.eq.s32.totalorder %s15, 1
      %p54 = scmp.ne.s32.totalorder %s49, %s51
      %p55 = scmp.eq.s32.totalorder %s15, 0
      %p56 = por %p54, %p55
      %p57 = scmp.ne.s32.totalorder %s49, %s51
      %p58 = scmp.eq.s32.totalorder %s20, 1
      %p59 = por %p57, %p58
      %p60 = scmp.ne.s32.totalorder %s51, %s52
      %p61 = scmp.eq.s32.totalorder %s20, 0
      %p62 = por %p60, %p61
      %p63 = scmp.ne.s32.totalorder %s51, %s52
      %p64 = scmp.eq.s32.totalorder %s21, 1
      %p65 = por %p63, %p64
      %p67 = scmp.ne.s32.totalorder %s52, %s66
      %p68 = scmp.eq.s32.totalorder %s21, 0
      %p69 = por %p67, %p68
      %s71 = sadd.s32 %s70, 1
      %p74 = scmp.eq.s32.totalorder %s15, 1
      %p75 = scmp.ne.s32.totalorder %s70, %s72
      %p76 = scmp.eq.s32.totalorder %s15, 0
      %p77 = por %p75, %p76
      %p78 = scmp.ne.s32.totalorder %s70, %s72
      %p79 = scmp.eq.s32.totalorder %s20, 1
      %p80 = por %p78, %p79
      %p81 = scmp.ne.s32.totalorder %s72, %s73
      %p82 = scmp.eq.s32.totalorder %s20, 0
      %p83 = por %p81, %p82
      %p84 = scmp.ne.s32.totalorder %s72, %s73
      %p85 = scmp.eq.s32.totalorder %s21, 1
      %p86 = por %p84, %p85
      %p88 = scmp.ne.s32.totalorder %s73, %s87
      %p89 = scmp.eq.s32.totalorder %s21, 0
      %p90 = por %p88, %p89
      %s92 = sadd.s32 %s91, 1
      %p95 = scmp.eq.s32.totalorder %s15, 1
      %p96 = scmp.ne.s32.totalorder %s91, %s93
      %p97 = scmp.eq.s32.totalorder %s15, 0
      %p98 = por %p96, %p97
      %p99 = scmp.ne.s32.totalorder %s91, %s93
      %p100 = scmp.eq.s32.totalorder %s20, 1
      %p101 = por %p99, %p100
      %p102 = scmp.ne.s32.totalorder %s93, %s94
      %p103 = scmp.eq.s32.totalorder %s20, 0
      %p104 = por %p102, %p103
      %p105 = scmp.ne.s32.totalorder %s93, %s94
      %p106 = scmp.eq.s32.totalorder %s21, 1
      %p107 = por %p105, %p106
      %p109 = scmp.ne.s32.totalorder %s94, %s108
      %p110 = scmp.eq.s32.totalorder %s21, 0
      %p111 = por %p109, %p110
      %s112 = ssub.s32 %s15, %s22
      %p113 = scmp.eq.s32.totalorder %s112, 0
      %s115 = sadd.s32 %s114, 1
      %s116 = scalar_select %p113, %s114, %s115
      %p119 = pneg %p113
      %p120 = scmp.eq.s32.totalorder %s15, 1
      %p121 = por %p119, %p120
      %p122 = scmp.ne.s32.totalorder %s114, %s117
      %p123 = scmp.eq.s32.totalorder %s15, 0
      %p124 = por %p122, %p123
      %p125 = scmp.ne.s32.totalorder %s114, %s117
      %p126 = scmp.eq.s32.totalorder %s20, 1
      %p127 = por %p125, %p126
      %p128 = scmp.ne.s32.totalorder %s117, %s118
      %p129 = scmp.eq.s32.totalorder %s20, 0
      %p130 = por %p128, %p129
      %p131 = scmp.ne.s32.totalorder %s117, %s118
      %p132 = scmp.eq.s32.totalorder %s21, 1
      %p133 = por %p131, %p132
      %p135 = scmp.ne.s32.totalorder %s118, %s134
      %p136 = scmp.eq.s32.totalorder %s21, 0
      %p137 = por %p135, %p136
      %p138 = scmp.le.s32.totalorder 1, %s15
      %p139 = scmp.lt.s32.totalorder %s15, 3
      %p140 = pnand %p138, %p139
      %p141 = pneg %p140
      // Predicated region
      $region9: #{tpu_custom_call.1} parent=5 // pred_check
        _
      $region10: #{tpu_custom_call.1} parent=5 // pred_check_branch
        %143 = sbr.rel (%p140) target = $region12
      $region11: #{tpu_custom_call.1} parent=5 // pred_region
        %s144 = ssub.s32 %s15, 1
        // Predicated region
        $region13: #{tpu_custom_call.1} parent=11 // pred_check
          %p145 = pneg %p62
        $region14: #{tpu_custom_call.1} parent=11 // pred_check_branch
          %147 = sbr.rel (%p145) target = $region16
        $region15: #{tpu_custom_call.1} parent=11 // pred_region
          %149 = vsyncadd [#allocation3], 0
          %s150 = sshll.u32 %s1, 4
          %s151 = int_to_ptr.hbm [resolvable:$true] %s150
          %s152 = sshll.u32 [#allocation2], 4
          %s153 = int_to_ptr.vmem [resolvable:$true] %s152
          %158 = dma.hbm_to_vmem [thread:$0]  %s151, 128, %s153, [#allocation3], 64, 64, 4
        $region16: #{tpu_custom_call.1} parent=11 // pred_fallthru
          _
        // Predicated region
        $region17: #{tpu_custom_call.1} parent=11 // pred_check
          %p159 = pneg %p83
        $region18: #{tpu_custom_call.1} parent=11 // pred_check_branch
          %161 = sbr.rel (%p159) target = $region20
        $region19: #{tpu_custom_call.1} parent=11 // pred_region
          _
        $region20: #{tpu_custom_call.1} parent=11 // pred_fallthru
          _
        // Predicated region
        $region21: #{tpu_custom_call.1} parent=11 // pred_check
          %p162 = pneg %p104
        $region22: #{tpu_custom_call.1} parent=11 // pred_check_branch
          %164 = sbr.rel (%p162) target = $region24
        $region23: #{tpu_custom_call.1} parent=11 // pred_region
          %166 = vsyncadd [#allocation6], 0
          %s167 = sshll.u32 %s3, 4
          %s168 = int_to_ptr.hbm [resolvable:$true] %s167
          %s169 = sshll.u32 [#allocation5], 4
          %s170 = int_to_ptr.vmem [resolvable:$true] %s169
          %175 = dma.hbm_to_vmem [thread:$0]  %s168, 160, %s170, [#allocation6], 16, 16, 1
        $region24: #{tpu_custom_call.1} parent=11 // pred_fallthru
          _
      $region12: #{tpu_custom_call.1} parent=5 // pred_fallthru
        _
      %p176 = scmp.lt.s32.totalorder %s15, 2
      // Predicated region
      $region25: #{tpu_custom_call.1} parent=5 // pred_check
        %p177 = pneg %p176
      $region26: #{tpu_custom_call.1} parent=5 // pred_check_branch
        %179 = sbr.rel (%p177) target = $region28
      $region27: #{tpu_custom_call.1} parent=5 // pred_region
        // Predicated region
        $region29: #{tpu_custom_call.1} parent=27 // pred_check
          %p180 = pneg %p35
        $region30: #{tpu_custom_call.1} parent=27 // pred_check_branch
          %182 = sbr.rel (%p180) target = $region32
        $region31: #{tpu_custom_call.1} parent=27 // pred_region
          %s183 = smul.u32 64, %s15
          %p184 = scmp.lt.s32.totalorder %s183, 127
          %s185 = scalar_select %p184, %s183, 127
          %s186 = smul.addr %s185, 4
          %s187 = scalar_lea.vmem %s0, %s186
          %s188 = smul.u32 64, %s15
        $region32: #{tpu_custom_call.1} parent=27 // pred_fallthru
          _
      $region28: #{tpu_custom_call.1} parent=5 // pred_fallthru
        _
      %p189 = scmp.le.s32.totalorder 1, %s15
      %p190 = scmp.lt.s32.totalorder %s15, 3
      %p191 = pnand %p189, %p190
      %p192 = pneg %p191
      // Predicated region
      $region33: #{tpu_custom_call.1} parent=5 // pred_check
        _
      $region34: #{tpu_custom_call.1} parent=5 // pred_check_branch
        %194 = sbr.rel (%p191) target = $region36
      $region35: #{tpu_custom_call.1} parent=5 // pred_region
        %s195 = ssub.s32 %s15, 1
        // Predicated region
        $region37: #{tpu_custom_call.1} parent=35 // pred_check
          %p196 = pneg %p62
        $region38: #{tpu_custom_call.1} parent=35 // pred_check_branch
          %198 = sbr.rel (%p196) target = $region40
        $region39: #{tpu_custom_call.1} parent=35 // pred_region
          %200 = dma.done [#allocation3], 128
        $region40: #{tpu_custom_call.1} parent=35 // pred_fallthru
          _
        // Predicated region
        $region41: #{tpu_custom_call.1} parent=35 // pred_check
          %p201 = pneg %p104
        $region42: #{tpu_custom_call.1} parent=35 // pred_check_branch
          %203 = sbr.rel (%p201) target = $region44
        $region43: #{tpu_custom_call.1} parent=35 // pred_region
          %205 = dma.done [#allocation6], 160
        $region44: #{tpu_custom_call.1} parent=35 // pred_fallthru
          _
        %s206 = smul.u32 64, %s20
        %p207 = scmp.lt.s32.totalorder %s206, 127
        %s208 = scalar_select %p207, %s206, 127
        %s209 = smul.addr %s208, 4
        %s210 = scalar_lea.vmem %s0, %s209
        %p211 = pneg %p41
        %p212 = pneg %p38
        %p213 = pneg %p62
        %p214 = pneg %p59
        %p215 = pneg %p83
        %p216 = pneg %p80
        %p217 = pneg %p104
        %p218 = pneg %p101
        %p219 = pneg %p130
        %p220 = pneg %p127
        %s221 = sand.u32 %s117, 1
        %s222 = scalar_lea.sflag [#allocation4], %s221
        %s223 = sand.u32 %s117, 1
        %s224 = smul.addr %s223, 512
        %s225 = scalar_lea.vmem [#allocation7], %s224
        %s226 = smul.u32 64, %s20
        %p227 = scmp.lt.s32.totalorder %s226, 127
        %s228 = scalar_select %p227, %s226, 127
        %s229 = smul.addr %s228, 4
        %s230 = scalar_lea.vmem %s0, %s229
        %s231 = smul.u32 64, %s20
        %s232 = smul.u32 64, %s20
        %v234 = vld [vmem:[%s230] sm:$0xf]
        %v235 = vld [vmem:[%s230 + $0x4] sm:$0xf]
        %v236 = vld [vmem:[%s230 + $0x8] sm:$0xf]
        %v237 = vld [vmem:[%s230 + $0xc] sm:$0xf]
        %v238 = vld [vmem:[%s230 + $0x10] sm:$0xf]
        %v239 = vld [vmem:[%s230 + $0x14] sm:$0xf]
        %v240 = vld [vmem:[%s230 + $0x18] sm:$0xf]
        %v241 = vld [vmem:[%s230 + $0x1c] sm:$0xf]
        %v242 = vld [vmem:[%s230 + $0x20] sm:$0xf]
        %v243 = vld [vmem:[%s230 + $0x24] sm:$0xf]
        %v244 = vld [vmem:[%s230 + $0x28] sm:$0xf]
        %v245 = vld [vmem:[%s230 + $0x2c] sm:$0xf]
        %v246 = vld [vmem:[%s230 + $0x30] sm:$0xf]
        %v247 = vld [vmem:[%s230 + $0x34] sm:$0xf]
        %v248 = vld [vmem:[%s230 + $0x38] sm:$0xf]
        %v249 = vld [vmem:[%s230 + $0x3c] sm:$0xf]
        %v250 = vld [vmem:[%s230 + $0x40] sm:$0xf]
        %v251 = vld [vmem:[%s230 + $0x44] sm:$0xf]
        %v252 = vld [vmem:[%s230 + $0x48] sm:$0xf]
        %v253 = vld [vmem:[%s230 + $0x4c] sm:$0xf]
        %v254 = vld [vmem:[%s230 + $0x50] sm:$0xf]
        %v255 = vld [vmem:[%s230 + $0x54] sm:$0xf]
        %v256 = vld [vmem:[%s230 + $0x58] sm:$0xf]
        %v257 = vld [vmem:[%s230 + $0x5c] sm:$0xf]
        %v258 = vld [vmem:[%s230 + $0x60] sm:$0xf]
        %v259 = vld [vmem:[%s230 + $0x64] sm:$0xf]
        %v260 = vld [vmem:[%s230 + $0x68] sm:$0xf]
        %v261 = vld [vmem:[%s230 + $0x6c] sm:$0xf]
        %v262 = vld [vmem:[%s230 + $0x70] sm:$0xf]
        %v263 = vld [vmem:[%s230 + $0x74] sm:$0xf]
        %v264 = vld [vmem:[%s230 + $0x78] sm:$0xf]
        %v265 = vld [vmem:[%s230 + $0x7c] sm:$0xf]
        %v266 = vld [vmem:[%s230 + $0x80] sm:$0xf]
        %v267 = vld [vmem:[%s230 + $0x84] sm:$0xf]
        %v268 = vld [vmem:[%s230 + $0x88] sm:$0xf]
        %v269 = vld [vmem:[%s230 + $0x8c] sm:$0xf]
        %v270 = vld [vmem:[%s230 + $0x90] sm:$0xf]
        %v271 = vld [vmem:[%s230 + $0x94] sm:$0xf]
        %v272 = vld [vmem:[%s230 + $0x98] sm:$0xf]
        %v273 = vld [vmem:[%s230 + $0x9c] sm:$0xf]
        %v274 = vld [vmem:[%s230 + $0xa0] sm:$0xf]
        %v275 = vld [vmem:[%s230 + $0xa4] sm:$0xf]
        %v276 = vld [vmem:[%s230 + $0xa8] sm:$0xf]
        %v277 = vld [vmem:[%s230 + $0xac] sm:$0xf]
        %v278 = vld [vmem:[%s230 + $0xb0] sm:$0xf]
        %v279 = vld [vmem:[%s230 + $0xb4] sm:$0xf]
        %v280 = vld [vmem:[%s230 + $0xb8] sm:$0xf]
        %v281 = vld [vmem:[%s230 + $0xbc] sm:$0xf]
        %v282 = vld [vmem:[%s230 + $0xc0] sm:$0xf]
        %v283 = vld [vmem:[%s230 + $0xc4] sm:$0xf]
        %v284 = vld [vmem:[%s230 + $0xc8] sm:$0xf]
        %v285 = vld [vmem:[%s230 + $0xcc] sm:$0xf]
        %v286 = vld [vmem:[%s230 + $0xd0] sm:$0xf]
        %v287 = vld [vmem:[%s230 + $0xd4] sm:$0xf]
        %v288 = vld [vmem:[%s230 + $0xd8] sm:$0xf]
        %v289 = vld [vmem:[%s230 + $0xdc] sm:$0xf]
        %v290 = vld [vmem:[%s230 + $0xe0] sm:$0xf]
        %v291 = vld [vmem:[%s230 + $0xe4] sm:$0xf]
        %v292 = vld [vmem:[%s230 + $0xe8] sm:$0xf]
        %v293 = vld [vmem:[%s230 + $0xec] sm:$0xf]
        %v294 = vld [vmem:[%s230 + $0xf0] sm:$0xf]
        %v295 = vld [vmem:[%s230 + $0xf4] sm:$0xf]
        %v296 = vld [vmem:[%s230 + $0xf8] sm:$0xf]
        %v297 = vld [vmem:[%s230 + $0xfc] sm:$0xf]
        %v298 = vld [vmem:[#allocation2] sm:$0xf]
        %v299 = vld [vmem:[#allocation2 + $0x4] sm:$0xf]
        %v300 = vld [vmem:[#allocation5] sm:$0x1]
        %v302 = vperm.slane %v300, 0
        %v368 = vunpack.c.l.b16 %v234
        %v369 = vunpack.c.l.b16 %v235
        %v370 = vunpack.c.l.b16 %v236
        %v371 = vunpack.c.l.b16 %v237
        %v372 = vunpack.c.l.b16 %v238
        %v373 = vunpack.c.l.b16 %v239
        %v374 = vunpack.c.l.b16 %v240
        %v375 = vunpack.c.l.b16 %v241
        %v376 = vunpack.c.l.b16 %v242
        %v377 = vunpack.c.l.b16 %v243
        %v378 = vunpack.c.l.b16 %v244
        %v379 = vunpack.c.l.b16 %v245
        %v380 = vunpack.c.l.b16 %v246
        %v381 = vunpack.c.l.b16 %v247
        %v382 = vunpack.c.l.b16 %v248
        %v383 = vunpack.c.l.b16 %v249
        %v384 = vunpack.c.l.b16 %v250
        %v385 = vunpack.c.l.b16 %v251
        %v386 = vunpack.c.l.b16 %v252
        %v387 = vunpack.c.l.b16 %v253
        %v388 = vunpack.c.l.b16 %v254
        %v389 = vunpack.c.l.b16 %v255
        %v390 = vunpack.c.l.b16 %v256
        %v391 = vunpack.c.l.b16 %v257
        %v392 = vunpack.c.l.b16 %v258
        %v393 = vunpack.c.l.b16 %v259
        %v394 = vunpack.c.l.b16 %v260
        %v395 = vunpack.c.l.b16 %v261
        %v396 = vunpack.c.l.b16 %v262
        %v397 = vunpack.c.l.b16 %v263
        %v398 = vunpack.c.l.b16 %v264
        %v399 = vunpack.c.l.b16 %v265
        %v400 = vunpack.c.l.b16 %v266
        %v401 = vunpack.c.l.b16 %v267
        %v402 = vunpack.c.l.b16 %v268
        %v403 = vunpack.c.l.b16 %v269
        %v404 = vunpack.c.l.b16 %v270
        %v405 = vunpack.c.l.b16 %v271
        %v406 = vunpack.c.l.b16 %v272
        %v407 = vunpack.c.l.b16 %v273
        %v408 = vunpack.c.l.b16 %v274
        %v409 = vunpack.c.l.b16 %v275
        %v410 = vunpack.c.l.b16 %v276
        %v411 = vunpack.c.l.b16 %v277
        %v412 = vunpack.c.l.b16 %v278
        %v413 = vunpack.c.l.b16 %v279
        %v414 = vunpack.c.l.b16 %v280
        %v415 = vunpack.c.l.b16 %v281
        %v416 = vunpack.c.l.b16 %v282
        %v417 = vunpack.c.l.b16 %v283
        %v418 = vunpack.c.l.b16 %v284
        %v419 = vunpack.c.l.b16 %v285
        %v420 = vunpack.c.l.b16 %v286
        %v421 = vunpack.c.l.b16 %v287
        %v422 = vunpack.c.l.b16 %v288
        %v423 = vunpack.c.l.b16 %v289
        %v424 = vunpack.c.l.b16 %v290
        %v425 = vunpack.c.l.b16 %v291
        %v426 = vunpack.c.l.b16 %v292
        %v427 = vunpack.c.l.b16 %v293
        %v428 = vunpack.c.l.b16 %v294
        %v429 = vunpack.c.l.b16 %v295
        %v430 = vunpack.c.l.b16 %v296
        %v431 = vunpack.c.l.b16 %v297
        %v432 = vpack.c.b16 %v369, %v368
        %v433 = vpack.c.b16 %v371, %v370
        %v434 = vpack.c.b16 %v373, %v372
        %v435 = vpack.c.b16 %v375, %v374
        %v436 = vpack.c.b16 %v377, %v376
        %v437 = vpack.c.b16 %v379, %v378
        %v438 = vpack.c.b16 %v381, %v380
        %v439 = vpack.c.b16 %v383, %v382
        %v440 = vpack.c.b16 %v385, %v384
        %v441 = vpack.c.b16 %v387, %v386
        %v442 = vpack.c.b16 %v389, %v388
        %v443 = vpack.c.b16 %v391, %v390
        %v444 = vpack.c.b16 %v393, %v392
        %v445 = vpack.c.b16 %v395, %v394
        %v446 = vpack.c.b16 %v397, %v396
        %v447 = vpack.c.b16 %v399, %v398
        %v448 = vpack.c.b16 %v401, %v400
        %v449 = vpack.c.b16 %v403, %v402
        %v450 = vpack.c.b16 %v405, %v404
        %v451 = vpack.c.b16 %v407, %v406
        %v452 = vpack.c.b16 %v409, %v408
        %v453 = vpack.c.b16 %v411, %v410
        %v454 = vpack.c.b16 %v413, %v412
        %v455 = vpack.c.b16 %v415, %v414
        %v456 = vpack.c.b16 %v417, %v416
        %v457 = vpack.c.b16 %v419, %v418
        %v458 = vpack.c.b16 %v421, %v420
        %v459 = vpack.c.b16 %v423, %v422
        %v460 = vpack.c.b16 %v425, %v424
        %v461 = vpack.c.b16 %v427, %v426
        %v462 = vpack.c.b16 %v429, %v428
        %v463 = vpack.c.b16 %v431, %v430
        %v466 = vunpack.c.l.b16 %v298
        %v467 = vunpack.c.l.b16 %v299
        %v468 = vpack.c.b16 %v467, %v466
        %vm470 = vcmask 130048
        %v472 = vsel %vm470, %v432, 0
        %v475 = vsel %vm470, %v433, 0
        %v478 = vsel %vm470, %v434, 0
        %v481 = vsel %vm470, %v435, 0
        %v484 = vsel %vm470, %v436, 0
        %v487 = vsel %vm470, %v437, 0
        %v490 = vsel %vm470, %v438, 0
        %v493 = vsel %vm470, %v439, 0
        %v496 = vsel %vm470, %v440, 0
        %v499 = vsel %vm470, %v441, 0
        %v502 = vsel %vm470, %v442, 0
        %v505 = vsel %vm470, %v443, 0
        %v508 = vsel %vm470, %v444, 0
        %v511 = vsel %vm470, %v445, 0
        %v514 = vsel %vm470, %v446, 0
        %v517 = vsel %vm470, %v447, 0
        %v520 = vsel %vm470, %v448, 0
        %v523 = vsel %vm470, %v449, 0
        %v526 = vsel %vm470, %v450, 0
        %v529 = vsel %vm470, %v451, 0
        %v532 = vsel %vm470, %v452, 0
        %v535 = vsel %vm470, %v453, 0
        %v538 = vsel %vm470, %v454, 0
        %v541 = vsel %vm470, %v455, 0
        %v544 = vsel %vm470, %v456, 0
        %v547 = vsel %vm470, %v457, 0
        %v550 = vsel %vm470, %v458, 0
        %v553 = vsel %vm470, %v459, 0
        %v556 = vsel %vm470, %v460, 0
        %v559 = vsel %vm470, %v461, 0
        %v562 = vsel %vm470, %v462, 0
        %v565 = vsel %vm470, %v463, 0
        %567 = vmatpush.bf16.msra.mxu0 0
        %568 = vmatpush.bf16.msra.mxu0 0
        %569 = vmatpush.bf16.msra.mxu0 0
        %570 = vmatpush.bf16.msra.mxu0 0
        %571 = vmatpush.bf16.msra.mxu0 0
        %572 = vmatpush.bf16.msra.mxu0 0
        %573 = vmatpush.bf16.msra.mxu0 0
        %574 = vmatpush.bf16.msra.mxu0 %v468
        %575 = vmatmul.bf16.gmra.mxu0 %v472
        %v576 = vpop.f32.mrf.mxu0
        %v577 = vadd.f32 %v302, %v576
        %v578 = vpop.f32.mrf.mxu0
        %v579 = vadd.f32 %v302, %v578
        %580 = vmatmul.bf16.gmra.mxu0 %v475
        %v581 = vpop.f32.mrf.mxu0
        %v582 = vadd.f32 %v302, %v581
        %v583 = vpop.f32.mrf.mxu0
        %v584 = vadd.f32 %v302, %v583
        %585 = vmatmul.bf16.gmra.mxu0 %v478
        %v586 = vpop.f32.mrf.mxu0
        %v587 = vadd.f32 %v302, %v586
        %v588 = vpop.f32.mrf.mxu0
        %v589 = vadd.f32 %v302, %v588
        %590 = vmatmul.bf16.gmra.mxu0 %v481
        %v591 = vpop.f32.mrf.mxu0
        %v592 = vadd.f32 %v302, %v591
        %v593 = vpop.f32.mrf.mxu0
        %v594 = vadd.f32 %v302, %v593
        %595 = vmatmul.bf16.gmra.mxu0 %v484
        %v596 = vpop.f32.mrf.mxu0
        %v597 = vadd.f32 %v302, %v596
        %v598 = vpop.f32.mrf.mxu0
        %v599 = vadd.f32 %v302, %v598
        %600 = vmatmul.bf16.gmra.mxu0 %v487
        %v601 = vpop.f32.mrf.mxu0
        %v602 = vadd.f32 %v302, %v601
        %v603 = vpop.f32.mrf.mxu0
        %v604 = vadd.f32 %v302, %v603
        %605 = vmatmul.bf16.gmra.mxu0 %v490
        %v606 = vpop.f32.mrf.mxu0
        %v607 = vadd.f32 %v302, %v606
        %v608 = vpop.f32.mrf.mxu0
        %v609 = vadd.f32 %v302, %v608
        %610 = vmatmul.bf16.gmra.mxu0 %v493
        %v611 = vpop.f32.mrf.mxu0
        %v612 = vadd.f32 %v302, %v611
        %v613 = vpop.f32.mrf.mxu0
        %v614 = vadd.f32 %v302, %v613
        %615 = vmatmul.bf16.gmra.mxu0 %v496
        %v616 = vpop.f32.mrf.mxu0
        %v617 = vadd.f32 %v302, %v616
        %v618 = vpop.f32.mrf.mxu0
        %v619 = vadd.f32 %v302, %v618
        %620 = vmatmul.bf16.gmra.mxu0 %v499
        %v621 = vpop.f32.mrf.mxu0
        %v622 = vadd.f32 %v302, %v621
        %v623 = vpop.f32.mrf.mxu0
        %v624 = vadd.f32 %v302, %v623
        %625 = vmatmul.bf16.gmra.mxu0 %v502
        %v626 = vpop.f32.mrf.mxu0
        %v627 = vadd.f32 %v302, %v626
        %v628 = vpop.f32.mrf.mxu0
        %v629 = vadd.f32 %v302, %v628
        %630 = vmatmul.bf16.gmra.mxu0 %v505
        %v631 = vpop.f32.mrf.mxu0
        %v632 = vadd.f32 %v302, %v631
        %v633 = vpop.f32.mrf.mxu0
        %v634 = vadd.f32 %v302, %v633
        %635 = vmatmul.bf16.gmra.mxu0 %v508
        %v636 = vpop.f32.mrf.mxu0
        %v637 = vadd.f32 %v302, %v636
        %v638 = vpop.f32.mrf.mxu0
        %v639 = vadd.f32 %v302, %v638
        %640 = vmatmul.bf16.gmra.mxu0 %v511
        %v641 = vpop.f32.mrf.mxu0
        %v642 = vadd.f32 %v302, %v641
        %v643 = vpop.f32.mrf.mxu0
        %v644 = vadd.f32 %v302, %v643
        %645 = vmatmul.bf16.gmra.mxu0 %v514
        %v646 = vpop.f32.mrf.mxu0
        %v647 = vadd.f32 %v302, %v646
        %v648 = vpop.f32.mrf.mxu0
        %v649 = vadd.f32 %v302, %v648
        %650 = vmatmul.bf16.gmra.mxu0 %v517
        %v651 = vpop.f32.mrf.mxu0
        %v652 = vadd.f32 %v302, %v651
        %v653 = vpop.f32.mrf.mxu0
        %v654 = vadd.f32 %v302, %v653
        %655 = vmatmul.bf16.gmra.mxu0 %v520
        %v656 = vpop.f32.mrf.mxu0
        %v657 = vadd.f32 %v302, %v656
        %v658 = vpop.f32.mrf.mxu0
        %v659 = vadd.f32 %v302, %v658
        %660 = vmatmul.bf16.gmra.mxu0 %v523
        %v661 = vpop.f32.mrf.mxu0
        %v662 = vadd.f32 %v302, %v661
        %v663 = vpop.f32.mrf.mxu0
        %v664 = vadd.f32 %v302, %v663
        %665 = vmatmul.bf16.gmra.mxu0 %v526
        %v666 = vpop.f32.mrf.mxu0
        %v667 = vadd.f32 %v302, %v666
        %v668 = vpop.f32.mrf.mxu0
        %v669 = vadd.f32 %v302, %v668
        %670 = vmatmul.bf16.gmra.mxu0 %v529
        %v671 = vpop.f32.mrf.mxu0
        %v672 = vadd.f32 %v302, %v671
        %v673 = vpop.f32.mrf.mxu0
        %v674 = vadd.f32 %v302, %v673
        %675 = vmatmul.bf16.gmra.mxu0 %v532
        %v676 = vpop.f32.mrf.mxu0
        %v677 = vadd.f32 %v302, %v676
        %v678 = vpop.f32.mrf.mxu0
        %v679 = vadd.f32 %v302, %v678
        %680 = vmatmul.bf16.gmra.mxu0 %v535
        %v681 = vpop.f32.mrf.mxu0
        %v682 = vadd.f32 %v302, %v681
        %v683 = vpop.f32.mrf.mxu0
        %v684 = vadd.f32 %v302, %v683
        %685 = vmatmul.bf16.gmra.mxu0 %v538
        %v686 = vpop.f32.mrf.mxu0
        %v687 = vadd.f32 %v302, %v686
        %v688 = vpop.f32.mrf.mxu0
        %v689 = vadd.f32 %v302, %v688
        %690 = vmatmul.bf16.gmra.mxu0 %v541
        %v691 = vpop.f32.mrf.mxu0
        %v692 = vadd.f32 %v302, %v691
        %v693 = vpop.f32.mrf.mxu0
        %v694 = vadd.f32 %v302, %v693
        %695 = vmatmul.bf16.gmra.mxu0 %v544
        %v696 = vpop.f32.mrf.mxu0
        %v697 = vadd.f32 %v302, %v696
        %v698 = vpop.f32.mrf.mxu0
        %v699 = vadd.f32 %v302, %v698
        %700 = vmatmul.bf16.gmra.mxu0 %v547
        %v701 = vpop.f32.mrf.mxu0
        %v702 = vadd.f32 %v302, %v701
        %v703 = vpop.f32.mrf.mxu0
        %v704 = vadd.f32 %v302, %v703
        %705 = vmatmul.bf16.gmra.mxu0 %v550
        %v706 = vpop.f32.mrf.mxu0
        %v707 = vadd.f32 %v302, %v706
        %v708 = vpop.f32.mrf.mxu0
        %v709 = vadd.f32 %v302, %v708
        %710 = vmatmul.bf16.gmra.mxu0 %v553
        %v711 = vpop.f32.mrf.mxu0
        %v712 = vadd.f32 %v302, %v711
        %v713 = vpop.f32.mrf.mxu0
        %v714 = vadd.f32 %v302, %v713
        %715 = vmatmul.bf16.gmra.mxu0 %v556
        %v716 = vpop.f32.mrf.mxu0
        %v717 = vadd.f32 %v302, %v716
        %v718 = vpop.f32.mrf.mxu0
        %v719 = vadd.f32 %v302, %v718
        %720 = vmatmul.bf16.gmra.mxu0 %v559
        %v721 = vpop.f32.mrf.mxu0
        %v722 = vadd.f32 %v302, %v721
        %v723 = vpop.f32.mrf.mxu0
        %v724 = vadd.f32 %v302, %v723
        %725 = vmatmul.bf16.gmra.mxu0 %v562
        %v726 = vpop.f32.mrf.mxu0
        %v727 = vadd.f32 %v302, %v726
        %v728 = vpop.f32.mrf.mxu0
        %v729 = vadd.f32 %v302, %v728
        %730 = vmatmul.bf16.gmra.mxu0 %v565
        %v731 = vpop.f32.mrf.mxu0
        %v732 = vadd.f32 %v302, %v731
        %v733 = vpop.f32.mrf.mxu0
        %v734 = vadd.f32 %v302, %v733
        %735 = vdwg.mxu0
        %v736 = vmax.f32 %v577, 0.0
        %v737 = vmax.f32 %v579, 0.0
        %v738 = vmax.f32 %v582, 0.0
        %v739 = vmax.f32 %v584, 0.0
        %v740 = vmax.f32 %v587, 0.0
        %v741 = vmax.f32 %v589, 0.0
        %v742 = vmax.f32 %v592, 0.0
        %v743 = vmax.f32 %v594, 0.0
        %v744 = vmax.f32 %v597, 0.0
        %v745 = vmax.f32 %v599, 0.0
        %v746 = vmax.f32 %v602, 0.0
        %v747 = vmax.f32 %v604, 0.0
        %v748 = vmax.f32 %v607, 0.0
        %v749 = vmax.f32 %v609, 0.0
        %v750 = vmax.f32 %v612, 0.0
        %v751 = vmax.f32 %v614, 0.0
        %v752 = vmax.f32 %v617, 0.0
        %v753 = vmax.f32 %v619, 0.0
        %v754 = vmax.f32 %v622, 0.0
        %v755 = vmax.f32 %v624, 0.0
        %v756 = vmax.f32 %v627, 0.0
        %v757 = vmax.f32 %v629, 0.0
        %v758 = vmax.f32 %v632, 0.0
        %v759 = vmax.f32 %v634, 0.0
        %v760 = vmax.f32 %v637, 0.0
        %v761 = vmax.f32 %v639, 0.0
        %v762 = vmax.f32 %v642, 0.0
        %v763 = vmax.f32 %v644, 0.0
        %v764 = vmax.f32 %v647, 0.0
        %v765 = vmax.f32 %v649, 0.0
        %v766 = vmax.f32 %v652, 0.0
        %v767 = vmax.f32 %v654, 0.0
        %v768 = vmax.f32 %v657, 0.0
        %v769 = vmax.f32 %v659, 0.0
        %v770 = vmax.f32 %v662, 0.0
        %v771 = vmax.f32 %v664, 0.0
        %v772 = vmax.f32 %v667, 0.0
        %v773 = vmax.f32 %v669, 0.0
        %v774 = vmax.f32 %v672, 0.0
        %v775 = vmax.f32 %v674, 0.0
        %v776 = vmax.f32 %v677, 0.0
        %v777 = vmax.f32 %v679, 0.0
        %v778 = vmax.f32 %v682, 0.0
        %v779 = vmax.f32 %v684, 0.0
        %v780 = vmax.f32 %v687, 0.0
        %v781 = vmax.f32 %v689, 0.0
        %v782 = vmax.f32 %v692, 0.0
        %v783 = vmax.f32 %v694, 0.0
        %v784 = vmax.f32 %v697, 0.0
        %v785 = vmax.f32 %v699, 0.0
        %v786 = vmax.f32 %v702, 0.0
        %v787 = vmax.f32 %v704, 0.0
        %v788 = vmax.f32 %v707, 0.0
        %v789 = vmax.f32 %v709, 0.0
        %v790 = vmax.f32 %v712, 0.0
        %v791 = vmax.f32 %v714, 0.0
        %v792 = vmax.f32 %v717, 0.0
        %v793 = vmax.f32 %v719, 0.0
        %v794 = vmax.f32 %v722, 0.0
        %v795 = vmax.f32 %v724, 0.0
        %v796 = vmax.f32 %v727, 0.0
        %v797 = vmax.f32 %v729, 0.0
        %v798 = vmax.f32 %v732, 0.0
        %v799 = vmax.f32 %v734, 0.0
        %v800 = vpack.c.bf16 %v737, %v736
        %v801 = vpack.c.bf16 %v739, %v738
        %v802 = vpack.c.bf16 %v741, %v740
        %v803 = vpack.c.bf16 %v743, %v742
        %v804 = vpack.c.bf16 %v745, %v744
        %v805 = vpack.c.bf16 %v747, %v746
        %v806 = vpack.c.bf16 %v749, %v748
        %v807 = vpack.c.bf16 %v751, %v750
        %v808 = vpack.c.bf16 %v753, %v752
        %v809 = vpack.c.bf16 %v755, %v754
        %v810 = vpack.c.bf16 %v757, %v756
        %v811 = vpack.c.bf16 %v759, %v758
        %v812 = vpack.c.bf16 %v761, %v760
        %v813 = vpack.c.bf16 %v763, %v762
        %v814 = vpack.c.bf16 %v765, %v764
        %v815 = vpack.c.bf16 %v767, %v766
        %v816 = vpack.c.bf16 %v769, %v768
        %v817 = vpack.c.bf16 %v771, %v770
        %v818 = vpack.c.bf16 %v773, %v772
        %v819 = vpack.c.bf16 %v775, %v774
        %v820 = vpack.c.bf16 %v777, %v776
        %v821 = vpack.c.bf16 %v779, %v778
        %v822 = vpack.c.bf16 %v781, %v780
        %v823 = vpack.c.bf16 %v783, %v782
        %v824 = vpack.c.bf16 %v785, %v784
        %v825 = vpack.c.bf16 %v787, %v786
        %v826 = vpack.c.bf16 %v789, %v788
        %v827 = vpack.c.bf16 %v791, %v790
        %v828 = vpack.c.bf16 %v793, %v792
        %v829 = vpack.c.bf16 %v795, %v794
        %v830 = vpack.c.bf16 %v797, %v796
        %v831 = vpack.c.bf16 %v799, %v798
        %v832 = vld [vmem:[%s2] sm:$0xf]
        %v833 = vld [vmem:[%s2 + $0x4] sm:$0xf]
        %v834 = vld [vmem:[%s2 + $0x8] sm:$0xf]
        %v835 = vld [vmem:[%s2 + $0xc] sm:$0xf]
        %v836 = vld [vmem:[%s2 + $0x10] sm:$0xf]
        %v837 = vld [vmem:[%s2 + $0x14] sm:$0xf]
        %v838 = vld [vmem:[%s2 + $0x18] sm:$0xf]
        %v839 = vld [vmem:[%s2 + $0x1c] sm:$0xf]
        %v840 = vld [vmem:[%s2 + $0x20] sm:$0xf]
        %v841 = vld [vmem:[%s2 + $0x24] sm:$0xf]
        %v842 = vld [vmem:[%s2 + $0x28] sm:$0xf]
        %v843 = vld [vmem:[%s2 + $0x2c] sm:$0xf]
        %v844 = vld [vmem:[%s2 + $0x30] sm:$0xf]
        %v845 = vld [vmem:[%s2 + $0x34] sm:$0xf]
        %v846 = vld [vmem:[%s2 + $0x38] sm:$0xf]
        %v847 = vld [vmem:[%s2 + $0x3c] sm:$0xf]
        %s848 = scalar_lea.vmem [#allocation5], 1
        %v849 = vld [vmem:[%s848] sm:$0x1]
        %v851 = vperm.slane %v849, 0
        %v869 = vunpack.c.l.b16 %v832
        %v870 = vunpack.c.l.b16 %v833
        %v871 = vunpack.c.l.b16 %v834
        %v872 = vunpack.c.l.b16 %v835
        %v873 = vunpack.c.l.b16 %v836
        %v874 = vunpack.c.l.b16 %v837
        %v875 = vunpack.c.l.b16 %v838
        %v876 = vunpack.c.l.b16 %v839
        %v877 = vunpack.c.l.b16 %v840
        %v878 = vunpack.c.l.b16 %v841
        %v879 = vunpack.c.l.b16 %v842
        %v880 = vunpack.c.l.b16 %v843
        %v881 = vunpack.c.l.b16 %v844
        %v882 = vunpack.c.l.b16 %v845
        %v883 = vunpack.c.l.b16 %v846
        %v884 = vunpack.c.l.b16 %v847
        %v885 = vpack.c.b16 %v870, %v869
        %v886 = vpack.c.b16 %v872, %v871
        %v887 = vpack.c.b16 %v874, %v873
        %v888 = vpack.c.b16 %v876, %v875
        %v889 = vpack.c.b16 %v878, %v877
        %v890 = vpack.c.b16 %v880, %v879
        %v891 = vpack.c.b16 %v882, %v881
        %v892 = vpack.c.b16 %v884, %v883
        %901 = vmatpush.bf16.msra.mxu0 %v892
        %902 = vmatpush.bf16.msra.mxu0 %v891
        %903 = vmatpush.bf16.msra.mxu0 %v890
        %904 = vmatpush.bf16.msra.mxu0 %v889
        %905 = vmatpush.bf16.msra.mxu0 %v888
        %906 = vmatpush.bf16.msra.mxu0 %v887
        %907 = vmatpush.bf16.msra.mxu0 %v886
        %908 = vmatpush.bf16.msra.mxu0 %v885
        %909 = vmatmul.bf16.gmra.mxu0 %v800
        %v910 = vpop.f32.mrf.mxu0
        %v911 = vadd.f32 %v851, %v910
        %v912 = vpop.f32.mrf.mxu0
        %v913 = vadd.f32 %v851, %v912
        %914 = vmatmul.bf16.gmra.mxu0 %v801
        %v915 = vpop.f32.mrf.mxu0
        %v916 = vadd.f32 %v851, %v915
        %v917 = vpop.f32.mrf.mxu0
        %v918 = vadd.f32 %v851, %v917
        %919 = vmatmul.bf16.gmra.mxu0 %v802
        %v920 = vpop.f32.mrf.mxu0
        %v921 = vadd.f32 %v851, %v920
        %v922 = vpop.f32.mrf.mxu0
        %v923 = vadd.f32 %v851, %v922
        %924 = vmatmul.bf16.gmra.mxu0 %v803
        %v925 = vpop.f32.mrf.mxu0
        %v926 = vadd.f32 %v851, %v925
        %v927 = vpop.f32.mrf.mxu0
        %v928 = vadd.f32 %v851, %v927
        %929 = vmatmul.bf16.gmra.mxu0 %v804
        %v930 = vpop.f32.mrf.mxu0
        %v931 = vadd.f32 %v851, %v930
        %v932 = vpop.f32.mrf.mxu0
        %v933 = vadd.f32 %v851, %v932
        %934 = vmatmul.bf16.gmra.mxu0 %v805
        %v935 = vpop.f32.mrf.mxu0
        %v936 = vadd.f32 %v851, %v935
        %v937 = vpop.f32.mrf.mxu0
        %v938 = vadd.f32 %v851, %v937
        %939 = vmatmul.bf16.gmra.mxu0 %v806
        %v940 = vpop.f32.mrf.mxu0
        %v941 = vadd.f32 %v851, %v940
        %v942 = vpop.f32.mrf.mxu0
        %v943 = vadd.f32 %v851, %v942
        %944 = vmatmul.bf16.gmra.mxu0 %v807
        %v945 = vpop.f32.mrf.mxu0
        %v946 = vadd.f32 %v851, %v945
        %v947 = vpop.f32.mrf.mxu0
        %v948 = vadd.f32 %v851, %v947
        %949 = vmatmul.bf16.gmra.mxu0 %v808
        %v950 = vpop.f32.mrf.mxu0
        %v951 = vadd.f32 %v851, %v950
        %v952 = vpop.f32.mrf.mxu0
        %v953 = vadd.f32 %v851, %v952
        %954 = vmatmul.bf16.gmra.mxu0 %v809
        %v955 = vpop.f32.mrf.mxu0
        %v956 = vadd.f32 %v851, %v955
        %v957 = vpop.f32.mrf.mxu0
        %v958 = vadd.f32 %v851, %v957
        %959 = vmatmul.bf16.gmra.mxu0 %v810
        %v960 = vpop.f32.mrf.mxu0
        %v961 = vadd.f32 %v851, %v960
        %v962 = vpop.f32.mrf.mxu0
        %v963 = vadd.f32 %v851, %v962
        %964 = vmatmul.bf16.gmra.mxu0 %v811
        %v965 = vpop.f32.mrf.mxu0
        %v966 = vadd.f32 %v851, %v965
        %v967 = vpop.f32.mrf.mxu0
        %v968 = vadd.f32 %v851, %v967
        %969 = vmatmul.bf16.gmra.mxu0 %v812
        %v970 = vpop.f32.mrf.mxu0
        %v971 = vadd.f32 %v851, %v970
        %v972 = vpop.f32.mrf.mxu0
        %v973 = vadd.f32 %v851, %v972
        %974 = vmatmul.bf16.gmra.mxu0 %v813
        %v975 = vpop.f32.mrf.mxu0
        %v976 = vadd.f32 %v851, %v975
        %v977 = vpop.f32.mrf.mxu0
        %v978 = vadd.f32 %v851, %v977
        %979 = vmatmul.bf16.gmra.mxu0 %v814
        %v980 = vpop.f32.mrf.mxu0
        %v981 = vadd.f32 %v851, %v980
        %v982 = vpop.f32.mrf.mxu0
        %v983 = vadd.f32 %v851, %v982
        %984 = vmatmul.bf16.gmra.mxu0 %v815
        %v985 = vpop.f32.mrf.mxu0
        %v986 = vadd.f32 %v851, %v985
        %v987 = vpop.f32.mrf.mxu0
        %v988 = vadd.f32 %v851, %v987
        %989 = vmatmul.bf16.gmra.mxu0 %v816
        %v990 = vpop.f32.mrf.mxu0
        %v991 = vadd.f32 %v851, %v990
        %v992 = vpop.f32.mrf.mxu0
        %v993 = vadd.f32 %v851, %v992
        %994 = vmatmul.bf16.gmra.mxu0 %v817
        %v995 = vpop.f32.mrf.mxu0
        %v996 = vadd.f32 %v851, %v995
        %v997 = vpop.f32.mrf.mxu0
        %v998 = vadd.f32 %v851, %v997
        %999 = vmatmul.bf16.gmra.mxu0 %v818
        %v1000 = vpop.f32.mrf.mxu0
        %v1001 = vadd.f32 %v851, %v1000
        %v1002 = vpop.f32.mrf.mxu0
        %v1003 = vadd.f32 %v851, %v1002
        %1004 = vmatmul.bf16.gmra.mxu0 %v819
        %v1005 = vpop.f32.mrf.mxu0
        %v1006 = vadd.f32 %v851, %v1005
        %v1007 = vpop.f32.mrf.mxu0
        %v1008 = vadd.f32 %v851, %v1007
        %1009 = vmatmul.bf16.gmra.mxu0 %v820
        %v1010 = vpop.f32.mrf.mxu0
        %v1011 = vadd.f32 %v851, %v1010
        %v1012 = vpop.f32.mrf.mxu0
        %v1013 = vadd.f32 %v851, %v1012
        %1014 = vmatmul.bf16.gmra.mxu0 %v821
        %v1015 = vpop.f32.mrf.mxu0
        %v1016 = vadd.f32 %v851, %v1015
        %v1017 = vpop.f32.mrf.mxu0
        %v1018 = vadd.f32 %v851, %v1017
        %1019 = vmatmul.bf16.gmra.mxu0 %v822
        %v1020 = vpop.f32.mrf.mxu0
        %v1021 = vadd.f32 %v851, %v1020
        %v1022 = vpop.f32.mrf.mxu0
        %v1023 = vadd.f32 %v851, %v1022
        %1024 = vmatmul.bf16.gmra.mxu0 %v823
        %v1025 = vpop.f32.mrf.mxu0
        %v1026 = vadd.f32 %v851, %v1025
        %v1027 = vpop.f32.mrf.mxu0
        %v1028 = vadd.f32 %v851, %v1027
        %1029 = vmatmul.bf16.gmra.mxu0 %v824
        %v1030 = vpop.f32.mrf.mxu0
        %v1031 = vadd.f32 %v851, %v1030
        %v1032 = vpop.f32.mrf.mxu0
        %v1033 = vadd.f32 %v851, %v1032
        %1034 = vmatmul.bf16.gmra.mxu0 %v825
        %v1035 = vpop.f32.mrf.mxu0
        %v1036 = vadd.f32 %v851, %v1035
        %v1037 = vpop.f32.mrf.mxu0
        %v1038 = vadd.f32 %v851, %v1037
        %1039 = vmatmul.bf16.gmra.mxu0 %v826
        %v1040 = vpop.f32.mrf.mxu0
        %v1041 = vadd.f32 %v851, %v1040
        %v1042 = vpop.f32.mrf.mxu0
        %v1043 = vadd.f32 %v851, %v1042
        %1044 = vmatmul.bf16.gmra.mxu0 %v827
        %v1045 = vpop.f32.mrf.mxu0
        %v1046 = vadd.f32 %v851, %v1045
        %v1047 = vpop.f32.mrf.mxu0
        %v1048 = vadd.f32 %v851, %v1047
        %1049 = vmatmul.bf16.gmra.mxu0 %v828
        %v1050 = vpop.f32.mrf.mxu0
        %v1051 = vadd.f32 %v851, %v1050
        %v1052 = vpop.f32.mrf.mxu0
        %v1053 = vadd.f32 %v851, %v1052
        %1054 = vmatmul.bf16.gmra.mxu0 %v829
        %v1055 = vpop.f32.mrf.mxu0
        %v1056 = vadd.f32 %v851, %v1055
        %v1057 = vpop.f32.mrf.mxu0
        %v1058 = vadd.f32 %v851, %v1057
        %1059 = vmatmul.bf16.gmra.mxu0 %v830
        %v1060 = vpop.f32.mrf.mxu0
        %v1061 = vadd.f32 %v851, %v1060
        %v1062 = vpop.f32.mrf.mxu0
        %v1063 = vadd.f32 %v851, %v1062
        %1064 = vmatmul.bf16.gmra.mxu0 %v831
        %v1065 = vpop.f32.mrf.mxu0
        %v1066 = vadd.f32 %v851, %v1065
        %v1067 = vpop.f32.mrf.mxu0
        %v1068 = vadd.f32 %v851, %v1067
        %1069 = vdwg.mxu0
        %v1070 = vmax.f32 %v911, 0.0
        %v1071 = vmax.f32 %v913, 0.0
        %v1072 = vmax.f32 %v916, 0.0
        %v1073 = vmax.f32 %v918, 0.0
        %v1074 = vmax.f32 %v921, 0.0
        %v1075 = vmax.f32 %v923, 0.0
        %v1076 = vmax.f32 %v926, 0.0
        %v1077 = vmax.f32 %v928, 0.0
        %v1078 = vmax.f32 %v931, 0.0
        %v1079 = vmax.f32 %v933, 0.0
        %v1080 = vmax.f32 %v936, 0.0
        %v1081 = vmax.f32 %v938, 0.0
        %v1082 = vmax.f32 %v941, 0.0
        %v1083 = vmax.f32 %v943, 0.0
        %v1084 = vmax.f32 %v946, 0.0
        %v1085 = vmax.f32 %v948, 0.0
        %v1086 = vmax.f32 %v951, 0.0
        %v1087 = vmax.f32 %v953, 0.0
        %v1088 = vmax.f32 %v956, 0.0
        %v1089 = vmax.f32 %v958, 0.0
        %v1090 = vmax.f32 %v961, 0.0
        %v1091 = vmax.f32 %v963, 0.0
        %v1092 = vmax.f32 %v966, 0.0
        %v1093 = vmax.f32 %v968, 0.0
        %v1094 = vmax.f32 %v971, 0.0
        %v1095 = vmax.f32 %v973, 0.0
        %v1096 = vmax.f32 %v976, 0.0
        %v1097 = vmax.f32 %v978, 0.0
        %v1098 = vmax.f32 %v981, 0.0
        %v1099 = vmax.f32 %v983, 0.0
        %v1100 = vmax.f32 %v986, 0.0
        %v1101 = vmax.f32 %v988, 0.0
        %v1102 = vmax.f32 %v991, 0.0
        %v1103 = vmax.f32 %v993, 0.0
        %v1104 = vmax.f32 %v996, 0.0
        %v1105 = vmax.f32 %v998, 0.0
        %v1106 = vmax.f32 %v1001, 0.0
        %v1107 = vmax.f32 %v1003, 0.0
        %v1108 = vmax.f32 %v1006, 0.0
        %v1109 = vmax.f32 %v1008, 0.0
        %v1110 = vmax.f32 %v1011, 0.0
        %v1111 = vmax.f32 %v1013, 0.0
        %v1112 = vmax.f32 %v1016, 0.0
        %v1113 = vmax.f32 %v1018, 0.0
        %v1114 = vmax.f32 %v1021, 0.0
        %v1115 = vmax.f32 %v1023, 0.0
        %v1116 = vmax.f32 %v1026, 0.0
        %v1117 = vmax.f32 %v1028, 0.0
        %v1118 = vmax.f32 %v1031, 0.0
        %v1119 = vmax.f32 %v1033, 0.0
        %v1120 = vmax.f32 %v1036, 0.0
        %v1121 = vmax.f32 %v1038, 0.0
        %v1122 = vmax.f32 %v1041, 0.0
        %v1123 = vmax.f32 %v1043, 0.0
        %v1124 = vmax.f32 %v1046, 0.0
        %v1125 = vmax.f32 %v1048, 0.0
        %v1126 = vmax.f32 %v1051, 0.0
        %v1127 = vmax.f32 %v1053, 0.0
        %v1128 = vmax.f32 %v1056, 0.0
        %v1129 = vmax.f32 %v1058, 0.0
        %v1130 = vmax.f32 %v1061, 0.0
        %v1131 = vmax.f32 %v1063, 0.0
        %v1132 = vmax.f32 %v1066, 0.0
        %v1133 = vmax.f32 %v1068, 0.0
        %v1134 = vpack.c.bf16 %v1071, %v1070
        %v1135 = vpack.c.bf16 %v1073, %v1072
        %v1136 = vpack.c.bf16 %v1075, %v1074
        %v1137 = vpack.c.bf16 %v1077, %v1076
        %v1138 = vpack.c.bf16 %v1079, %v1078
        %v1139 = vpack.c.bf16 %v1081, %v1080
        %v1140 = vpack.c.bf16 %v1083, %v1082
        %v1141 = vpack.c.bf16 %v1085, %v1084
        %v1142 = vpack.c.bf16 %v1087, %v1086
        %v1143 = vpack.c.bf16 %v1089, %v1088
        %v1144 = vpack.c.bf16 %v1091, %v1090
        %v1145 = vpack.c.bf16 %v1093, %v1092
        %v1146 = vpack.c.bf16 %v1095, %v1094
        %v1147 = vpack.c.bf16 %v1097, %v1096
        %v1148 = vpack.c.bf16 %v1099, %v1098
        %v1149 = vpack.c.bf16 %v1101, %v1100
        %v1150 = vpack.c.bf16 %v1103, %v1102
        %v1151 = vpack.c.bf16 %v1105, %v1104
        %v1152 = vpack.c.bf16 %v1107, %v1106
        %v1153 = vpack.c.bf16 %v1109, %v1108
        %v1154 = vpack.c.bf16 %v1111, %v1110
        %v1155 = vpack.c.bf16 %v1113, %v1112
        %v1156 = vpack.c.bf16 %v1115, %v1114
        %v1157 = vpack.c.bf16 %v1117, %v1116
        %v1158 = vpack.c.bf16 %v1119, %v1118
        %v1159 = vpack.c.bf16 %v1121, %v1120
        %v1160 = vpack.c.bf16 %v1123, %v1122
        %v1161 = vpack.c.bf16 %v1125, %v1124
        %v1162 = vpack.c.bf16 %v1127, %v1126
        %v1163 = vpack.c.bf16 %v1129, %v1128
        %v1164 = vpack.c.bf16 %v1131, %v1130
        %v1165 = vpack.c.bf16 %v1133, %v1132
        %s1166 = scalar_lea.vmem %s2, 64
        %v1167 = vld [vmem:[%s1166] sm:$0xf]
        %v1168 = vld [vmem:[%s1166 + $0x4] sm:$0xf]
        %v1169 = vld [vmem:[%s1166 + $0x8] sm:$0xf]
        %v1170 = vld [vmem:[%s1166 + $0xc] sm:$0xf]
        %v1171 = vld [vmem:[%s1166 + $0x10] sm:$0xf]
        %v1172 = vld [vmem:[%s1166 + $0x14] sm:$0xf]
        %v1173 = vld [vmem:[%s1166 + $0x18] sm:$0xf]
        %v1174 = vld [vmem:[%s1166 + $0x1c] sm:$0xf]
        %v1175 = vld [vmem:[%s1166 + $0x20] sm:$0xf]
        %v1176 = vld [vmem:[%s1166 + $0x24] sm:$0xf]
        %v1177 = vld [vmem:[%s1166 + $0x28] sm:$0xf]
        %v1178 = vld [vmem:[%s1166 + $0x2c] sm:$0xf]
        %v1179 = vld [vmem:[%s1166 + $0x30] sm:$0xf]
        %v1180 = vld [vmem:[%s1166 + $0x34] sm:$0xf]
        %v1181 = vld [vmem:[%s1166 + $0x38] sm:$0xf]
        %v1182 = vld [vmem:[%s1166 + $0x3c] sm:$0xf]
        %s1183 = scalar_lea.vmem [#allocation5], 2
        %v1184 = vld [vmem:[%s1183] sm:$0x1]
        %v1186 = vperm.slane %v1184, 0
        %v1204 = vunpack.c.l.b16 %v1167
        %v1205 = vunpack.c.l.b16 %v1168
        %v1206 = vunpack.c.l.b16 %v1169
        %v1207 = vunpack.c.l.b16 %v1170
        %v1208 = vunpack.c.l.b16 %v1171
        %v1209 = vunpack.c.l.b16 %v1172
        %v1210 = vunpack.c.l.b16 %v1173
        %v1211 = vunpack.c.l.b16 %v1174
        %v1212 = vunpack.c.l.b16 %v1175
        %v1213 = vunpack.c.l.b16 %v1176
        %v1214 = vunpack.c.l.b16 %v1177
        %v1215 = vunpack.c.l.b16 %v1178
        %v1216 = vunpack.c.l.b16 %v1179
        %v1217 = vunpack.c.l.b16 %v1180
        %v1218 = vunpack.c.l.b16 %v1181
        %v1219 = vunpack.c.l.b16 %v1182
        %v1220 = vpack.c.b16 %v1205, %v1204
        %v1221 = vpack.c.b16 %v1207, %v1206
        %v1222 = vpack.c.b16 %v1209, %v1208
        %v1223 = vpack.c.b16 %v1211, %v1210
        %v1224 = vpack.c.b16 %v1213, %v1212
        %v1225 = vpack.c.b16 %v1215, %v1214
        %v1226 = vpack.c.b16 %v1217, %v1216
        %v1227 = vpack.c.b16 %v1219, %v1218
        %1236 = vmatpush.bf16.msra.mxu0 %v1227
        %1237 = vmatpush.bf16.msra.mxu0 %v1226
        %1238 = vmatpush.bf16.msra.mxu0 %v1225
        %1239 = vmatpush.bf16.msra.mxu0 %v1224
        %1240 = vmatpush.bf16.msra.mxu0 %v1223
        %1241 = vmatpush.bf16.msra.mxu0 %v1222
        %1242 = vmatpush.bf16.msra.mxu0 %v1221
        %1243 = vmatpush.bf16.msra.mxu0 %v1220
        %1244 = vmatmul.bf16.gmra.mxu0 %v1134
        %v1245 = vpop.f32.mrf.mxu0
        %v1246 = vadd.f32 %v1186, %v1245
        %v1247 = vpop.f32.mrf.mxu0
        %v1248 = vadd.f32 %v1186, %v1247
        %1249 = vmatmul.bf16.gmra.mxu0 %v1135
        %v1250 = vpop.f32.mrf.mxu0
        %v1251 = vadd.f32 %v1186, %v1250
        %v1252 = vpop.f32.mrf.mxu0
        %v1253 = vadd.f32 %v1186, %v1252
        %1254 = vmatmul.bf16.gmra.mxu0 %v1136
        %v1255 = vpop.f32.mrf.mxu0
        %v1256 = vadd.f32 %v1186, %v1255
        %v1257 = vpop.f32.mrf.mxu0
        %v1258 = vadd.f32 %v1186, %v1257
        %1259 = vmatmul.bf16.gmra.mxu0 %v1137
        %v1260 = vpop.f32.mrf.mxu0
        %v1261 = vadd.f32 %v1186, %v1260
        %v1262 = vpop.f32.mrf.mxu0
        %v1263 = vadd.f32 %v1186, %v1262
        %1264 = vmatmul.bf16.gmra.mxu0 %v1138
        %v1265 = vpop.f32.mrf.mxu0
        %v1266 = vadd.f32 %v1186, %v1265
        %v1267 = vpop.f32.mrf.mxu0
        %v1268 = vadd.f32 %v1186, %v1267
        %1269 = vmatmul.bf16.gmra.mxu0 %v1139
        %v1270 = vpop.f32.mrf.mxu0
        %v1271 = vadd.f32 %v1186, %v1270
        %v1272 = vpop.f32.mrf.mxu0
        %v1273 = vadd.f32 %v1186, %v1272
        %1274 = vmatmul.bf16.gmra.mxu0 %v1140
        %v1275 = vpop.f32.mrf.mxu0
        %v1276 = vadd.f32 %v1186, %v1275
        %v1277 = vpop.f32.mrf.mxu0
        %v1278 = vadd.f32 %v1186, %v1277
        %1279 = vmatmul.bf16.gmra.mxu0 %v1141
        %v1280 = vpop.f32.mrf.mxu0
        %v1281 = vadd.f32 %v1186, %v1280
        %v1282 = vpop.f32.mrf.mxu0
        %v1283 = vadd.f32 %v1186, %v1282
        %1284 = vmatmul.bf16.gmra.mxu0 %v1142
        %v1285 = vpop.f32.mrf.mxu0
        %v1286 = vadd.f32 %v1186, %v1285
        %v1287 = vpop.f32.mrf.mxu0
        %v1288 = vadd.f32 %v1186, %v1287
        %1289 = vmatmul.bf16.gmra.mxu0 %v1143
        %v1290 = vpop.f32.mrf.mxu0
        %v1291 = vadd.f32 %v1186, %v1290
        %v1292 = vpop.f32.mrf.mxu0
        %v1293 = vadd.f32 %v1186, %v1292
        %1294 = vmatmul.bf16.gmra.mxu0 %v1144
        %v1295 = vpop.f32.mrf.mxu0
        %v1296 = vadd.f32 %v1186, %v1295
        %v1297 = vpop.f32.mrf.mxu0
        %v1298 = vadd.f32 %v1186, %v1297
        %1299 = vmatmul.bf16.gmra.mxu0 %v1145
        %v1300 = vpop.f32.mrf.mxu0
        %v1301 = vadd.f32 %v1186, %v1300
        %v1302 = vpop.f32.mrf.mxu0
        %v1303 = vadd.f32 %v1186, %v1302
        %1304 = vmatmul.bf16.gmra.mxu0 %v1146
        %v1305 = vpop.f32.mrf.mxu0
        %v1306 = vadd.f32 %v1186, %v1305
        %v1307 = vpop.f32.mrf.mxu0
        %v1308 = vadd.f32 %v1186, %v1307
        %1309 = vmatmul.bf16.gmra.mxu0 %v1147
        %v1310 = vpop.f32.mrf.mxu0
        %v1311 = vadd.f32 %v1186, %v1310
        %v1312 = vpop.f32.mrf.mxu0
        %v1313 = vadd.f32 %v1186, %v1312
        %1314 = vmatmul.bf16.gmra.mxu0 %v1148
        %v1315 = vpop.f32.mrf.mxu0
        %v1316 = vadd.f32 %v1186, %v1315
        %v1317 = vpop.f32.mrf.mxu0
        %v1318 = vadd.f32 %v1186, %v1317
        %1319 = vmatmul.bf16.gmra.mxu0 %v1149
        %v1320 = vpop.f32.mrf.mxu0
        %v1321 = vadd.f32 %v1186, %v1320
        %v1322 = vpop.f32.mrf.mxu0
        %v1323 = vadd.f32 %v1186, %v1322
        %1324 = vmatmul.bf16.gmra.mxu0 %v1150
        %v1325 = vpop.f32.mrf.mxu0
        %v1326 = vadd.f32 %v1186, %v1325
        %v1327 = vpop.f32.mrf.mxu0
        %v1328 = vadd.f32 %v1186, %v1327
        %1329 = vmatmul.bf16.gmra.mxu0 %v1151
        %v1330 = vpop.f32.mrf.mxu0
        %v1331 = vadd.f32 %v1186, %v1330
        %v1332 = vpop.f32.mrf.mxu0
        %v1333 = vadd.f32 %v1186, %v1332
        %1334 = vmatmul.bf16.gmra.mxu0 %v1152
        %v1335 = vpop.f32.mrf.mxu0
        %v1336 = vadd.f32 %v1186, %v1335
        %v1337 = vpop.f32.mrf.mxu0
        %v1338 = vadd.f32 %v1186, %v1337
        %1339 = vmatmul.bf16.gmra.mxu0 %v1153
        %v1340 = vpop.f32.mrf.mxu0
        %v1341 = vadd.f32 %v1186, %v1340
        %v1342 = vpop.f32.mrf.mxu0
        %v1343 = vadd.f32 %v1186, %v1342
        %1344 = vmatmul.bf16.gmra.mxu0 %v1154
        %v1345 = vpop.f32.mrf.mxu0
        %v1346 = vadd.f32 %v1186, %v1345
        %v1347 = vpop.f32.mrf.mxu0
        %v1348 = vadd.f32 %v1186, %v1347
        %1349 = vmatmul.bf16.gmra.mxu0 %v1155
        %v1350 = vpop.f32.mrf.mxu0
        %v1351 = vadd.f32 %v1186, %v1350
        %v1352 = vpop.f32.mrf.mxu0
        %v1353 = vadd.f32 %v1186, %v1352
        %1354 = vmatmul.bf16.gmra.mxu0 %v1156
        %v1355 = vpop.f32.mrf.mxu0
        %v1356 = vadd.f32 %v1186, %v1355
        %v1357 = vpop.f32.mrf.mxu0
        %v1358 = vadd.f32 %v1186, %v1357
        %1359 = vmatmul.bf16.gmra.mxu0 %v1157
        %v1360 = vpop.f32.mrf.mxu0
        %v1361 = vadd.f32 %v1186, %v1360
        %v1362 = vpop.f32.mrf.mxu0
        %v1363 = vadd.f32 %v1186, %v1362
        %1364 = vmatmul.bf16.gmra.mxu0 %v1158
        %v1365 = vpop.f32.mrf.mxu0
        %v1366 = vadd.f32 %v1186, %v1365
        %v1367 = vpop.f32.mrf.mxu0
        %v1368 = vadd.f32 %v1186, %v1367
        %1369 = vmatmul.bf16.gmra.mxu0 %v1159
        %v1370 = vpop.f32.mrf.mxu0
        %v1371 = vadd.f32 %v1186, %v1370
        %v1372 = vpop.f32.mrf.mxu0
        %v1373 = vadd.f32 %v1186, %v1372
        %1374 = vmatmul.bf16.gmra.mxu0 %v1160
        %v1375 = vpop.f32.mrf.mxu0
        %v1376 = vadd.f32 %v1186, %v1375
        %v1377 = vpop.f32.mrf.mxu0
        %v1378 = vadd.f32 %v1186, %v1377
        %1379 = vmatmul.bf16.gmra.mxu0 %v1161
        %v1380 = vpop.f32.mrf.mxu0
        %v1381 = vadd.f32 %v1186, %v1380
        %v1382 = vpop.f32.mrf.mxu0
        %v1383 = vadd.f32 %v1186, %v1382
        %1384 = vmatmul.bf16.gmra.mxu0 %v1162
        %v1385 = vpop.f32.mrf.mxu0
        %v1386 = vadd.f32 %v1186, %v1385
        %v1387 = vpop.f32.mrf.mxu0
        %v1388 = vadd.f32 %v1186, %v1387
        %1389 = vmatmul.bf16.gmra.mxu0 %v1163
        %v1390 = vpop.f32.mrf.mxu0
        %v1391 = vadd.f32 %v1186, %v1390
        %v1392 = vpop.f32.mrf.mxu0
        %v1393 = vadd.f32 %v1186, %v1392
        %1394 = vmatmul.bf16.gmra.mxu0 %v1164
        %v1395 = vpop.f32.mrf.mxu0
        %v1396 = vadd.f32 %v1186, %v1395
        %v1397 = vpop.f32.mrf.mxu0
        %v1398 = vadd.f32 %v1186, %v1397
        %1399 = vmatmul.bf16.gmra.mxu0 %v1165
        %v1400 = vpop.f32.mrf.mxu0
        %v1401 = vadd.f32 %v1186, %v1400
        %v1402 = vpop.f32.mrf.mxu0
        %v1403 = vadd.f32 %v1186, %v1402
        %1404 = vdwg.mxu0
        %v1405 = vmax.f32 %v1246, 0.0
        %v1406 = vmax.f32 %v1248, 0.0
        %v1407 = vmax.f32 %v1251, 0.0
        %v1408 = vmax.f32 %v1253, 0.0
        %v1409 = vmax.f32 %v1256, 0.0
        %v1410 = vmax.f32 %v1258, 0.0
        %v1411 = vmax.f32 %v1261, 0.0
        %v1412 = vmax.f32 %v1263, 0.0
        %v1413 = vmax.f32 %v1266, 0.0
        %v1414 = vmax.f32 %v1268, 0.0
        %v1415 = vmax.f32 %v1271, 0.0
        %v1416 = vmax.f32 %v1273, 0.0
        %v1417 = vmax.f32 %v1276, 0.0
        %v1418 = vmax.f32 %v1278, 0.0
        %v1419 = vmax.f32 %v1281, 0.0
        %v1420 = vmax.f32 %v1283, 0.0
        %v1421 = vmax.f32 %v1286, 0.0
        %v1422 = vmax.f32 %v1288, 0.0
        %v1423 = vmax.f32 %v1291, 0.0
        %v1424 = vmax.f32 %v1293, 0.0
        %v1425 = vmax.f32 %v1296, 0.0
        %v1426 = vmax.f32 %v1298, 0.0
        %v1427 = vmax.f32 %v1301, 0.0
        %v1428 = vmax.f32 %v1303, 0.0
        %v1429 = vmax.f32 %v1306, 0.0
        %v1430 = vmax.f32 %v1308, 0.0
        %v1431 = vmax.f32 %v1311, 0.0
        %v1432 = vmax.f32 %v1313, 0.0
        %v1433 = vmax.f32 %v1316, 0.0
        %v1434 = vmax.f32 %v1318, 0.0
        %v1435 = vmax.f32 %v1321, 0.0
        %v1436 = vmax.f32 %v1323, 0.0
        %v1437 = vmax.f32 %v1326, 0.0
        %v1438 = vmax.f32 %v1328, 0.0
        %v1439 = vmax.f32 %v1331, 0.0
        %v1440 = vmax.f32 %v1333, 0.0
        %v1441 = vmax.f32 %v1336, 0.0
        %v1442 = vmax.f32 %v1338, 0.0
        %v1443 = vmax.f32 %v1341, 0.0
        %v1444 = vmax.f32 %v1343, 0.0
        %v1445 = vmax.f32 %v1346, 0.0
        %v1446 = vmax.f32 %v1348, 0.0
        %v1447 = vmax.f32 %v1351, 0.0
        %v1448 = vmax.f32 %v1353, 0.0
        %v1449 = vmax.f32 %v1356, 0.0
        %v1450 = vmax.f32 %v1358, 0.0
        %v1451 = vmax.f32 %v1361, 0.0
        %v1452 = vmax.f32 %v1363, 0.0
        %v1453 = vmax.f32 %v1366, 0.0
        %v1454 = vmax.f32 %v1368, 0.0
        %v1455 = vmax.f32 %v1371, 0.0
        %v1456 = vmax.f32 %v1373, 0.0
        %v1457 = vmax.f32 %v1376, 0.0
        %v1458 = vmax.f32 %v1378, 0.0
        %v1459 = vmax.f32 %v1381, 0.0
        %v1460 = vmax.f32 %v1383, 0.0
        %v1461 = vmax.f32 %v1386, 0.0
        %v1462 = vmax.f32 %v1388, 0.0
        %v1463 = vmax.f32 %v1391, 0.0
        %v1464 = vmax.f32 %v1393, 0.0
        %v1465 = vmax.f32 %v1396, 0.0
        %v1466 = vmax.f32 %v1398, 0.0
        %v1467 = vmax.f32 %v1401, 0.0
        %v1468 = vmax.f32 %v1403, 0.0
        %v1469 = vpack.c.bf16 %v1406, %v1405
        %v1470 = vpack.c.bf16 %v1408, %v1407
        %v1471 = vpack.c.bf16 %v1410, %v1409
        %v1472 = vpack.c.bf16 %v1412, %v1411
        %v1473 = vpack.c.bf16 %v1414, %v1413
        %v1474 = vpack.c.bf16 %v1416, %v1415
        %v1475 = vpack.c.bf16 %v1418, %v1417
        %v1476 = vpack.c.bf16 %v1420, %v1419
        %v1477 = vpack.c.bf16 %v1422, %v1421
        %v1478 = vpack.c.bf16 %v1424, %v1423
        %v1479 = vpack.c.bf16 %v1426, %v1425
        %v1480 = vpack.c.bf16 %v1428, %v1427
        %v1481 = vpack.c.bf16 %v1430, %v1429
        %v1482 = vpack.c.bf16 %v1432, %v1431
        %v1483 = vpack.c.bf16 %v1434, %v1433
        %v1484 = vpack.c.bf16 %v1436, %v1435
        %v1485 = vpack.c.bf16 %v1438, %v1437
        %v1486 = vpack.c.bf16 %v1440, %v1439
        %v1487 = vpack.c.bf16 %v1442, %v1441
        %v1488 = vpack.c.bf16 %v1444, %v1443
        %v1489 = vpack.c.bf16 %v1446, %v1445
        %v1490 = vpack.c.bf16 %v1448, %v1447
        %v1491 = vpack.c.bf16 %v1450, %v1449
        %v1492 = vpack.c.bf16 %v1452, %v1451
        %v1493 = vpack.c.bf16 %v1454, %v1453
        %v1494 = vpack.c.bf16 %v1456, %v1455
        %v1495 = vpack.c.bf16 %v1458, %v1457
        %v1496 = vpack.c.bf16 %v1460, %v1459
        %v1497 = vpack.c.bf16 %v1462, %v1461
        %v1498 = vpack.c.bf16 %v1464, %v1463
        %v1499 = vpack.c.bf16 %v1466, %v1465
        %v1500 = vpack.c.bf16 %v1468, %v1467
        %s1501 = scalar_lea.vmem %s2, 128
        %v1502 = vld [vmem:[%s1501] sm:$0xf]
        %v1503 = vld [vmem:[%s1501 + $0x4] sm:$0xf]
        %v1504 = vld [vmem:[%s1501 + $0x8] sm:$0xf]
        %v1505 = vld [vmem:[%s1501 + $0xc] sm:$0xf]
        %v1506 = vld [vmem:[%s1501 + $0x10] sm:$0xf]
        %v1507 = vld [vmem:[%s1501 + $0x14] sm:$0xf]
        %v1508 = vld [vmem:[%s1501 + $0x18] sm:$0xf]
        %v1509 = vld [vmem:[%s1501 + $0x1c] sm:$0xf]
        %v1510 = vld [vmem:[%s1501 + $0x20] sm:$0xf]
        %v1511 = vld [vmem:[%s1501 + $0x24] sm:$0xf]
        %v1512 = vld [vmem:[%s1501 + $0x28] sm:$0xf]
        %v1513 = vld [vmem:[%s1501 + $0x2c] sm:$0xf]
        %v1514 = vld [vmem:[%s1501 + $0x30] sm:$0xf]
        %v1515 = vld [vmem:[%s1501 + $0x34] sm:$0xf]
        %v1516 = vld [vmem:[%s1501 + $0x38] sm:$0xf]
        %v1517 = vld [vmem:[%s1501 + $0x3c] sm:$0xf]
        %s1518 = scalar_lea.vmem [#allocation5], 3
        %v1519 = vld [vmem:[%s1518] sm:$0x1]
        %v1521 = vperm.slane %v1519, 0
        %v1539 = vunpack.c.l.b16 %v1502
        %v1540 = vunpack.c.l.b16 %v1503
        %v1541 = vunpack.c.l.b16 %v1504
        %v1542 = vunpack.c.l.b16 %v1505
        %v1543 = vunpack.c.l.b16 %v1506
        %v1544 = vunpack.c.l.b16 %v1507
        %v1545 = vunpack.c.l.b16 %v1508
        %v1546 = vunpack.c.l.b16 %v1509
        %v1547 = vunpack.c.l.b16 %v1510
        %v1548 = vunpack.c.l.b16 %v1511
        %v1549 = vunpack.c.l.b16 %v1512
        %v1550 = vunpack.c.l.b16 %v1513
        %v1551 = vunpack.c.l.b16 %v1514
        %v1552 = vunpack.c.l.b16 %v1515
        %v1553 = vunpack.c.l.b16 %v1516
        %v1554 = vunpack.c.l.b16 %v1517
        %v1555 = vpack.c.b16 %v1540, %v1539
        %v1556 = vpack.c.b16 %v1542, %v1541
        %v1557 = vpack.c.b16 %v1544, %v1543
        %v1558 = vpack.c.b16 %v1546, %v1545
        %v1559 = vpack.c.b16 %v1548, %v1547
        %v1560 = vpack.c.b16 %v1550, %v1549
        %v1561 = vpack.c.b16 %v1552, %v1551
        %v1562 = vpack.c.b16 %v1554, %v1553
        %1571 = vmatpush.bf16.msra.mxu0 %v1562
        %1572 = vmatpush.bf16.msra.mxu0 %v1561
        %1573 = vmatpush.bf16.msra.mxu0 %v1560
        %1574 = vmatpush.bf16.msra.mxu0 %v1559
        %1575 = vmatpush.bf16.msra.mxu0 %v1558
        %1576 = vmatpush.bf16.msra.mxu0 %v1557
        %1577 = vmatpush.bf16.msra.mxu0 %v1556
        %1578 = vmatpush.bf16.msra.mxu0 %v1555
        %1579 = vmatmul.bf16.gmra.mxu0 %v1469
        %v1580 = vpop.f32.mrf.mxu0
        %v1581 = vadd.f32 %v1521, %v1580
        %v1582 = vpop.f32.mrf.mxu0
        %v1583 = vadd.f32 %v1521, %v1582
        %1584 = vmatmul.bf16.gmra.mxu0 %v1470
        %v1585 = vpop.f32.mrf.mxu0
        %v1586 = vadd.f32 %v1521, %v1585
        %v1587 = vpop.f32.mrf.mxu0
        %v1588 = vadd.f32 %v1521, %v1587
        %1589 = vmatmul.bf16.gmra.mxu0 %v1471
        %v1590 = vpop.f32.mrf.mxu0
        %v1591 = vadd.f32 %v1521, %v1590
        %v1592 = vpop.f32.mrf.mxu0
        %v1593 = vadd.f32 %v1521, %v1592
        %1594 = vmatmul.bf16.gmra.mxu0 %v1472
        %v1595 = vpop.f32.mrf.mxu0
        %v1596 = vadd.f32 %v1521, %v1595
        %v1597 = vpop.f32.mrf.mxu0
        %v1598 = vadd.f32 %v1521, %v1597
        %1599 = vmatmul.bf16.gmra.mxu0 %v1473
        %v1600 = vpop.f32.mrf.mxu0
        %v1601 = vadd.f32 %v1521, %v1600
        %v1602 = vpop.f32.mrf.mxu0
        %v1603 = vadd.f32 %v1521, %v1602
        %1604 = vmatmul.bf16.gmra.mxu0 %v1474
        %v1605 = vpop.f32.mrf.mxu0
        %v1606 = vadd.f32 %v1521, %v1605
        %v1607 = vpop.f32.mrf.mxu0
        %v1608 = vadd.f32 %v1521, %v1607
        %1609 = vmatmul.bf16.gmra.mxu0 %v1475
        %v1610 = vpop.f32.mrf.mxu0
        %v1611 = vadd.f32 %v1521, %v1610
        %v1612 = vpop.f32.mrf.mxu0
        %v1613 = vadd.f32 %v1521, %v1612
        %1614 = vmatmul.bf16.gmra.mxu0 %v1476
        %v1615 = vpop.f32.mrf.mxu0
        %v1616 = vadd.f32 %v1521, %v1615
        %v1617 = vpop.f32.mrf.mxu0
        %v1618 = vadd.f32 %v1521, %v1617
        %1619 = vmatmul.bf16.gmra.mxu0 %v1477
        %v1620 = vpop.f32.mrf.mxu0
        %v1621 = vadd.f32 %v1521, %v1620
        %v1622 = vpop.f32.mrf.mxu0
        %v1623 = vadd.f32 %v1521, %v1622
        %1624 = vmatmul.bf16.gmra.mxu0 %v1478
        %v1625 = vpop.f32.mrf.mxu0
        %v1626 = vadd.f32 %v1521, %v1625
        %v1627 = vpop.f32.mrf.mxu0
        %v1628 = vadd.f32 %v1521, %v1627
        %1629 = vmatmul.bf16.gmra.mxu0 %v1479
        %v1630 = vpop.f32.mrf.mxu0
        %v1631 = vadd.f32 %v1521, %v1630
        %v1632 = vpop.f32.mrf.mxu0
        %v1633 = vadd.f32 %v1521, %v1632
        %1634 = vmatmul.bf16.gmra.mxu0 %v1480
        %v1635 = vpop.f32.mrf.mxu0
        %v1636 = vadd.f32 %v1521, %v1635
        %v1637 = vpop.f32.mrf.mxu0
        %v1638 = vadd.f32 %v1521, %v1637
        %1639 = vmatmul.bf16.gmra.mxu0 %v1481
        %v1640 = vpop.f32.mrf.mxu0
        %v1641 = vadd.f32 %v1521, %v1640
        %v1642 = vpop.f32.mrf.mxu0
        %v1643 = vadd.f32 %v1521, %v1642
        %1644 = vmatmul.bf16.gmra.mxu0 %v1482
        %v1645 = vpop.f32.mrf.mxu0
        %v1646 = vadd.f32 %v1521, %v1645
        %v1647 = vpop.f32.mrf.mxu0
        %v1648 = vadd.f32 %v1521, %v1647
        %1649 = vmatmul.bf16.gmra.mxu0 %v1483
        %v1650 = vpop.f32.mrf.mxu0
        %v1651 = vadd.f32 %v1521, %v1650
        %v1652 = vpop.f32.mrf.mxu0
        %v1653 = vadd.f32 %v1521, %v1652
        %1654 = vmatmul.bf16.gmra.mxu0 %v1484
        %v1655 = vpop.f32.mrf.mxu0
        %v1656 = vadd.f32 %v1521, %v1655
        %v1657 = vpop.f32.mrf.mxu0
        %v1658 = vadd.f32 %v1521, %v1657
        %1659 = vmatmul.bf16.gmra.mxu0 %v1485
        %v1660 = vpop.f32.mrf.mxu0
        %v1661 = vadd.f32 %v1521, %v1660
        %v1662 = vpop.f32.mrf.mxu0
        %v1663 = vadd.f32 %v1521, %v1662
        %1664 = vmatmul.bf16.gmra.mxu0 %v1486
        %v1665 = vpop.f32.mrf.mxu0
        %v1666 = vadd.f32 %v1521, %v1665
        %v1667 = vpop.f32.mrf.mxu0
        %v1668 = vadd.f32 %v1521, %v1667
        %1669 = vmatmul.bf16.gmra.mxu0 %v1487
        %v1670 = vpop.f32.mrf.mxu0
        %v1671 = vadd.f32 %v1521, %v1670
        %v1672 = vpop.f32.mrf.mxu0
        %v1673 = vadd.f32 %v1521, %v1672
        %1674 = vmatmul.bf16.gmra.mxu0 %v1488
        %v1675 = vpop.f32.mrf.mxu0
        %v1676 = vadd.f32 %v1521, %v1675
        %v1677 = vpop.f32.mrf.mxu0
        %v1678 = vadd.f32 %v1521, %v1677
        %1679 = vmatmul.bf16.gmra.mxu0 %v1489
        %v1680 = vpop.f32.mrf.mxu0
        %v1681 = vadd.f32 %v1521, %v1680
        %v1682 = vpop.f32.mrf.mxu0
        %v1683 = vadd.f32 %v1521, %v1682
        %1684 = vmatmul.bf16.gmra.mxu0 %v1490
        %v1685 = vpop.f32.mrf.mxu0
        %v1686 = vadd.f32 %v1521, %v1685
        %v1687 = vpop.f32.mrf.mxu0
        %v1688 = vadd.f32 %v1521, %v1687
        %1689 = vmatmul.bf16.gmra.mxu0 %v1491
        %v1690 = vpop.f32.mrf.mxu0
        %v1691 = vadd.f32 %v1521, %v1690
        %v1692 = vpop.f32.mrf.mxu0
        %v1693 = vadd.f32 %v1521, %v1692
        %1694 = vmatmul.bf16.gmra.mxu0 %v1492
        %v1695 = vpop.f32.mrf.mxu0
        %v1696 = vadd.f32 %v1521, %v1695
        %v1697 = vpop.f32.mrf.mxu0
        %v1698 = vadd.f32 %v1521, %v1697
        %1699 = vmatmul.bf16.gmra.mxu0 %v1493
        %v1700 = vpop.f32.mrf.mxu0
        %v1701 = vadd.f32 %v1521, %v1700
        %v1702 = vpop.f32.mrf.mxu0
        %v1703 = vadd.f32 %v1521, %v1702
        %1704 = vmatmul.bf16.gmra.mxu0 %v1494
        %v1705 = vpop.f32.mrf.mxu0
        %v1706 = vadd.f32 %v1521, %v1705
        %v1707 = vpop.f32.mrf.mxu0
        %v1708 = vadd.f32 %v1521, %v1707
        %1709 = vmatmul.bf16.gmra.mxu0 %v1495
        %v1710 = vpop.f32.mrf.mxu0
        %v1711 = vadd.f32 %v1521, %v1710
        %v1712 = vpop.f32.mrf.mxu0
        %v1713 = vadd.f32 %v1521, %v1712
        %1714 = vmatmul.bf16.gmra.mxu0 %v1496
        %v1715 = vpop.f32.mrf.mxu0
        %v1716 = vadd.f32 %v1521, %v1715
        %v1717 = vpop.f32.mrf.mxu0
        %v1718 = vadd.f32 %v1521, %v1717
        %1719 = vmatmul.bf16.gmra.mxu0 %v1497
        %v1720 = vpop.f32.mrf.mxu0
        %v1721 = vadd.f32 %v1521, %v1720
        %v1722 = vpop.f32.mrf.mxu0
        %v1723 = vadd.f32 %v1521, %v1722
        %1724 = vmatmul.bf16.gmra.mxu0 %v1498
        %v1725 = vpop.f32.mrf.mxu0
        %v1726 = vadd.f32 %v1521, %v1725
        %v1727 = vpop.f32.mrf.mxu0
        %v1728 = vadd.f32 %v1521, %v1727
        %1729 = vmatmul.bf16.gmra.mxu0 %v1499
        %v1730 = vpop.f32.mrf.mxu0
        %v1731 = vadd.f32 %v1521, %v1730
        %v1732 = vpop.f32.mrf.mxu0
        %v1733 = vadd.f32 %v1521, %v1732
        %1734 = vmatmul.bf16.gmra.mxu0 %v1500
        %v1735 = vpop.f32.mrf.mxu0
        %v1736 = vadd.f32 %v1521, %v1735
        %v1737 = vpop.f32.mrf.mxu0
        %v1738 = vadd.f32 %v1521, %v1737
        %1739 = vdwg.mxu0
        %v1740 = vmax.f32 %v1581, 0.0
        %v1741 = vmax.f32 %v1583, 0.0
        %v1742 = vmax.f32 %v1586, 0.0
        %v1743 = vmax.f32 %v1588, 0.0
        %v1744 = vmax.f32 %v1591, 0.0
        %v1745 = vmax.f32 %v1593, 0.0
        %v1746 = vmax.f32 %v1596, 0.0
        %v1747 = vmax.f32 %v1598, 0.0
        %v1748 = vmax.f32 %v1601, 0.0
        %v1749 = vmax.f32 %v1603, 0.0
        %v1750 = vmax.f32 %v1606, 0.0
        %v1751 = vmax.f32 %v1608, 0.0
        %v1752 = vmax.f32 %v1611, 0.0
        %v1753 = vmax.f32 %v1613, 0.0
        %v1754 = vmax.f32 %v1616, 0.0
        %v1755 = vmax.f32 %v1618, 0.0
        %v1756 = vmax.f32 %v1621, 0.0
        %v1757 = vmax.f32 %v1623, 0.0
        %v1758 = vmax.f32 %v1626, 0.0
        %v1759 = vmax.f32 %v1628, 0.0
        %v1760 = vmax.f32 %v1631, 0.0
        %v1761 = vmax.f32 %v1633, 0.0
        %v1762 = vmax.f32 %v1636, 0.0
        %v1763 = vmax.f32 %v1638, 0.0
        %v1764 = vmax.f32 %v1641, 0.0
        %v1765 = vmax.f32 %v1643, 0.0
        %v1766 = vmax.f32 %v1646, 0.0
        %v1767 = vmax.f32 %v1648, 0.0
        %v1768 = vmax.f32 %v1651, 0.0
        %v1769 = vmax.f32 %v1653, 0.0
        %v1770 = vmax.f32 %v1656, 0.0
        %v1771 = vmax.f32 %v1658, 0.0
        %v1772 = vmax.f32 %v1661, 0.0
        %v1773 = vmax.f32 %v1663, 0.0
        %v1774 = vmax.f32 %v1666, 0.0
        %v1775 = vmax.f32 %v1668, 0.0
        %v1776 = vmax.f32 %v1671, 0.0
        %v1777 = vmax.f32 %v1673, 0.0
        %v1778 = vmax.f32 %v1676, 0.0
        %v1779 = vmax.f32 %v1678, 0.0
        %v1780 = vmax.f32 %v1681, 0.0
        %v1781 = vmax.f32 %v1683, 0.0
        %v1782 = vmax.f32 %v1686, 0.0
        %v1783 = vmax.f32 %v1688, 0.0
        %v1784 = vmax.f32 %v1691, 0.0
        %v1785 = vmax.f32 %v1693, 0.0
        %v1786 = vmax.f32 %v1696, 0.0
        %v1787 = vmax.f32 %v1698, 0.0
        %v1788 = vmax.f32 %v1701, 0.0
        %v1789 = vmax.f32 %v1703, 0.0
        %v1790 = vmax.f32 %v1706, 0.0
        %v1791 = vmax.f32 %v1708, 0.0
        %v1792 = vmax.f32 %v1711, 0.0
        %v1793 = vmax.f32 %v1713, 0.0
        %v1794 = vmax.f32 %v1716, 0.0
        %v1795 = vmax.f32 %v1718, 0.0
        %v1796 = vmax.f32 %v1721, 0.0
        %v1797 = vmax.f32 %v1723, 0.0
        %v1798 = vmax.f32 %v1726, 0.0
        %v1799 = vmax.f32 %v1728, 0.0
        %v1800 = vmax.f32 %v1731, 0.0
        %v1801 = vmax.f32 %v1733, 0.0
        %v1802 = vmax.f32 %v1736, 0.0
        %v1803 = vmax.f32 %v1738, 0.0
        %v1804 = vpack.c.bf16 %v1741, %v1740
        %v1805 = vpack.c.bf16 %v1743, %v1742
        %v1806 = vpack.c.bf16 %v1745, %v1744
        %v1807 = vpack.c.bf16 %v1747, %v1746
        %v1808 = vpack.c.bf16 %v1749, %v1748
        %v1809 = vpack.c.bf16 %v1751, %v1750
        %v1810 = vpack.c.bf16 %v1753, %v1752
        %v1811 = vpack.c.bf16 %v1755, %v1754
        %v1812 = vpack.c.bf16 %v1757, %v1756
        %v1813 = vpack.c.bf16 %v1759, %v1758
        %v1814 = vpack.c.bf16 %v1761, %v1760
        %v1815 = vpack.c.bf16 %v1763, %v1762
        %v1816 = vpack.c.bf16 %v1765, %v1764
        %v1817 = vpack.c.bf16 %v1767, %v1766
        %v1818 = vpack.c.bf16 %v1769, %v1768
        %v1819 = vpack.c.bf16 %v1771, %v1770
        %v1820 = vpack.c.bf16 %v1773, %v1772
        %v1821 = vpack.c.bf16 %v1775, %v1774
        %v1822 = vpack.c.bf16 %v1777, %v1776
        %v1823 = vpack.c.bf16 %v1779, %v1778
        %v1824 = vpack.c.bf16 %v1781, %v1780
        %v1825 = vpack.c.bf16 %v1783, %v1782
        %v1826 = vpack.c.bf16 %v1785, %v1784
        %v1827 = vpack.c.bf16 %v1787, %v1786
        %v1828 = vpack.c.bf16 %v1789, %v1788
        %v1829 = vpack.c.bf16 %v1791, %v1790
        %v1830 = vpack.c.bf16 %v1793, %v1792
        %v1831 = vpack.c.bf16 %v1795, %v1794
        %v1832 = vpack.c.bf16 %v1797, %v1796
        %v1833 = vpack.c.bf16 %v1799, %v1798
        %v1834 = vpack.c.bf16 %v1801, %v1800
        %v1835 = vpack.c.bf16 %v1803, %v1802
        %s1836 = scalar_lea.vmem %s2, 192
        %v1837 = vld [vmem:[%s1836] sm:$0xf]
        %v1838 = vld [vmem:[%s1836 + $0x4] sm:$0xf]
        %v1839 = vld [vmem:[%s1836 + $0x8] sm:$0xf]
        %v1840 = vld [vmem:[%s1836 + $0xc] sm:$0xf]
        %v1841 = vld [vmem:[%s1836 + $0x10] sm:$0xf]
        %v1842 = vld [vmem:[%s1836 + $0x14] sm:$0xf]
        %v1843 = vld [vmem:[%s1836 + $0x18] sm:$0xf]
        %v1844 = vld [vmem:[%s1836 + $0x1c] sm:$0xf]
        %v1845 = vld [vmem:[%s1836 + $0x20] sm:$0xf]
        %v1846 = vld [vmem:[%s1836 + $0x24] sm:$0xf]
        %v1847 = vld [vmem:[%s1836 + $0x28] sm:$0xf]
        %v1848 = vld [vmem:[%s1836 + $0x2c] sm:$0xf]
        %v1849 = vld [vmem:[%s1836 + $0x30] sm:$0xf]
        %v1850 = vld [vmem:[%s1836 + $0x34] sm:$0xf]
        %v1851 = vld [vmem:[%s1836 + $0x38] sm:$0xf]
        %v1852 = vld [vmem:[%s1836 + $0x3c] sm:$0xf]
        %s1853 = scalar_lea.vmem [#allocation5], 4
        %v1854 = vld [vmem:[%s1853] sm:$0x1]
        %v1856 = vperm.slane %v1854, 0
        %v1874 = vunpack.c.l.b16 %v1837
        %v1875 = vunpack.c.l.b16 %v1838
        %v1876 = vunpack.c.l.b16 %v1839
        %v1877 = vunpack.c.l.b16 %v1840
        %v1878 = vunpack.c.l.b16 %v1841
        %v1879 = vunpack.c.l.b16 %v1842
        %v1880 = vunpack.c.l.b16 %v1843
        %v1881 = vunpack.c.l.b16 %v1844
        %v1882 = vunpack.c.l.b16 %v1845
        %v1883 = vunpack.c.l.b16 %v1846
        %v1884 = vunpack.c.l.b16 %v1847
        %v1885 = vunpack.c.l.b16 %v1848
        %v1886 = vunpack.c.l.b16 %v1849
        %v1887 = vunpack.c.l.b16 %v1850
        %v1888 = vunpack.c.l.b16 %v1851
        %v1889 = vunpack.c.l.b16 %v1852
        %v1890 = vpack.c.b16 %v1875, %v1874
        %v1891 = vpack.c.b16 %v1877, %v1876
        %v1892 = vpack.c.b16 %v1879, %v1878
        %v1893 = vpack.c.b16 %v1881, %v1880
        %v1894 = vpack.c.b16 %v1883, %v1882
        %v1895 = vpack.c.b16 %v1885, %v1884
        %v1896 = vpack.c.b16 %v1887, %v1886
        %v1897 = vpack.c.b16 %v1889, %v1888
        %1906 = vmatpush.bf16.msra.mxu0 %v1897
        %1907 = vmatpush.bf16.msra.mxu0 %v1896
        %1908 = vmatpush.bf16.msra.mxu0 %v1895
        %1909 = vmatpush.bf16.msra.mxu0 %v1894
        %1910 = vmatpush.bf16.msra.mxu0 %v1893
        %1911 = vmatpush.bf16.msra.mxu0 %v1892
        %1912 = vmatpush.bf16.msra.mxu0 %v1891
        %1913 = vmatpush.bf16.msra.mxu0 %v1890
        %1914 = vmatmul.bf16.gmra.mxu0 %v1804
        %v1915 = vpop.f32.mrf.mxu0
        %v1916 = vadd.f32 %v1856, %v1915
        %v1917 = vpop.f32.mrf.mxu0
        %v1918 = vadd.f32 %v1856, %v1917
        %1919 = vmatmul.bf16.gmra.mxu0 %v1805
        %v1920 = vpop.f32.mrf.mxu0
        %v1921 = vadd.f32 %v1856, %v1920
        %v1922 = vpop.f32.mrf.mxu0
        %v1923 = vadd.f32 %v1856, %v1922
        %1924 = vmatmul.bf16.gmra.mxu0 %v1806
        %v1925 = vpop.f32.mrf.mxu0
        %v1926 = vadd.f32 %v1856, %v1925
        %v1927 = vpop.f32.mrf.mxu0
        %v1928 = vadd.f32 %v1856, %v1927
        %1929 = vmatmul.bf16.gmra.mxu0 %v1807
        %v1930 = vpop.f32.mrf.mxu0
        %v1931 = vadd.f32 %v1856, %v1930
        %v1932 = vpop.f32.mrf.mxu0
        %v1933 = vadd.f32 %v1856, %v1932
        %1934 = vmatmul.bf16.gmra.mxu0 %v1808
        %v1935 = vpop.f32.mrf.mxu0
        %v1936 = vadd.f32 %v1856, %v1935
        %v1937 = vpop.f32.mrf.mxu0
        %v1938 = vadd.f32 %v1856, %v1937
        %1939 = vmatmul.bf16.gmra.mxu0 %v1809
        %v1940 = vpop.f32.mrf.mxu0
        %v1941 = vadd.f32 %v1856, %v1940
        %v1942 = vpop.f32.mrf.mxu0
        %v1943 = vadd.f32 %v1856, %v1942
        %1944 = vmatmul.bf16.gmra.mxu0 %v1810
        %v1945 = vpop.f32.mrf.mxu0
        %v1946 = vadd.f32 %v1856, %v1945
        %v1947 = vpop.f32.mrf.mxu0
        %v1948 = vadd.f32 %v1856, %v1947
        %1949 = vmatmul.bf16.gmra.mxu0 %v1811
        %v1950 = vpop.f32.mrf.mxu0
        %v1951 = vadd.f32 %v1856, %v1950
        %v1952 = vpop.f32.mrf.mxu0
        %v1953 = vadd.f32 %v1856, %v1952
        %1954 = vmatmul.bf16.gmra.mxu0 %v1812
        %v1955 = vpop.f32.mrf.mxu0
        %v1956 = vadd.f32 %v1856, %v1955
        %v1957 = vpop.f32.mrf.mxu0
        %v1958 = vadd.f32 %v1856, %v1957
        %1959 = vmatmul.bf16.gmra.mxu0 %v1813
        %v1960 = vpop.f32.mrf.mxu0
        %v1961 = vadd.f32 %v1856, %v1960
        %v1962 = vpop.f32.mrf.mxu0
        %v1963 = vadd.f32 %v1856, %v1962
        %1964 = vmatmul.bf16.gmra.mxu0 %v1814
        %v1965 = vpop.f32.mrf.mxu0
        %v1966 = vadd.f32 %v1856, %v1965
        %v1967 = vpop.f32.mrf.mxu0
        %v1968 = vadd.f32 %v1856, %v1967
        %1969 = vmatmul.bf16.gmra.mxu0 %v1815
        %v1970 = vpop.f32.mrf.mxu0
        %v1971 = vadd.f32 %v1856, %v1970
        %v1972 = vpop.f32.mrf.mxu0
        %v1973 = vadd.f32 %v1856, %v1972
        %1974 = vmatmul.bf16.gmra.mxu0 %v1816
        %v1975 = vpop.f32.mrf.mxu0
        %v1976 = vadd.f32 %v1856, %v1975
        %v1977 = vpop.f32.mrf.mxu0
        %v1978 = vadd.f32 %v1856, %v1977
        %1979 = vmatmul.bf16.gmra.mxu0 %v1817
        %v1980 = vpop.f32.mrf.mxu0
        %v1981 = vadd.f32 %v1856, %v1980
        %v1982 = vpop.f32.mrf.mxu0
        %v1983 = vadd.f32 %v1856, %v1982
        %1984 = vmatmul.bf16.gmra.mxu0 %v1818
        %v1985 = vpop.f32.mrf.mxu0
        %v1986 = vadd.f32 %v1856, %v1985
        %v1987 = vpop.f32.mrf.mxu0
        %v1988 = vadd.f32 %v1856, %v1987
        %1989 = vmatmul.bf16.gmra.mxu0 %v1819
        %v1990 = vpop.f32.mrf.mxu0
        %v1991 = vadd.f32 %v1856, %v1990
        %v1992 = vpop.f32.mrf.mxu0
        %v1993 = vadd.f32 %v1856, %v1992
        %1994 = vmatmul.bf16.gmra.mxu0 %v1820
        %v1995 = vpop.f32.mrf.mxu0
        %v1996 = vadd.f32 %v1856, %v1995
        %v1997 = vpop.f32.mrf.mxu0
        %v1998 = vadd.f32 %v1856, %v1997
        %1999 = vmatmul.bf16.gmra.mxu0 %v1821
        %v2000 = vpop.f32.mrf.mxu0
        %v2001 = vadd.f32 %v1856, %v2000
        %v2002 = vpop.f32.mrf.mxu0
        %v2003 = vadd.f32 %v1856, %v2002
        %2004 = vmatmul.bf16.gmra.mxu0 %v1822
        %v2005 = vpop.f32.mrf.mxu0
        %v2006 = vadd.f32 %v1856, %v2005
        %v2007 = vpop.f32.mrf.mxu0
        %v2008 = vadd.f32 %v1856, %v2007
        %2009 = vmatmul.bf16.gmra.mxu0 %v1823
        %v2010 = vpop.f32.mrf.mxu0
        %v2011 = vadd.f32 %v1856, %v2010
        %v2012 = vpop.f32.mrf.mxu0
        %v2013 = vadd.f32 %v1856, %v2012
        %2014 = vmatmul.bf16.gmra.mxu0 %v1824
        %v2015 = vpop.f32.mrf.mxu0
        %v2016 = vadd.f32 %v1856, %v2015
        %v2017 = vpop.f32.mrf.mxu0
        %v2018 = vadd.f32 %v1856, %v2017
        %2019 = vmatmul.bf16.gmra.mxu0 %v1825
        %v2020 = vpop.f32.mrf.mxu0
        %v2021 = vadd.f32 %v1856, %v2020
        %v2022 = vpop.f32.mrf.mxu0
        %v2023 = vadd.f32 %v1856, %v2022
        %2024 = vmatmul.bf16.gmra.mxu0 %v1826
        %v2025 = vpop.f32.mrf.mxu0
        %v2026 = vadd.f32 %v1856, %v2025
        %v2027 = vpop.f32.mrf.mxu0
        %v2028 = vadd.f32 %v1856, %v2027
        %2029 = vmatmul.bf16.gmra.mxu0 %v1827
        %v2030 = vpop.f32.mrf.mxu0
        %v2031 = vadd.f32 %v1856, %v2030
        %v2032 = vpop.f32.mrf.mxu0
        %v2033 = vadd.f32 %v1856, %v2032
        %2034 = vmatmul.bf16.gmra.mxu0 %v1828
        %v2035 = vpop.f32.mrf.mxu0
        %v2036 = vadd.f32 %v1856, %v2035
        %v2037 = vpop.f32.mrf.mxu0
        %v2038 = vadd.f32 %v1856, %v2037
        %2039 = vmatmul.bf16.gmra.mxu0 %v1829
        %v2040 = vpop.f32.mrf.mxu0
        %v2041 = vadd.f32 %v1856, %v2040
        %v2042 = vpop.f32.mrf.mxu0
        %v2043 = vadd.f32 %v1856, %v2042
        %2044 = vmatmul.bf16.gmra.mxu0 %v1830
        %v2045 = vpop.f32.mrf.mxu0
        %v2046 = vadd.f32 %v1856, %v2045
        %v2047 = vpop.f32.mrf.mxu0
        %v2048 = vadd.f32 %v1856, %v2047
        %2049 = vmatmul.bf16.gmra.mxu0 %v1831
        %v2050 = vpop.f32.mrf.mxu0
        %v2051 = vadd.f32 %v1856, %v2050
        %v2052 = vpop.f32.mrf.mxu0
        %v2053 = vadd.f32 %v1856, %v2052
        %2054 = vmatmul.bf16.gmra.mxu0 %v1832
        %v2055 = vpop.f32.mrf.mxu0
        %v2056 = vadd.f32 %v1856, %v2055
        %v2057 = vpop.f32.mrf.mxu0
        %v2058 = vadd.f32 %v1856, %v2057
        %2059 = vmatmul.bf16.gmra.mxu0 %v1833
        %v2060 = vpop.f32.mrf.mxu0
        %v2061 = vadd.f32 %v1856, %v2060
        %v2062 = vpop.f32.mrf.mxu0
        %v2063 = vadd.f32 %v1856, %v2062
        %2064 = vmatmul.bf16.gmra.mxu0 %v1834
        %v2065 = vpop.f32.mrf.mxu0
        %v2066 = vadd.f32 %v1856, %v2065
        %v2067 = vpop.f32.mrf.mxu0
        %v2068 = vadd.f32 %v1856, %v2067
        %2069 = vmatmul.bf16.gmra.mxu0 %v1835
        %v2070 = vpop.f32.mrf.mxu0
        %v2071 = vadd.f32 %v1856, %v2070
        %v2072 = vpop.f32.mrf.mxu0
        %v2073 = vadd.f32 %v1856, %v2072
        %2074 = vdwg.mxu0
        %v2075 = vmax.f32 %v1916, 0.0
        %v2076 = vmax.f32 %v1918, 0.0
        %v2077 = vmax.f32 %v1921, 0.0
        %v2078 = vmax.f32 %v1923, 0.0
        %v2079 = vmax.f32 %v1926, 0.0
        %v2080 = vmax.f32 %v1928, 0.0
        %v2081 = vmax.f32 %v1931, 0.0
        %v2082 = vmax.f32 %v1933, 0.0
        %v2083 = vmax.f32 %v1936, 0.0
        %v2084 = vmax.f32 %v1938, 0.0
        %v2085 = vmax.f32 %v1941, 0.0
        %v2086 = vmax.f32 %v1943, 0.0
        %v2087 = vmax.f32 %v1946, 0.0
        %v2088 = vmax.f32 %v1948, 0.0
        %v2089 = vmax.f32 %v1951, 0.0
        %v2090 = vmax.f32 %v1953, 0.0
        %v2091 = vmax.f32 %v1956, 0.0
        %v2092 = vmax.f32 %v1958, 0.0
        %v2093 = vmax.f32 %v1961, 0.0
        %v2094 = vmax.f32 %v1963, 0.0
        %v2095 = vmax.f32 %v1966, 0.0
        %v2096 = vmax.f32 %v1968, 0.0
        %v2097 = vmax.f32 %v1971, 0.0
        %v2098 = vmax.f32 %v1973, 0.0
        %v2099 = vmax.f32 %v1976, 0.0
        %v2100 = vmax.f32 %v1978, 0.0
        %v2101 = vmax.f32 %v1981, 0.0
        %v2102 = vmax.f32 %v1983, 0.0
        %v2103 = vmax.f32 %v1986, 0.0
        %v2104 = vmax.f32 %v1988, 0.0
        %v2105 = vmax.f32 %v1991, 0.0
        %v2106 = vmax.f32 %v1993, 0.0
        %v2107 = vmax.f32 %v1996, 0.0
        %v2108 = vmax.f32 %v1998, 0.0
        %v2109 = vmax.f32 %v2001, 0.0
        %v2110 = vmax.f32 %v2003, 0.0
        %v2111 = vmax.f32 %v2006, 0.0
        %v2112 = vmax.f32 %v2008, 0.0
        %v2113 = vmax.f32 %v2011, 0.0
        %v2114 = vmax.f32 %v2013, 0.0
        %v2115 = vmax.f32 %v2016, 0.0
        %v2116 = vmax.f32 %v2018, 0.0
        %v2117 = vmax.f32 %v2021, 0.0
        %v2118 = vmax.f32 %v2023, 0.0
        %v2119 = vmax.f32 %v2026, 0.0
        %v2120 = vmax.f32 %v2028, 0.0
        %v2121 = vmax.f32 %v2031, 0.0
        %v2122 = vmax.f32 %v2033, 0.0
        %v2123 = vmax.f32 %v2036, 0.0
        %v2124 = vmax.f32 %v2038, 0.0
        %v2125 = vmax.f32 %v2041, 0.0
        %v2126 = vmax.f32 %v2043, 0.0
        %v2127 = vmax.f32 %v2046, 0.0
        %v2128 = vmax.f32 %v2048, 0.0
        %v2129 = vmax.f32 %v2051, 0.0
        %v2130 = vmax.f32 %v2053, 0.0
        %v2131 = vmax.f32 %v2056, 0.0
        %v2132 = vmax.f32 %v2058, 0.0
        %v2133 = vmax.f32 %v2061, 0.0
        %v2134 = vmax.f32 %v2063, 0.0
        %v2135 = vmax.f32 %v2066, 0.0
        %v2136 = vmax.f32 %v2068, 0.0
        %v2137 = vmax.f32 %v2071, 0.0
        %v2138 = vmax.f32 %v2073, 0.0
        %v2139 = vadd.f32 %v2075, %v1740
        %v2140 = vadd.f32 %v2076, %v1741
        %v2141 = vadd.f32 %v2077, %v1742
        %v2142 = vadd.f32 %v2078, %v1743
        %v2143 = vadd.f32 %v2079, %v1744
        %v2144 = vadd.f32 %v2080, %v1745
        %v2145 = vadd.f32 %v2081, %v1746
        %v2146 = vadd.f32 %v2082, %v1747
        %v2147 = vadd.f32 %v2083, %v1748
        %v2148 = vadd.f32 %v2084, %v1749
        %v2149 = vadd.f32 %v2085, %v1750
        %v2150 = vadd.f32 %v2086, %v1751
        %v2151 = vadd.f32 %v2087, %v1752
        %v2152 = vadd.f32 %v2088, %v1753
        %v2153 = vadd.f32 %v2089, %v1754
        %v2154 = vadd.f32 %v2090, %v1755
        %v2155 = vadd.f32 %v2091, %v1756
        %v2156 = vadd.f32 %v2092, %v1757
        %v2157 = vadd.f32 %v2093, %v1758
        %v2158 = vadd.f32 %v2094, %v1759
        %v2159 = vadd.f32 %v2095, %v1760
        %v2160 = vadd.f32 %v2096, %v1761
        %v2161 = vadd.f32 %v2097, %v1762
        %v2162 = vadd.f32 %v2098, %v1763
        %v2163 = vadd.f32 %v2099, %v1764
        %v2164 = vadd.f32 %v2100, %v1765
        %v2165 = vadd.f32 %v2101, %v1766
        %v2166 = vadd.f32 %v2102, %v1767
        %v2167 = vadd.f32 %v2103, %v1768
        %v2168 = vadd.f32 %v2104, %v1769
        %v2169 = vadd.f32 %v2105, %v1770
        %v2170 = vadd.f32 %v2106, %v1771
        %v2171 = vadd.f32 %v2107, %v1772
        %v2172 = vadd.f32 %v2108, %v1773
        %v2173 = vadd.f32 %v2109, %v1774
        %v2174 = vadd.f32 %v2110, %v1775
        %v2175 = vadd.f32 %v2111, %v1776
        %v2176 = vadd.f32 %v2112, %v1777
        %v2177 = vadd.f32 %v2113, %v1778
        %v2178 = vadd.f32 %v2114, %v1779
        %v2179 = vadd.f32 %v2115, %v1780
        %v2180 = vadd.f32 %v2116, %v1781
        %v2181 = vadd.f32 %v2117, %v1782
        %v2182 = vadd.f32 %v2118, %v1783
        %v2183 = vadd.f32 %v2119, %v1784
        %v2184 = vadd.f32 %v2120, %v1785
        %v2185 = vadd.f32 %v2121, %v1786
        %v2186 = vadd.f32 %v2122, %v1787
        %v2187 = vadd.f32 %v2123, %v1788
        %v2188 = vadd.f32 %v2124, %v1789
        %v2189 = vadd.f32 %v2125, %v1790
        %v2190 = vadd.f32 %v2126, %v1791
        %v2191 = vadd.f32 %v2127, %v1792
        %v2192 = vadd.f32 %v2128, %v1793
        %v2193 = vadd.f32 %v2129, %v1794
        %v2194 = vadd.f32 %v2130, %v1795
        %v2195 = vadd.f32 %v2131, %v1796
        %v2196 = vadd.f32 %v2132, %v1797
        %v2197 = vadd.f32 %v2133, %v1798
        %v2198 = vadd.f32 %v2134, %v1799
        %v2199 = vadd.f32 %v2135, %v1800
        %v2200 = vadd.f32 %v2136, %v1801
        %v2201 = vadd.f32 %v2137, %v1802
        %v2202 = vadd.f32 %v2138, %v1803
        %v2203 = vpack.c.bf16 %v2140, %v2139
        %v2204 = vpack.c.bf16 %v2142, %v2141
        %v2205 = vpack.c.bf16 %v2144, %v2143
        %v2206 = vpack.c.bf16 %v2146, %v2145
        %v2207 = vpack.c.bf16 %v2148, %v2147
        %v2208 = vpack.c.bf16 %v2150, %v2149
        %v2209 = vpack.c.bf16 %v2152, %v2151
        %v2210 = vpack.c.bf16 %v2154, %v2153
        %v2211 = vpack.c.bf16 %v2156, %v2155
        %v2212 = vpack.c.bf16 %v2158, %v2157
        %v2213 = vpack.c.bf16 %v2160, %v2159
        %v2214 = vpack.c.bf16 %v2162, %v2161
        %v2215 = vpack.c.bf16 %v2164, %v2163
        %v2216 = vpack.c.bf16 %v2166, %v2165
        %v2217 = vpack.c.bf16 %v2168, %v2167
        %v2218 = vpack.c.bf16 %v2170, %v2169
        %v2219 = vpack.c.bf16 %v2172, %v2171
        %v2220 = vpack.c.bf16 %v2174, %v2173
        %v2221 = vpack.c.bf16 %v2176, %v2175
        %v2222 = vpack.c.bf16 %v2178, %v2177
        %v2223 = vpack.c.bf16 %v2180, %v2179
        %v2224 = vpack.c.bf16 %v2182, %v2181
        %v2225 = vpack.c.bf16 %v2184, %v2183
        %v2226 = vpack.c.bf16 %v2186, %v2185
        %v2227 = vpack.c.bf16 %v2188, %v2187
        %v2228 = vpack.c.bf16 %v2190, %v2189
        %v2229 = vpack.c.bf16 %v2192, %v2191
        %v2230 = vpack.c.bf16 %v2194, %v2193
        %v2231 = vpack.c.bf16 %v2196, %v2195
        %v2232 = vpack.c.bf16 %v2198, %v2197
        %v2233 = vpack.c.bf16 %v2200, %v2199
        %v2234 = vpack.c.bf16 %v2202, %v2201
        %s2235 = scalar_lea.vmem %s2, 256
        %v2236 = vld [vmem:[%s2235] sm:$0xf]
        %v2237 = vld [vmem:[%s2235 + $0x4] sm:$0xf]
        %v2238 = vld [vmem:[%s2235 + $0x8] sm:$0xf]
        %v2239 = vld [vmem:[%s2235 + $0xc] sm:$0xf]
        %v2240 = vld [vmem:[%s2235 + $0x10] sm:$0xf]
        %v2241 = vld [vmem:[%s2235 + $0x14] sm:$0xf]
        %v2242 = vld [vmem:[%s2235 + $0x18] sm:$0xf]
        %v2243 = vld [vmem:[%s2235 + $0x1c] sm:$0xf]
        %v2244 = vld [vmem:[%s2235 + $0x20] sm:$0xf]
        %v2245 = vld [vmem:[%s2235 + $0x24] sm:$0xf]
        %v2246 = vld [vmem:[%s2235 + $0x28] sm:$0xf]
        %v2247 = vld [vmem:[%s2235 + $0x2c] sm:$0xf]
        %v2248 = vld [vmem:[%s2235 + $0x30] sm:$0xf]
        %v2249 = vld [vmem:[%s2235 + $0x34] sm:$0xf]
        %v2250 = vld [vmem:[%s2235 + $0x38] sm:$0xf]
        %v2251 = vld [vmem:[%s2235 + $0x3c] sm:$0xf]
        %s2252 = scalar_lea.vmem [#allocation5], 5
        %v2253 = vld [vmem:[%s2252] sm:$0x1]
        %v2255 = vperm.slane %v2253, 0
        %v2273 = vunpack.c.l.b16 %v2236
        %v2274 = vunpack.c.l.b16 %v2237
        %v2275 = vunpack.c.l.b16 %v2238
        %v2276 = vunpack.c.l.b16 %v2239
        %v2277 = vunpack.c.l.b16 %v2240
        %v2278 = vunpack.c.l.b16 %v2241
        %v2279 = vunpack.c.l.b16 %v2242
        %v2280 = vunpack.c.l.b16 %v2243
        %v2281 = vunpack.c.l.b16 %v2244
        %v2282 = vunpack.c.l.b16 %v2245
        %v2283 = vunpack.c.l.b16 %v2246
        %v2284 = vunpack.c.l.b16 %v2247
        %v2285 = vunpack.c.l.b16 %v2248
        %v2286 = vunpack.c.l.b16 %v2249
        %v2287 = vunpack.c.l.b16 %v2250
        %v2288 = vunpack.c.l.b16 %v2251
        %v2289 = vpack.c.b16 %v2274, %v2273
        %v2290 = vpack.c.b16 %v2276, %v2275
        %v2291 = vpack.c.b16 %v2278, %v2277
        %v2292 = vpack.c.b16 %v2280, %v2279
        %v2293 = vpack.c.b16 %v2282, %v2281
        %v2294 = vpack.c.b16 %v2284, %v2283
        %v2295 = vpack.c.b16 %v2286, %v2285
        %v2296 = vpack.c.b16 %v2288, %v2287
        %2305 = vmatpush.bf16.msra.mxu0 %v2296
        %2306 = vmatpush.bf16.msra.mxu0 %v2295
        %2307 = vmatpush.bf16.msra.mxu0 %v2294
        %2308 = vmatpush.bf16.msra.mxu0 %v2293
        %2309 = vmatpush.bf16.msra.mxu0 %v2292
        %2310 = vmatpush.bf16.msra.mxu0 %v2291
        %2311 = vmatpush.bf16.msra.mxu0 %v2290
        %2312 = vmatpush.bf16.msra.mxu0 %v2289
        %2313 = vmatmul.bf16.gmra.mxu0 %v2203
        %v2314 = vpop.f32.mrf.mxu0
        %v2315 = vadd.f32 %v2255, %v2314
        %v2316 = vpop.f32.mrf.mxu0
        %v2317 = vadd.f32 %v2255, %v2316
        %2318 = vmatmul.bf16.gmra.mxu0 %v2204
        %v2319 = vpop.f32.mrf.mxu0
        %v2320 = vadd.f32 %v2255, %v2319
        %v2321 = vpop.f32.mrf.mxu0
        %v2322 = vadd.f32 %v2255, %v2321
        %2323 = vmatmul.bf16.gmra.mxu0 %v2205
        %v2324 = vpop.f32.mrf.mxu0
        %v2325 = vadd.f32 %v2255, %v2324
        %v2326 = vpop.f32.mrf.mxu0
        %v2327 = vadd.f32 %v2255, %v2326
        %2328 = vmatmul.bf16.gmra.mxu0 %v2206
        %v2329 = vpop.f32.mrf.mxu0
        %v2330 = vadd.f32 %v2255, %v2329
        %v2331 = vpop.f32.mrf.mxu0
        %v2332 = vadd.f32 %v2255, %v2331
        %2333 = vmatmul.bf16.gmra.mxu0 %v2207
        %v2334 = vpop.f32.mrf.mxu0
        %v2335 = vadd.f32 %v2255, %v2334
        %v2336 = vpop.f32.mrf.mxu0
        %v2337 = vadd.f32 %v2255, %v2336
        %2338 = vmatmul.bf16.gmra.mxu0 %v2208
        %v2339 = vpop.f32.mrf.mxu0
        %v2340 = vadd.f32 %v2255, %v2339
        %v2341 = vpop.f32.mrf.mxu0
        %v2342 = vadd.f32 %v2255, %v2341
        %2343 = vmatmul.bf16.gmra.mxu0 %v2209
        %v2344 = vpop.f32.mrf.mxu0
        %v2345 = vadd.f32 %v2255, %v2344
        %v2346 = vpop.f32.mrf.mxu0
        %v2347 = vadd.f32 %v2255, %v2346
        %2348 = vmatmul.bf16.gmra.mxu0 %v2210
        %v2349 = vpop.f32.mrf.mxu0
        %v2350 = vadd.f32 %v2255, %v2349
        %v2351 = vpop.f32.mrf.mxu0
        %v2352 = vadd.f32 %v2255, %v2351
        %2353 = vmatmul.bf16.gmra.mxu0 %v2211
        %v2354 = vpop.f32.mrf.mxu0
        %v2355 = vadd.f32 %v2255, %v2354
        %v2356 = vpop.f32.mrf.mxu0
        %v2357 = vadd.f32 %v2255, %v2356
        %2358 = vmatmul.bf16.gmra.mxu0 %v2212
        %v2359 = vpop.f32.mrf.mxu0
        %v2360 = vadd.f32 %v2255, %v2359
        %v2361 = vpop.f32.mrf.mxu0
        %v2362 = vadd.f32 %v2255, %v2361
        %2363 = vmatmul.bf16.gmra.mxu0 %v2213
        %v2364 = vpop.f32.mrf.mxu0
        %v2365 = vadd.f32 %v2255, %v2364
        %v2366 = vpop.f32.mrf.mxu0
        %v2367 = vadd.f32 %v2255, %v2366
        %2368 = vmatmul.bf16.gmra.mxu0 %v2214
        %v2369 = vpop.f32.mrf.mxu0
        %v2370 = vadd.f32 %v2255, %v2369
        %v2371 = vpop.f32.mrf.mxu0
        %v2372 = vadd.f32 %v2255, %v2371
        %2373 = vmatmul.bf16.gmra.mxu0 %v2215
        %v2374 = vpop.f32.mrf.mxu0
        %v2375 = vadd.f32 %v2255, %v2374
        %v2376 = vpop.f32.mrf.mxu0
        %v2377 = vadd.f32 %v2255, %v2376
        %2378 = vmatmul.bf16.gmra.mxu0 %v2216
        %v2379 = vpop.f32.mrf.mxu0
        %v2380 = vadd.f32 %v2255, %v2379
        %v2381 = vpop.f32.mrf.mxu0
        %v2382 = vadd.f32 %v2255, %v2381
        %2383 = vmatmul.bf16.gmra.mxu0 %v2217
        %v2384 = vpop.f32.mrf.mxu0
        %v2385 = vadd.f32 %v2255, %v2384
        %v2386 = vpop.f32.mrf.mxu0
        %v2387 = vadd.f32 %v2255, %v2386
        %2388 = vmatmul.bf16.gmra.mxu0 %v2218
        %v2389 = vpop.f32.mrf.mxu0
        %v2390 = vadd.f32 %v2255, %v2389
        %v2391 = vpop.f32.mrf.mxu0
        %v2392 = vadd.f32 %v2255, %v2391
        %2393 = vmatmul.bf16.gmra.mxu0 %v2219
        %v2394 = vpop.f32.mrf.mxu0
        %v2395 = vadd.f32 %v2255, %v2394
        %v2396 = vpop.f32.mrf.mxu0
        %v2397 = vadd.f32 %v2255, %v2396
        %2398 = vmatmul.bf16.gmra.mxu0 %v2220
        %v2399 = vpop.f32.mrf.mxu0
        %v2400 = vadd.f32 %v2255, %v2399
        %v2401 = vpop.f32.mrf.mxu0
        %v2402 = vadd.f32 %v2255, %v2401
        %2403 = vmatmul.bf16.gmra.mxu0 %v2221
        %v2404 = vpop.f32.mrf.mxu0
        %v2405 = vadd.f32 %v2255, %v2404
        %v2406 = vpop.f32.mrf.mxu0
        %v2407 = vadd.f32 %v2255, %v2406
        %2408 = vmatmul.bf16.gmra.mxu0 %v2222
        %v2409 = vpop.f32.mrf.mxu0
        %v2410 = vadd.f32 %v2255, %v2409
        %v2411 = vpop.f32.mrf.mxu0
        %v2412 = vadd.f32 %v2255, %v2411
        %2413 = vmatmul.bf16.gmra.mxu0 %v2223
        %v2414 = vpop.f32.mrf.mxu0
        %v2415 = vadd.f32 %v2255, %v2414
        %v2416 = vpop.f32.mrf.mxu0
        %v2417 = vadd.f32 %v2255, %v2416
        %2418 = vmatmul.bf16.gmra.mxu0 %v2224
        %v2419 = vpop.f32.mrf.mxu0
        %v2420 = vadd.f32 %v2255, %v2419
        %v2421 = vpop.f32.mrf.mxu0
        %v2422 = vadd.f32 %v2255, %v2421
        %2423 = vmatmul.bf16.gmra.mxu0 %v2225
        %v2424 = vpop.f32.mrf.mxu0
        %v2425 = vadd.f32 %v2255, %v2424
        %v2426 = vpop.f32.mrf.mxu0
        %v2427 = vadd.f32 %v2255, %v2426
        %2428 = vmatmul.bf16.gmra.mxu0 %v2226
        %v2429 = vpop.f32.mrf.mxu0
        %v2430 = vadd.f32 %v2255, %v2429
        %v2431 = vpop.f32.mrf.mxu0
        %v2432 = vadd.f32 %v2255, %v2431
        %2433 = vmatmul.bf16.gmra.mxu0 %v2227
        %v2434 = vpop.f32.mrf.mxu0
        %v2435 = vadd.f32 %v2255, %v2434
        %v2436 = vpop.f32.mrf.mxu0
        %v2437 = vadd.f32 %v2255, %v2436
        %2438 = vmatmul.bf16.gmra.mxu0 %v2228
        %v2439 = vpop.f32.mrf.mxu0
        %v2440 = vadd.f32 %v2255, %v2439
        %v2441 = vpop.f32.mrf.mxu0
        %v2442 = vadd.f32 %v2255, %v2441
        %2443 = vmatmul.bf16.gmra.mxu0 %v2229
        %v2444 = vpop.f32.mrf.mxu0
        %v2445 = vadd.f32 %v2255, %v2444
        %v2446 = vpop.f32.mrf.mxu0
        %v2447 = vadd.f32 %v2255, %v2446
        %2448 = vmatmul.bf16.gmra.mxu0 %v2230
        %v2449 = vpop.f32.mrf.mxu0
        %v2450 = vadd.f32 %v2255, %v2449
        %v2451 = vpop.f32.mrf.mxu0
        %v2452 = vadd.f32 %v2255, %v2451
        %2453 = vmatmul.bf16.gmra.mxu0 %v2231
        %v2454 = vpop.f32.mrf.mxu0
        %v2455 = vadd.f32 %v2255, %v2454
        %v2456 = vpop.f32.mrf.mxu0
        %v2457 = vadd.f32 %v2255, %v2456
        %2458 = vmatmul.bf16.gmra.mxu0 %v2232
        %v2459 = vpop.f32.mrf.mxu0
        %v2460 = vadd.f32 %v2255, %v2459
        %v2461 = vpop.f32.mrf.mxu0
        %v2462 = vadd.f32 %v2255, %v2461
        %2463 = vmatmul.bf16.gmra.mxu0 %v2233
        %v2464 = vpop.f32.mrf.mxu0
        %v2465 = vadd.f32 %v2255, %v2464
        %v2466 = vpop.f32.mrf.mxu0
        %v2467 = vadd.f32 %v2255, %v2466
        %2468 = vmatmul.bf16.gmra.mxu0 %v2234
        %v2469 = vpop.f32.mrf.mxu0
        %v2470 = vadd.f32 %v2255, %v2469
        %v2471 = vpop.f32.mrf.mxu0
        %v2472 = vadd.f32 %v2255, %v2471
        %2473 = vdwg.mxu0
        %v2474 = vmax.f32 %v2315, 0.0
        %v2475 = vmax.f32 %v2317, 0.0
        %v2476 = vmax.f32 %v2320, 0.0
        %v2477 = vmax.f32 %v2322, 0.0
        %v2478 = vmax.f32 %v2325, 0.0
        %v2479 = vmax.f32 %v2327, 0.0
        %v2480 = vmax.f32 %v2330, 0.0
        %v2481 = vmax.f32 %v2332, 0.0
        %v2482 = vmax.f32 %v2335, 0.0
        %v2483 = vmax.f32 %v2337, 0.0
        %v2484 = vmax.f32 %v2340, 0.0
        %v2485 = vmax.f32 %v2342, 0.0
        %v2486 = vmax.f32 %v2345, 0.0
        %v2487 = vmax.f32 %v2347, 0.0
        %v2488 = vmax.f32 %v2350, 0.0
        %v2489 = vmax.f32 %v2352, 0.0
        %v2490 = vmax.f32 %v2355, 0.0
        %v2491 = vmax.f32 %v2357, 0.0
        %v2492 = vmax.f32 %v2360, 0.0
        %v2493 = vmax.f32 %v2362, 0.0
        %v2494 = vmax.f32 %v2365, 0.0
        %v2495 = vmax.f32 %v2367, 0.0
        %v2496 = vmax.f32 %v2370, 0.0
        %v2497 = vmax.f32 %v2372, 0.0
        %v2498 = vmax.f32 %v2375, 0.0
        %v2499 = vmax.f32 %v2377, 0.0
        %v2500 = vmax.f32 %v2380, 0.0
        %v2501 = vmax.f32 %v2382, 0.0
        %v2502 = vmax.f32 %v2385, 0.0
        %v2503 = vmax.f32 %v2387, 0.0
        %v2504 = vmax.f32 %v2390, 0.0
        %v2505 = vmax.f32 %v2392, 0.0
        %v2506 = vmax.f32 %v2395, 0.0
        %v2507 = vmax.f32 %v2397, 0.0
        %v2508 = vmax.f32 %v2400, 0.0
        %v2509 = vmax.f32 %v2402, 0.0
        %v2510 = vmax.f32 %v2405, 0.0
        %v2511 = vmax.f32 %v2407, 0.0
        %v2512 = vmax.f32 %v2410, 0.0
        %v2513 = vmax.f32 %v2412, 0.0
        %v2514 = vmax.f32 %v2415, 0.0
        %v2515 = vmax.f32 %v2417, 0.0
        %v2516 = vmax.f32 %v2420, 0.0
        %v2517 = vmax.f32 %v2422, 0.0
        %v2518 = vmax.f32 %v2425, 0.0
        %v2519 = vmax.f32 %v2427, 0.0
        %v2520 = vmax.f32 %v2430, 0.0
        %v2521 = vmax.f32 %v2432, 0.0
        %v2522 = vmax.f32 %v2435, 0.0
        %v2523 = vmax.f32 %v2437, 0.0
        %v2524 = vmax.f32 %v2440, 0.0
        %v2525 = vmax.f32 %v2442, 0.0
        %v2526 = vmax.f32 %v2445, 0.0
        %v2527 = vmax.f32 %v2447, 0.0
        %v2528 = vmax.f32 %v2450, 0.0
        %v2529 = vmax.f32 %v2452, 0.0
        %v2530 = vmax.f32 %v2455, 0.0
        %v2531 = vmax.f32 %v2457, 0.0
        %v2532 = vmax.f32 %v2460, 0.0
        %v2533 = vmax.f32 %v2462, 0.0
        %v2534 = vmax.f32 %v2465, 0.0
        %v2535 = vmax.f32 %v2467, 0.0
        %v2536 = vmax.f32 %v2470, 0.0
        %v2537 = vmax.f32 %v2472, 0.0
        %v2538 = vpack.c.bf16 %v2475, %v2474
        %v2539 = vpack.c.bf16 %v2477, %v2476
        %v2540 = vpack.c.bf16 %v2479, %v2478
        %v2541 = vpack.c.bf16 %v2481, %v2480
        %v2542 = vpack.c.bf16 %v2483, %v2482
        %v2543 = vpack.c.bf16 %v2485, %v2484
        %v2544 = vpack.c.bf16 %v2487, %v2486
        %v2545 = vpack.c.bf16 %v2489, %v2488
        %v2546 = vpack.c.bf16 %v2491, %v2490
        %v2547 = vpack.c.bf16 %v2493, %v2492
        %v2548 = vpack.c.bf16 %v2495, %v2494
        %v2549 = vpack.c.bf16 %v2497, %v2496
        %v2550 = vpack.c.bf16 %v2499, %v2498
        %v2551 = vpack.c.bf16 %v2501, %v2500
        %v2552 = vpack.c.bf16 %v2503, %v2502
        %v2553 = vpack.c.bf16 %v2505, %v2504
        %v2554 = vpack.c.bf16 %v2507, %v2506
        %v2555 = vpack.c.bf16 %v2509, %v2508
        %v2556 = vpack.c.bf16 %v2511, %v2510
        %v2557 = vpack.c.bf16 %v2513, %v2512
        %v2558 = vpack.c.bf16 %v2515, %v2514
        %v2559 = vpack.c.bf16 %v2517, %v2516
        %v2560 = vpack.c.bf16 %v2519, %v2518
        %v2561 = vpack.c.bf16 %v2521, %v2520
        %v2562 = vpack.c.bf16 %v2523, %v2522
        %v2563 = vpack.c.bf16 %v2525, %v2524
        %v2564 = vpack.c.bf16 %v2527, %v2526
        %v2565 = vpack.c.bf16 %v2529, %v2528
        %v2566 = vpack.c.bf16 %v2531, %v2530
        %v2567 = vpack.c.bf16 %v2533, %v2532
        %v2568 = vpack.c.bf16 %v2535, %v2534
        %v2569 = vpack.c.bf16 %v2537, %v2536
        %s2570 = scalar_lea.vmem %s2, 320
        %v2571 = vld [vmem:[%s2570] sm:$0xf]
        %v2572 = vld [vmem:[%s2570 + $0x4] sm:$0xf]
        %v2573 = vld [vmem:[%s2570 + $0x8] sm:$0xf]
        %v2574 = vld [vmem:[%s2570 + $0xc] sm:$0xf]
        %v2575 = vld [vmem:[%s2570 + $0x10] sm:$0xf]
        %v2576 = vld [vmem:[%s2570 + $0x14] sm:$0xf]
        %v2577 = vld [vmem:[%s2570 + $0x18] sm:$0xf]
        %v2578 = vld [vmem:[%s2570 + $0x1c] sm:$0xf]
        %v2579 = vld [vmem:[%s2570 + $0x20] sm:$0xf]
        %v2580 = vld [vmem:[%s2570 + $0x24] sm:$0xf]
        %v2581 = vld [vmem:[%s2570 + $0x28] sm:$0xf]
        %v2582 = vld [vmem:[%s2570 + $0x2c] sm:$0xf]
        %v2583 = vld [vmem:[%s2570 + $0x30] sm:$0xf]
        %v2584 = vld [vmem:[%s2570 + $0x34] sm:$0xf]
        %v2585 = vld [vmem:[%s2570 + $0x38] sm:$0xf]
        %v2586 = vld [vmem:[%s2570 + $0x3c] sm:$0xf]
        %s2587 = scalar_lea.vmem [#allocation5], 6
        %v2588 = vld [vmem:[%s2587] sm:$0x1]
        %v2590 = vperm.slane %v2588, 0
        %v2608 = vunpack.c.l.b16 %v2571
        %v2609 = vunpack.c.l.b16 %v2572
        %v2610 = vunpack.c.l.b16 %v2573
        %v2611 = vunpack.c.l.b16 %v2574
        %v2612 = vunpack.c.l.b16 %v2575
        %v2613 = vunpack.c.l.b16 %v2576
        %v2614 = vunpack.c.l.b16 %v2577
        %v2615 = vunpack.c.l.b16 %v2578
        %v2616 = vunpack.c.l.b16 %v2579
        %v2617 = vunpack.c.l.b16 %v2580
        %v2618 = vunpack.c.l.b16 %v2581
        %v2619 = vunpack.c.l.b16 %v2582
        %v2620 = vunpack.c.l.b16 %v2583
        %v2621 = vunpack.c.l.b16 %v2584
        %v2622 = vunpack.c.l.b16 %v2585
        %v2623 = vunpack.c.l.b16 %v2586
        %v2624 = vpack.c.b16 %v2609, %v2608
        %v2625 = vpack.c.b16 %v2611, %v2610
        %v2626 = vpack.c.b16 %v2613, %v2612
        %v2627 = vpack.c.b16 %v2615, %v2614
        %v2628 = vpack.c.b16 %v2617, %v2616
        %v2629 = vpack.c.b16 %v2619, %v2618
        %v2630 = vpack.c.b16 %v2621, %v2620
        %v2631 = vpack.c.b16 %v2623, %v2622
        %2640 = vmatpush.bf16.msra.mxu0 %v2631
        %2641 = vmatpush.bf16.msra.mxu0 %v2630
        %2642 = vmatpush.bf16.msra.mxu0 %v2629
        %2643 = vmatpush.bf16.msra.mxu0 %v2628
        %2644 = vmatpush.bf16.msra.mxu0 %v2627
        %2645 = vmatpush.bf16.msra.mxu0 %v2626
        %2646 = vmatpush.bf16.msra.mxu0 %v2625
        %2647 = vmatpush.bf16.msra.mxu0 %v2624
        %2648 = vmatmul.bf16.gmra.mxu0 %v2538
        %v2649 = vpop.f32.mrf.mxu0
        %v2650 = vadd.f32 %v2590, %v2649
        %v2651 = vpop.f32.mrf.mxu0
        %v2652 = vadd.f32 %v2590, %v2651
        %2653 = vmatmul.bf16.gmra.mxu0 %v2539
        %v2654 = vpop.f32.mrf.mxu0
        %v2655 = vadd.f32 %v2590, %v2654
        %v2656 = vpop.f32.mrf.mxu0
        %v2657 = vadd.f32 %v2590, %v2656
        %2658 = vmatmul.bf16.gmra.mxu0 %v2540
        %v2659 = vpop.f32.mrf.mxu0
        %v2660 = vadd.f32 %v2590, %v2659
        %v2661 = vpop.f32.mrf.mxu0
        %v2662 = vadd.f32 %v2590, %v2661
        %2663 = vmatmul.bf16.gmra.mxu0 %v2541
        %v2664 = vpop.f32.mrf.mxu0
        %v2665 = vadd.f32 %v2590, %v2664
        %v2666 = vpop.f32.mrf.mxu0
        %v2667 = vadd.f32 %v2590, %v2666
        %2668 = vmatmul.bf16.gmra.mxu0 %v2542
        %v2669 = vpop.f32.mrf.mxu0
        %v2670 = vadd.f32 %v2590, %v2669
        %v2671 = vpop.f32.mrf.mxu0
        %v2672 = vadd.f32 %v2590, %v2671
        %2673 = vmatmul.bf16.gmra.mxu0 %v2543
        %v2674 = vpop.f32.mrf.mxu0
        %v2675 = vadd.f32 %v2590, %v2674
        %v2676 = vpop.f32.mrf.mxu0
        %v2677 = vadd.f32 %v2590, %v2676
        %2678 = vmatmul.bf16.gmra.mxu0 %v2544
        %v2679 = vpop.f32.mrf.mxu0
        %v2680 = vadd.f32 %v2590, %v2679
        %v2681 = vpop.f32.mrf.mxu0
        %v2682 = vadd.f32 %v2590, %v2681
        %2683 = vmatmul.bf16.gmra.mxu0 %v2545
        %v2684 = vpop.f32.mrf.mxu0
        %v2685 = vadd.f32 %v2590, %v2684
        %v2686 = vpop.f32.mrf.mxu0
        %v2687 = vadd.f32 %v2590, %v2686
        %2688 = vmatmul.bf16.gmra.mxu0 %v2546
        %v2689 = vpop.f32.mrf.mxu0
        %v2690 = vadd.f32 %v2590, %v2689
        %v2691 = vpop.f32.mrf.mxu0
        %v2692 = vadd.f32 %v2590, %v2691
        %2693 = vmatmul.bf16.gmra.mxu0 %v2547
        %v2694 = vpop.f32.mrf.mxu0
        %v2695 = vadd.f32 %v2590, %v2694
        %v2696 = vpop.f32.mrf.mxu0
        %v2697 = vadd.f32 %v2590, %v2696
        %2698 = vmatmul.bf16.gmra.mxu0 %v2548
        %v2699 = vpop.f32.mrf.mxu0
        %v2700 = vadd.f32 %v2590, %v2699
        %v2701 = vpop.f32.mrf.mxu0
        %v2702 = vadd.f32 %v2590, %v2701
        %2703 = vmatmul.bf16.gmra.mxu0 %v2549
        %v2704 = vpop.f32.mrf.mxu0
        %v2705 = vadd.f32 %v2590, %v2704
        %v2706 = vpop.f32.mrf.mxu0
        %v2707 = vadd.f32 %v2590, %v2706
        %2708 = vmatmul.bf16.gmra.mxu0 %v2550
        %v2709 = vpop.f32.mrf.mxu0
        %v2710 = vadd.f32 %v2590, %v2709
        %v2711 = vpop.f32.mrf.mxu0
        %v2712 = vadd.f32 %v2590, %v2711
        %2713 = vmatmul.bf16.gmra.mxu0 %v2551
        %v2714 = vpop.f32.mrf.mxu0
        %v2715 = vadd.f32 %v2590, %v2714
        %v2716 = vpop.f32.mrf.mxu0
        %v2717 = vadd.f32 %v2590, %v2716
        %2718 = vmatmul.bf16.gmra.mxu0 %v2552
        %v2719 = vpop.f32.mrf.mxu0
        %v2720 = vadd.f32 %v2590, %v2719
        %v2721 = vpop.f32.mrf.mxu0
        %v2722 = vadd.f32 %v2590, %v2721
        %2723 = vmatmul.bf16.gmra.mxu0 %v2553
        %v2724 = vpop.f32.mrf.mxu0
        %v2725 = vadd.f32 %v2590, %v2724
        %v2726 = vpop.f32.mrf.mxu0
        %v2727 = vadd.f32 %v2590, %v2726
        %2728 = vmatmul.bf16.gmra.mxu0 %v2554
        %v2729 = vpop.f32.mrf.mxu0
        %v2730 = vadd.f32 %v2590, %v2729
        %v2731 = vpop.f32.mrf.mxu0
        %v2732 = vadd.f32 %v2590, %v2731
        %2733 = vmatmul.bf16.gmra.mxu0 %v2555
        %v2734 = vpop.f32.mrf.mxu0
        %v2735 = vadd.f32 %v2590, %v2734
        %v2736 = vpop.f32.mrf.mxu0
        %v2737 = vadd.f32 %v2590, %v2736
        %2738 = vmatmul.bf16.gmra.mxu0 %v2556
        %v2739 = vpop.f32.mrf.mxu0
        %v2740 = vadd.f32 %v2590, %v2739
        %v2741 = vpop.f32.mrf.mxu0
        %v2742 = vadd.f32 %v2590, %v2741
        %2743 = vmatmul.bf16.gmra.mxu0 %v2557
        %v2744 = vpop.f32.mrf.mxu0
        %v2745 = vadd.f32 %v2590, %v2744
        %v2746 = vpop.f32.mrf.mxu0
        %v2747 = vadd.f32 %v2590, %v2746
        %2748 = vmatmul.bf16.gmra.mxu0 %v2558
        %v2749 = vpop.f32.mrf.mxu0
        %v2750 = vadd.f32 %v2590, %v2749
        %v2751 = vpop.f32.mrf.mxu0
        %v2752 = vadd.f32 %v2590, %v2751
        %2753 = vmatmul.bf16.gmra.mxu0 %v2559
        %v2754 = vpop.f32.mrf.mxu0
        %v2755 = vadd.f32 %v2590, %v2754
        %v2756 = vpop.f32.mrf.mxu0
        %v2757 = vadd.f32 %v2590, %v2756
        %2758 = vmatmul.bf16.gmra.mxu0 %v2560
        %v2759 = vpop.f32.mrf.mxu0
        %v2760 = vadd.f32 %v2590, %v2759
        %v2761 = vpop.f32.mrf.mxu0
        %v2762 = vadd.f32 %v2590, %v2761
        %2763 = vmatmul.bf16.gmra.mxu0 %v2561
        %v2764 = vpop.f32.mrf.mxu0
        %v2765 = vadd.f32 %v2590, %v2764
        %v2766 = vpop.f32.mrf.mxu0
        %v2767 = vadd.f32 %v2590, %v2766
        %2768 = vmatmul.bf16.gmra.mxu0 %v2562
        %v2769 = vpop.f32.mrf.mxu0
        %v2770 = vadd.f32 %v2590, %v2769
        %v2771 = vpop.f32.mrf.mxu0
        %v2772 = vadd.f32 %v2590, %v2771
        %2773 = vmatmul.bf16.gmra.mxu0 %v2563
        %v2774 = vpop.f32.mrf.mxu0
        %v2775 = vadd.f32 %v2590, %v2774
        %v2776 = vpop.f32.mrf.mxu0
        %v2777 = vadd.f32 %v2590, %v2776
        %2778 = vmatmul.bf16.gmra.mxu0 %v2564
        %v2779 = vpop.f32.mrf.mxu0
        %v2780 = vadd.f32 %v2590, %v2779
        %v2781 = vpop.f32.mrf.mxu0
        %v2782 = vadd.f32 %v2590, %v2781
        %2783 = vmatmul.bf16.gmra.mxu0 %v2565
        %v2784 = vpop.f32.mrf.mxu0
        %v2785 = vadd.f32 %v2590, %v2784
        %v2786 = vpop.f32.mrf.mxu0
        %v2787 = vadd.f32 %v2590, %v2786
        %2788 = vmatmul.bf16.gmra.mxu0 %v2566
        %v2789 = vpop.f32.mrf.mxu0
        %v2790 = vadd.f32 %v2590, %v2789
        %v2791 = vpop.f32.mrf.mxu0
        %v2792 = vadd.f32 %v2590, %v2791
        %2793 = vmatmul.bf16.gmra.mxu0 %v2567
        %v2794 = vpop.f32.mrf.mxu0
        %v2795 = vadd.f32 %v2590, %v2794
        %v2796 = vpop.f32.mrf.mxu0
        %v2797 = vadd.f32 %v2590, %v2796
        %2798 = vmatmul.bf16.gmra.mxu0 %v2568
        %v2799 = vpop.f32.mrf.mxu0
        %v2800 = vadd.f32 %v2590, %v2799
        %v2801 = vpop.f32.mrf.mxu0
        %v2802 = vadd.f32 %v2590, %v2801
        %2803 = vmatmul.bf16.gmra.mxu0 %v2569
        %v2804 = vpop.f32.mrf.mxu0
        %v2805 = vadd.f32 %v2590, %v2804
        %v2806 = vpop.f32.mrf.mxu0
        %v2807 = vadd.f32 %v2590, %v2806
        %2808 = vdwg.mxu0
        %v2809 = vmax.f32 %v2650, 0.0
        %v2810 = vmax.f32 %v2652, 0.0
        %v2811 = vmax.f32 %v2655, 0.0
        %v2812 = vmax.f32 %v2657, 0.0
        %v2813 = vmax.f32 %v2660, 0.0
        %v2814 = vmax.f32 %v2662, 0.0
        %v2815 = vmax.f32 %v2665, 0.0
        %v2816 = vmax.f32 %v2667, 0.0
        %v2817 = vmax.f32 %v2670, 0.0
        %v2818 = vmax.f32 %v2672, 0.0
        %v2819 = vmax.f32 %v2675, 0.0
        %v2820 = vmax.f32 %v2677, 0.0
        %v2821 = vmax.f32 %v2680, 0.0
        %v2822 = vmax.f32 %v2682, 0.0
        %v2823 = vmax.f32 %v2685, 0.0
        %v2824 = vmax.f32 %v2687, 0.0
        %v2825 = vmax.f32 %v2690, 0.0
        %v2826 = vmax.f32 %v2692, 0.0
        %v2827 = vmax.f32 %v2695, 0.0
        %v2828 = vmax.f32 %v2697, 0.0
        %v2829 = vmax.f32 %v2700, 0.0
        %v2830 = vmax.f32 %v2702, 0.0
        %v2831 = vmax.f32 %v2705, 0.0
        %v2832 = vmax.f32 %v2707, 0.0
        %v2833 = vmax.f32 %v2710, 0.0
        %v2834 = vmax.f32 %v2712, 0.0
        %v2835 = vmax.f32 %v2715, 0.0
        %v2836 = vmax.f32 %v2717, 0.0
        %v2837 = vmax.f32 %v2720, 0.0
        %v2838 = vmax.f32 %v2722, 0.0
        %v2839 = vmax.f32 %v2725, 0.0
        %v2840 = vmax.f32 %v2727, 0.0
        %v2841 = vmax.f32 %v2730, 0.0
        %v2842 = vmax.f32 %v2732, 0.0
        %v2843 = vmax.f32 %v2735, 0.0
        %v2844 = vmax.f32 %v2737, 0.0
        %v2845 = vmax.f32 %v2740, 0.0
        %v2846 = vmax.f32 %v2742, 0.0
        %v2847 = vmax.f32 %v2745, 0.0
        %v2848 = vmax.f32 %v2747, 0.0
        %v2849 = vmax.f32 %v2750, 0.0
        %v2850 = vmax.f32 %v2752, 0.0
        %v2851 = vmax.f32 %v2755, 0.0
        %v2852 = vmax.f32 %v2757, 0.0
        %v2853 = vmax.f32 %v2760, 0.0
        %v2854 = vmax.f32 %v2762, 0.0
        %v2855 = vmax.f32 %v2765, 0.0
        %v2856 = vmax.f32 %v2767, 0.0
        %v2857 = vmax.f32 %v2770, 0.0
        %v2858 = vmax.f32 %v2772, 0.0
        %v2859 = vmax.f32 %v2775, 0.0
        %v2860 = vmax.f32 %v2777, 0.0
        %v2861 = vmax.f32 %v2780, 0.0
        %v2862 = vmax.f32 %v2782, 0.0
        %v2863 = vmax.f32 %v2785, 0.0
        %v2864 = vmax.f32 %v2787, 0.0
        %v2865 = vmax.f32 %v2790, 0.0
        %v2866 = vmax.f32 %v2792, 0.0
        %v2867 = vmax.f32 %v2795, 0.0
        %v2868 = vmax.f32 %v2797, 0.0
        %v2869 = vmax.f32 %v2800, 0.0
        %v2870 = vmax.f32 %v2802, 0.0
        %v2871 = vmax.f32 %v2805, 0.0
        %v2872 = vmax.f32 %v2807, 0.0
        %v2873 = vadd.f32 %v1070, %v2809
        %v2874 = vadd.f32 %v1071, %v2810
        %v2875 = vadd.f32 %v1072, %v2811
        %v2876 = vadd.f32 %v1073, %v2812
        %v2877 = vadd.f32 %v1074, %v2813
        %v2878 = vadd.f32 %v1075, %v2814
        %v2879 = vadd.f32 %v1076, %v2815
        %v2880 = vadd.f32 %v1077, %v2816
        %v2881 = vadd.f32 %v1078, %v2817
        %v2882 = vadd.f32 %v1079, %v2818
        %v2883 = vadd.f32 %v1080, %v2819
        %v2884 = vadd.f32 %v1081, %v2820
        %v2885 = vadd.f32 %v1082, %v2821
        %v2886 = vadd.f32 %v1083, %v2822
        %v2887 = vadd.f32 %v1084, %v2823
        %v2888 = vadd.f32 %v1085, %v2824
        %v2889 = vadd.f32 %v1086, %v2825
        %v2890 = vadd.f32 %v1087, %v2826
        %v2891 = vadd.f32 %v1088, %v2827
        %v2892 = vadd.f32 %v1089, %v2828
        %v2893 = vadd.f32 %v1090, %v2829
        %v2894 = vadd.f32 %v1091, %v2830
        %v2895 = vadd.f32 %v1092, %v2831
        %v2896 = vadd.f32 %v1093, %v2832
        %v2897 = vadd.f32 %v1094, %v2833
        %v2898 = vadd.f32 %v1095, %v2834
        %v2899 = vadd.f32 %v1096, %v2835
        %v2900 = vadd.f32 %v1097, %v2836
        %v2901 = vadd.f32 %v1098, %v2837
        %v2902 = vadd.f32 %v1099, %v2838
        %v2903 = vadd.f32 %v1100, %v2839
        %v2904 = vadd.f32 %v1101, %v2840
        %v2905 = vadd.f32 %v1102, %v2841
        %v2906 = vadd.f32 %v1103, %v2842
        %v2907 = vadd.f32 %v1104, %v2843
        %v2908 = vadd.f32 %v1105, %v2844
        %v2909 = vadd.f32 %v1106, %v2845
        %v2910 = vadd.f32 %v1107, %v2846
        %v2911 = vadd.f32 %v1108, %v2847
        %v2912 = vadd.f32 %v1109, %v2848
        %v2913 = vadd.f32 %v1110, %v2849
        %v2914 = vadd.f32 %v1111, %v2850
        %v2915 = vadd.f32 %v1112, %v2851
        %v2916 = vadd.f32 %v1113, %v2852
        %v2917 = vadd.f32 %v1114, %v2853
        %v2918 = vadd.f32 %v1115, %v2854
        %v2919 = vadd.f32 %v1116, %v2855
        %v2920 = vadd.f32 %v1117, %v2856
        %v2921 = vadd.f32 %v1118, %v2857
        %v2922 = vadd.f32 %v1119, %v2858
        %v2923 = vadd.f32 %v1120, %v2859
        %v2924 = vadd.f32 %v1121, %v2860
        %v2925 = vadd.f32 %v1122, %v2861
        %v2926 = vadd.f32 %v1123, %v2862
        %v2927 = vadd.f32 %v1124, %v2863
        %v2928 = vadd.f32 %v1125, %v2864
        %v2929 = vadd.f32 %v1126, %v2865
        %v2930 = vadd.f32 %v1127, %v2866
        %v2931 = vadd.f32 %v1128, %v2867
        %v2932 = vadd.f32 %v1129, %v2868
        %v2933 = vadd.f32 %v1130, %v2869
        %v2934 = vadd.f32 %v1131, %v2870
        %v2935 = vadd.f32 %v1132, %v2871
        %v2936 = vadd.f32 %v1133, %v2872
        %v2937 = vpack.c.bf16 %v2874, %v2873
        %v2938 = vpack.c.bf16 %v2876, %v2875
        %v2939 = vpack.c.bf16 %v2878, %v2877
        %v2940 = vpack.c.bf16 %v2880, %v2879
        %v2941 = vpack.c.bf16 %v2882, %v2881
        %v2942 = vpack.c.bf16 %v2884, %v2883
        %v2943 = vpack.c.bf16 %v2886, %v2885
        %v2944 = vpack.c.bf16 %v2888, %v2887
        %v2945 = vpack.c.bf16 %v2890, %v2889
        %v2946 = vpack.c.bf16 %v2892, %v2891
        %v2947 = vpack.c.bf16 %v2894, %v2893
        %v2948 = vpack.c.bf16 %v2896, %v2895
        %v2949 = vpack.c.bf16 %v2898, %v2897
        %v2950 = vpack.c.bf16 %v2900, %v2899
        %v2951 = vpack.c.bf16 %v2902, %v2901
        %v2952 = vpack.c.bf16 %v2904, %v2903
        %v2953 = vpack.c.bf16 %v2906, %v2905
        %v2954 = vpack.c.bf16 %v2908, %v2907
        %v2955 = vpack.c.bf16 %v2910, %v2909
        %v2956 = vpack.c.bf16 %v2912, %v2911
        %v2957 = vpack.c.bf16 %v2914, %v2913
        %v2958 = vpack.c.bf16 %v2916, %v2915
        %v2959 = vpack.c.bf16 %v2918, %v2917
        %v2960 = vpack.c.bf16 %v2920, %v2919
        %v2961 = vpack.c.bf16 %v2922, %v2921
        %v2962 = vpack.c.bf16 %v2924, %v2923
        %v2963 = vpack.c.bf16 %v2926, %v2925
        %v2964 = vpack.c.bf16 %v2928, %v2927
        %v2965 = vpack.c.bf16 %v2930, %v2929
        %v2966 = vpack.c.bf16 %v2932, %v2931
        %v2967 = vpack.c.bf16 %v2934, %v2933
        %v2968 = vpack.c.bf16 %v2936, %v2935
        %s2969 = scalar_lea.vmem %s2, 384
        %v2970 = vld [vmem:[%s2969] sm:$0xf]
        %v2971 = vld [vmem:[%s2969 + $0x4] sm:$0xf]
        %v2972 = vld [vmem:[%s2969 + $0x8] sm:$0xf]
        %v2973 = vld [vmem:[%s2969 + $0xc] sm:$0xf]
        %v2974 = vld [vmem:[%s2969 + $0x10] sm:$0xf]
        %v2975 = vld [vmem:[%s2969 + $0x14] sm:$0xf]
        %v2976 = vld [vmem:[%s2969 + $0x18] sm:$0xf]
        %v2977 = vld [vmem:[%s2969 + $0x1c] sm:$0xf]
        %v2978 = vld [vmem:[%s2969 + $0x20] sm:$0xf]
        %v2979 = vld [vmem:[%s2969 + $0x24] sm:$0xf]
        %v2980 = vld [vmem:[%s2969 + $0x28] sm:$0xf]
        %v2981 = vld [vmem:[%s2969 + $0x2c] sm:$0xf]
        %v2982 = vld [vmem:[%s2969 + $0x30] sm:$0xf]
        %v2983 = vld [vmem:[%s2969 + $0x34] sm:$0xf]
        %v2984 = vld [vmem:[%s2969 + $0x38] sm:$0xf]
        %v2985 = vld [vmem:[%s2969 + $0x3c] sm:$0xf]
        %s2986 = scalar_lea.vmem [#allocation5], 7
        %v2987 = vld [vmem:[%s2986] sm:$0x1]
        %v2989 = vperm.slane %v2987, 0
        %v3007 = vunpack.c.l.b16 %v2970
        %v3008 = vunpack.c.l.b16 %v2971
        %v3009 = vunpack.c.l.b16 %v2972
        %v3010 = vunpack.c.l.b16 %v2973
        %v3011 = vunpack.c.l.b16 %v2974
        %v3012 = vunpack.c.l.b16 %v2975
        %v3013 = vunpack.c.l.b16 %v2976
        %v3014 = vunpack.c.l.b16 %v2977
        %v3015 = vunpack.c.l.b16 %v2978
        %v3016 = vunpack.c.l.b16 %v2979
        %v3017 = vunpack.c.l.b16 %v2980
        %v3018 = vunpack.c.l.b16 %v2981
        %v3019 = vunpack.c.l.b16 %v2982
        %v3020 = vunpack.c.l.b16 %v2983
        %v3021 = vunpack.c.l.b16 %v2984
        %v3022 = vunpack.c.l.b16 %v2985
        %v3023 = vpack.c.b16 %v3008, %v3007
        %v3024 = vpack.c.b16 %v3010, %v3009
        %v3025 = vpack.c.b16 %v3012, %v3011
        %v3026 = vpack.c.b16 %v3014, %v3013
        %v3027 = vpack.c.b16 %v3016, %v3015
        %v3028 = vpack.c.b16 %v3018, %v3017
        %v3029 = vpack.c.b16 %v3020, %v3019
        %v3030 = vpack.c.b16 %v3022, %v3021
        %3039 = vmatpush.bf16.msra.mxu0 %v3030
        %3040 = vmatpush.bf16.msra.mxu0 %v3029
        %3041 = vmatpush.bf16.msra.mxu0 %v3028
        %3042 = vmatpush.bf16.msra.mxu0 %v3027
        %3043 = vmatpush.bf16.msra.mxu0 %v3026
        %3044 = vmatpush.bf16.msra.mxu0 %v3025
        %3045 = vmatpush.bf16.msra.mxu0 %v3024
        %3046 = vmatpush.bf16.msra.mxu0 %v3023
        %3047 = vmatmul.bf16.gmra.mxu0 %v2937
        %v3048 = vpop.f32.mrf.mxu0
        %v3049 = vadd.f32 %v2989, %v3048
        %v3050 = vpop.f32.mrf.mxu0
        %v3051 = vadd.f32 %v2989, %v3050
        %3052 = vmatmul.bf16.gmra.mxu0 %v2938
        %v3053 = vpop.f32.mrf.mxu0
        %v3054 = vadd.f32 %v2989, %v3053
        %v3055 = vpop.f32.mrf.mxu0
        %v3056 = vadd.f32 %v2989, %v3055
        %3057 = vmatmul.bf16.gmra.mxu0 %v2939
        %v3058 = vpop.f32.mrf.mxu0
        %v3059 = vadd.f32 %v2989, %v3058
        %v3060 = vpop.f32.mrf.mxu0
        %v3061 = vadd.f32 %v2989, %v3060
        %3062 = vmatmul.bf16.gmra.mxu0 %v2940
        %v3063 = vpop.f32.mrf.mxu0
        %v3064 = vadd.f32 %v2989, %v3063
        %v3065 = vpop.f32.mrf.mxu0
        %v3066 = vadd.f32 %v2989, %v3065
        %3067 = vmatmul.bf16.gmra.mxu0 %v2941
        %v3068 = vpop.f32.mrf.mxu0
        %v3069 = vadd.f32 %v2989, %v3068
        %v3070 = vpop.f32.mrf.mxu0
        %v3071 = vadd.f32 %v2989, %v3070
        %3072 = vmatmul.bf16.gmra.mxu0 %v2942
        %v3073 = vpop.f32.mrf.mxu0
        %v3074 = vadd.f32 %v2989, %v3073
        %v3075 = vpop.f32.mrf.mxu0
        %v3076 = vadd.f32 %v2989, %v3075
        %3077 = vmatmul.bf16.gmra.mxu0 %v2943
        %v3078 = vpop.f32.mrf.mxu0
        %v3079 = vadd.f32 %v2989, %v3078
        %v3080 = vpop.f32.mrf.mxu0
        %v3081 = vadd.f32 %v2989, %v3080
        %3082 = vmatmul.bf16.gmra.mxu0 %v2944
        %v3083 = vpop.f32.mrf.mxu0
        %v3084 = vadd.f32 %v2989, %v3083
        %v3085 = vpop.f32.mrf.mxu0
        %v3086 = vadd.f32 %v2989, %v3085
        %3087 = vmatmul.bf16.gmra.mxu0 %v2945
        %v3088 = vpop.f32.mrf.mxu0
        %v3089 = vadd.f32 %v2989, %v3088
        %v3090 = vpop.f32.mrf.mxu0
        %v3091 = vadd.f32 %v2989, %v3090
        %3092 = vmatmul.bf16.gmra.mxu0 %v2946
        %v3093 = vpop.f32.mrf.mxu0
        %v3094 = vadd.f32 %v2989, %v3093
        %v3095 = vpop.f32.mrf.mxu0
        %v3096 = vadd.f32 %v2989, %v3095
        %3097 = vmatmul.bf16.gmra.mxu0 %v2947
        %v3098 = vpop.f32.mrf.mxu0
        %v3099 = vadd.f32 %v2989, %v3098
        %v3100 = vpop.f32.mrf.mxu0
        %v3101 = vadd.f32 %v2989, %v3100
        %3102 = vmatmul.bf16.gmra.mxu0 %v2948
        %v3103 = vpop.f32.mrf.mxu0
        %v3104 = vadd.f32 %v2989, %v3103
        %v3105 = vpop.f32.mrf.mxu0
        %v3106 = vadd.f32 %v2989, %v3105
        %3107 = vmatmul.bf16.gmra.mxu0 %v2949
        %v3108 = vpop.f32.mrf.mxu0
        %v3109 = vadd.f32 %v2989, %v3108
        %v3110 = vpop.f32.mrf.mxu0
        %v3111 = vadd.f32 %v2989, %v3110
        %3112 = vmatmul.bf16.gmra.mxu0 %v2950
        %v3113 = vpop.f32.mrf.mxu0
        %v3114 = vadd.f32 %v2989, %v3113
        %v3115 = vpop.f32.mrf.mxu0
        %v3116 = vadd.f32 %v2989, %v3115
        %3117 = vmatmul.bf16.gmra.mxu0 %v2951
        %v3118 = vpop.f32.mrf.mxu0
        %v3119 = vadd.f32 %v2989, %v3118
        %v3120 = vpop.f32.mrf.mxu0
        %v3121 = vadd.f32 %v2989, %v3120
        %3122 = vmatmul.bf16.gmra.mxu0 %v2952
        %v3123 = vpop.f32.mrf.mxu0
        %v3124 = vadd.f32 %v2989, %v3123
        %v3125 = vpop.f32.mrf.mxu0
        %v3126 = vadd.f32 %v2989, %v3125
        %3127 = vmatmul.bf16.gmra.mxu0 %v2953
        %v3128 = vpop.f32.mrf.mxu0
        %v3129 = vadd.f32 %v2989, %v3128
        %v3130 = vpop.f32.mrf.mxu0
        %v3131 = vadd.f32 %v2989, %v3130
        %3132 = vmatmul.bf16.gmra.mxu0 %v2954
        %v3133 = vpop.f32.mrf.mxu0
        %v3134 = vadd.f32 %v2989, %v3133
        %v3135 = vpop.f32.mrf.mxu0
        %v3136 = vadd.f32 %v2989, %v3135
        %3137 = vmatmul.bf16.gmra.mxu0 %v2955
        %v3138 = vpop.f32.mrf.mxu0
        %v3139 = vadd.f32 %v2989, %v3138
        %v3140 = vpop.f32.mrf.mxu0
        %v3141 = vadd.f32 %v2989, %v3140
        %3142 = vmatmul.bf16.gmra.mxu0 %v2956
        %v3143 = vpop.f32.mrf.mxu0
        %v3144 = vadd.f32 %v2989, %v3143
        %v3145 = vpop.f32.mrf.mxu0
        %v3146 = vadd.f32 %v2989, %v3145
        %3147 = vmatmul.bf16.gmra.mxu0 %v2957
        %v3148 = vpop.f32.mrf.mxu0
        %v3149 = vadd.f32 %v2989, %v3148
        %v3150 = vpop.f32.mrf.mxu0
        %v3151 = vadd.f32 %v2989, %v3150
        %3152 = vmatmul.bf16.gmra.mxu0 %v2958
        %v3153 = vpop.f32.mrf.mxu0
        %v3154 = vadd.f32 %v2989, %v3153
        %v3155 = vpop.f32.mrf.mxu0
        %v3156 = vadd.f32 %v2989, %v3155
        %3157 = vmatmul.bf16.gmra.mxu0 %v2959
        %v3158 = vpop.f32.mrf.mxu0
        %v3159 = vadd.f32 %v2989, %v3158
        %v3160 = vpop.f32.mrf.mxu0
        %v3161 = vadd.f32 %v2989, %v3160
        %3162 = vmatmul.bf16.gmra.mxu0 %v2960
        %v3163 = vpop.f32.mrf.mxu0
        %v3164 = vadd.f32 %v2989, %v3163
        %v3165 = vpop.f32.mrf.mxu0
        %v3166 = vadd.f32 %v2989, %v3165
        %3167 = vmatmul.bf16.gmra.mxu0 %v2961
        %v3168 = vpop.f32.mrf.mxu0
        %v3169 = vadd.f32 %v2989, %v3168
        %v3170 = vpop.f32.mrf.mxu0
        %v3171 = vadd.f32 %v2989, %v3170
        %3172 = vmatmul.bf16.gmra.mxu0 %v2962
        %v3173 = vpop.f32.mrf.mxu0
        %v3174 = vadd.f32 %v2989, %v3173
        %v3175 = vpop.f32.mrf.mxu0
        %v3176 = vadd.f32 %v2989, %v3175
        %3177 = vmatmul.bf16.gmra.mxu0 %v2963
        %v3178 = vpop.f32.mrf.mxu0
        %v3179 = vadd.f32 %v2989, %v3178
        %v3180 = vpop.f32.mrf.mxu0
        %v3181 = vadd.f32 %v2989, %v3180
        %3182 = vmatmul.bf16.gmra.mxu0 %v2964
        %v3183 = vpop.f32.mrf.mxu0
        %v3184 = vadd.f32 %v2989, %v3183
        %v3185 = vpop.f32.mrf.mxu0
        %v3186 = vadd.f32 %v2989, %v3185
        %3187 = vmatmul.bf16.gmra.mxu0 %v2965
        %v3188 = vpop.f32.mrf.mxu0
        %v3189 = vadd.f32 %v2989, %v3188
        %v3190 = vpop.f32.mrf.mxu0
        %v3191 = vadd.f32 %v2989, %v3190
        %3192 = vmatmul.bf16.gmra.mxu0 %v2966
        %v3193 = vpop.f32.mrf.mxu0
        %v3194 = vadd.f32 %v2989, %v3193
        %v3195 = vpop.f32.mrf.mxu0
        %v3196 = vadd.f32 %v2989, %v3195
        %3197 = vmatmul.bf16.gmra.mxu0 %v2967
        %v3198 = vpop.f32.mrf.mxu0
        %v3199 = vadd.f32 %v2989, %v3198
        %v3200 = vpop.f32.mrf.mxu0
        %v3201 = vadd.f32 %v2989, %v3200
        %3202 = vmatmul.bf16.gmra.mxu0 %v2968
        %v3203 = vpop.f32.mrf.mxu0
        %v3204 = vadd.f32 %v2989, %v3203
        %v3205 = vpop.f32.mrf.mxu0
        %v3206 = vadd.f32 %v2989, %v3205
        %3207 = vdwg.mxu0
        %v3208 = vmax.f32 %v3049, 0.0
        %v3209 = vmax.f32 %v3051, 0.0
        %v3210 = vmax.f32 %v3054, 0.0
        %v3211 = vmax.f32 %v3056, 0.0
        %v3212 = vmax.f32 %v3059, 0.0
        %v3213 = vmax.f32 %v3061, 0.0
        %v3214 = vmax.f32 %v3064, 0.0
        %v3215 = vmax.f32 %v3066, 0.0
        %v3216 = vmax.f32 %v3069, 0.0
        %v3217 = vmax.f32 %v3071, 0.0
        %v3218 = vmax.f32 %v3074, 0.0
        %v3219 = vmax.f32 %v3076, 0.0
        %v3220 = vmax.f32 %v3079, 0.0
        %v3221 = vmax.f32 %v3081, 0.0
        %v3222 = vmax.f32 %v3084, 0.0
        %v3223 = vmax.f32 %v3086, 0.0
        %v3224 = vmax.f32 %v3089, 0.0
        %v3225 = vmax.f32 %v3091, 0.0
        %v3226 = vmax.f32 %v3094, 0.0
        %v3227 = vmax.f32 %v3096, 0.0
        %v3228 = vmax.f32 %v3099, 0.0
        %v3229 = vmax.f32 %v3101, 0.0
        %v3230 = vmax.f32 %v3104, 0.0
        %v3231 = vmax.f32 %v3106, 0.0
        %v3232 = vmax.f32 %v3109, 0.0
        %v3233 = vmax.f32 %v3111, 0.0
        %v3234 = vmax.f32 %v3114, 0.0
        %v3235 = vmax.f32 %v3116, 0.0
        %v3236 = vmax.f32 %v3119, 0.0
        %v3237 = vmax.f32 %v3121, 0.0
        %v3238 = vmax.f32 %v3124, 0.0
        %v3239 = vmax.f32 %v3126, 0.0
        %v3240 = vmax.f32 %v3129, 0.0
        %v3241 = vmax.f32 %v3131, 0.0
        %v3242 = vmax.f32 %v3134, 0.0
        %v3243 = vmax.f32 %v3136, 0.0
        %v3244 = vmax.f32 %v3139, 0.0
        %v3245 = vmax.f32 %v3141, 0.0
        %v3246 = vmax.f32 %v3144, 0.0
        %v3247 = vmax.f32 %v3146, 0.0
        %v3248 = vmax.f32 %v3149, 0.0
        %v3249 = vmax.f32 %v3151, 0.0
        %v3250 = vmax.f32 %v3154, 0.0
        %v3251 = vmax.f32 %v3156, 0.0
        %v3252 = vmax.f32 %v3159, 0.0
        %v3253 = vmax.f32 %v3161, 0.0
        %v3254 = vmax.f32 %v3164, 0.0
        %v3255 = vmax.f32 %v3166, 0.0
        %v3256 = vmax.f32 %v3169, 0.0
        %v3257 = vmax.f32 %v3171, 0.0
        %v3258 = vmax.f32 %v3174, 0.0
        %v3259 = vmax.f32 %v3176, 0.0
        %v3260 = vmax.f32 %v3179, 0.0
        %v3261 = vmax.f32 %v3181, 0.0
        %v3262 = vmax.f32 %v3184, 0.0
        %v3263 = vmax.f32 %v3186, 0.0
        %v3264 = vmax.f32 %v3189, 0.0
        %v3265 = vmax.f32 %v3191, 0.0
        %v3266 = vmax.f32 %v3194, 0.0
        %v3267 = vmax.f32 %v3196, 0.0
        %v3268 = vmax.f32 %v3199, 0.0
        %v3269 = vmax.f32 %v3201, 0.0
        %v3270 = vmax.f32 %v3204, 0.0
        %v3271 = vmax.f32 %v3206, 0.0
        %v3272 = vpack.c.bf16 %v3209, %v3208
        %v3273 = vpack.c.bf16 %v3211, %v3210
        %v3274 = vpack.c.bf16 %v3213, %v3212
        %v3275 = vpack.c.bf16 %v3215, %v3214
        %v3276 = vpack.c.bf16 %v3217, %v3216
        %v3277 = vpack.c.bf16 %v3219, %v3218
        %v3278 = vpack.c.bf16 %v3221, %v3220
        %v3279 = vpack.c.bf16 %v3223, %v3222
        %v3280 = vpack.c.bf16 %v3225, %v3224
        %v3281 = vpack.c.bf16 %v3227, %v3226
        %v3282 = vpack.c.bf16 %v3229, %v3228
        %v3283 = vpack.c.bf16 %v3231, %v3230
        %v3284 = vpack.c.bf16 %v3233, %v3232
        %v3285 = vpack.c.bf16 %v3235, %v3234
        %v3286 = vpack.c.bf16 %v3237, %v3236
        %v3287 = vpack.c.bf16 %v3239, %v3238
        %v3288 = vpack.c.bf16 %v3241, %v3240
        %v3289 = vpack.c.bf16 %v3243, %v3242
        %v3290 = vpack.c.bf16 %v3245, %v3244
        %v3291 = vpack.c.bf16 %v3247, %v3246
        %v3292 = vpack.c.bf16 %v3249, %v3248
        %v3293 = vpack.c.bf16 %v3251, %v3250
        %v3294 = vpack.c.bf16 %v3253, %v3252
        %v3295 = vpack.c.bf16 %v3255, %v3254
        %v3296 = vpack.c.bf16 %v3257, %v3256
        %v3297 = vpack.c.bf16 %v3259, %v3258
        %v3298 = vpack.c.bf16 %v3261, %v3260
        %v3299 = vpack.c.bf16 %v3263, %v3262
        %v3300 = vpack.c.bf16 %v3265, %v3264
        %v3301 = vpack.c.bf16 %v3267, %v3266
        %v3302 = vpack.c.bf16 %v3269, %v3268
        %v3303 = vpack.c.bf16 %v3271, %v3270
        %s3304 = scalar_lea.vmem %s2, 448
        %v3305 = vld [vmem:[%s3304] sm:$0xf]
        %v3306 = vld [vmem:[%s3304 + $0x4] sm:$0xf]
        %v3307 = vld [vmem:[%s3304 + $0x8] sm:$0xf]
        %v3308 = vld [vmem:[%s3304 + $0xc] sm:$0xf]
        %v3309 = vld [vmem:[%s3304 + $0x10] sm:$0xf]
        %v3310 = vld [vmem:[%s3304 + $0x14] sm:$0xf]
        %v3311 = vld [vmem:[%s3304 + $0x18] sm:$0xf]
        %v3312 = vld [vmem:[%s3304 + $0x1c] sm:$0xf]
        %v3313 = vld [vmem:[%s3304 + $0x20] sm:$0xf]
        %v3314 = vld [vmem:[%s3304 + $0x24] sm:$0xf]
        %v3315 = vld [vmem:[%s3304 + $0x28] sm:$0xf]
        %v3316 = vld [vmem:[%s3304 + $0x2c] sm:$0xf]
        %v3317 = vld [vmem:[%s3304 + $0x30] sm:$0xf]
        %v3318 = vld [vmem:[%s3304 + $0x34] sm:$0xf]
        %v3319 = vld [vmem:[%s3304 + $0x38] sm:$0xf]
        %v3320 = vld [vmem:[%s3304 + $0x3c] sm:$0xf]
        %s3321 = scalar_lea.vmem [#allocation5], 8
        %v3322 = vld [vmem:[%s3321] sm:$0x1]
        %v3324 = vperm.slane %v3322, 0
        %v3342 = vunpack.c.l.b16 %v3305
        %v3343 = vunpack.c.l.b16 %v3306
        %v3344 = vunpack.c.l.b16 %v3307
        %v3345 = vunpack.c.l.b16 %v3308
        %v3346 = vunpack.c.l.b16 %v3309
        %v3347 = vunpack.c.l.b16 %v3310
        %v3348 = vunpack.c.l.b16 %v3311
        %v3349 = vunpack.c.l.b16 %v3312
        %v3350 = vunpack.c.l.b16 %v3313
        %v3351 = vunpack.c.l.b16 %v3314
        %v3352 = vunpack.c.l.b16 %v3315
        %v3353 = vunpack.c.l.b16 %v3316
        %v3354 = vunpack.c.l.b16 %v3317
        %v3355 = vunpack.c.l.b16 %v3318
        %v3356 = vunpack.c.l.b16 %v3319
        %v3357 = vunpack.c.l.b16 %v3320
        %v3358 = vpack.c.b16 %v3343, %v3342
        %v3359 = vpack.c.b16 %v3345, %v3344
        %v3360 = vpack.c.b16 %v3347, %v3346
        %v3361 = vpack.c.b16 %v3349, %v3348
        %v3362 = vpack.c.b16 %v3351, %v3350
        %v3363 = vpack.c.b16 %v3353, %v3352
        %v3364 = vpack.c.b16 %v3355, %v3354
        %v3365 = vpack.c.b16 %v3357, %v3356
        %3374 = vmatpush.bf16.msra.mxu0 %v3365
        %3375 = vmatpush.bf16.msra.mxu0 %v3364
        %3376 = vmatpush.bf16.msra.mxu0 %v3363
        %3377 = vmatpush.bf16.msra.mxu0 %v3362
        %3378 = vmatpush.bf16.msra.mxu0 %v3361
        %3379 = vmatpush.bf16.msra.mxu0 %v3360
        %3380 = vmatpush.bf16.msra.mxu0 %v3359
        %3381 = vmatpush.bf16.msra.mxu0 %v3358
        %3382 = vmatmul.bf16.gmra.mxu0 %v3272
        %v3383 = vpop.f32.mrf.mxu0
        %v3384 = vadd.f32 %v3324, %v3383
        %v3385 = vpop.f32.mrf.mxu0
        %v3386 = vadd.f32 %v3324, %v3385
        %3387 = vmatmul.bf16.gmra.mxu0 %v3273
        %v3388 = vpop.f32.mrf.mxu0
        %v3389 = vadd.f32 %v3324, %v3388
        %v3390 = vpop.f32.mrf.mxu0
        %v3391 = vadd.f32 %v3324, %v3390
        %3392 = vmatmul.bf16.gmra.mxu0 %v3274
        %v3393 = vpop.f32.mrf.mxu0
        %v3394 = vadd.f32 %v3324, %v3393
        %v3395 = vpop.f32.mrf.mxu0
        %v3396 = vadd.f32 %v3324, %v3395
        %3397 = vmatmul.bf16.gmra.mxu0 %v3275
        %v3398 = vpop.f32.mrf.mxu0
        %v3399 = vadd.f32 %v3324, %v3398
        %v3400 = vpop.f32.mrf.mxu0
        %v3401 = vadd.f32 %v3324, %v3400
        %3402 = vmatmul.bf16.gmra.mxu0 %v3276
        %v3403 = vpop.f32.mrf.mxu0
        %v3404 = vadd.f32 %v3324, %v3403
        %v3405 = vpop.f32.mrf.mxu0
        %v3406 = vadd.f32 %v3324, %v3405
        %3407 = vmatmul.bf16.gmra.mxu0 %v3277
        %v3408 = vpop.f32.mrf.mxu0
        %v3409 = vadd.f32 %v3324, %v3408
        %v3410 = vpop.f32.mrf.mxu0
        %v3411 = vadd.f32 %v3324, %v3410
        %3412 = vmatmul.bf16.gmra.mxu0 %v3278
        %v3413 = vpop.f32.mrf.mxu0
        %v3414 = vadd.f32 %v3324, %v3413
        %v3415 = vpop.f32.mrf.mxu0
        %v3416 = vadd.f32 %v3324, %v3415
        %3417 = vmatmul.bf16.gmra.mxu0 %v3279
        %v3418 = vpop.f32.mrf.mxu0
        %v3419 = vadd.f32 %v3324, %v3418
        %v3420 = vpop.f32.mrf.mxu0
        %v3421 = vadd.f32 %v3324, %v3420
        %3422 = vmatmul.bf16.gmra.mxu0 %v3280
        %v3423 = vpop.f32.mrf.mxu0
        %v3424 = vadd.f32 %v3324, %v3423
        %v3425 = vpop.f32.mrf.mxu0
        %v3426 = vadd.f32 %v3324, %v3425
        %3427 = vmatmul.bf16.gmra.mxu0 %v3281
        %v3428 = vpop.f32.mrf.mxu0
        %v3429 = vadd.f32 %v3324, %v3428
        %v3430 = vpop.f32.mrf.mxu0
        %v3431 = vadd.f32 %v3324, %v3430
        %3432 = vmatmul.bf16.gmra.mxu0 %v3282
        %v3433 = vpop.f32.mrf.mxu0
        %v3434 = vadd.f32 %v3324, %v3433
        %v3435 = vpop.f32.mrf.mxu0
        %v3436 = vadd.f32 %v3324, %v3435
        %3437 = vmatmul.bf16.gmra.mxu0 %v3283
        %v3438 = vpop.f32.mrf.mxu0
        %v3439 = vadd.f32 %v3324, %v3438
        %v3440 = vpop.f32.mrf.mxu0
        %v3441 = vadd.f32 %v3324, %v3440
        %3442 = vmatmul.bf16.gmra.mxu0 %v3284
        %v3443 = vpop.f32.mrf.mxu0
        %v3444 = vadd.f32 %v3324, %v3443
        %v3445 = vpop.f32.mrf.mxu0
        %v3446 = vadd.f32 %v3324, %v3445
        %3447 = vmatmul.bf16.gmra.mxu0 %v3285
        %v3448 = vpop.f32.mrf.mxu0
        %v3449 = vadd.f32 %v3324, %v3448
        %v3450 = vpop.f32.mrf.mxu0
        %v3451 = vadd.f32 %v3324, %v3450
        %3452 = vmatmul.bf16.gmra.mxu0 %v3286
        %v3453 = vpop.f32.mrf.mxu0
        %v3454 = vadd.f32 %v3324, %v3453
        %v3455 = vpop.f32.mrf.mxu0
        %v3456 = vadd.f32 %v3324, %v3455
        %3457 = vmatmul.bf16.gmra.mxu0 %v3287
        %v3458 = vpop.f32.mrf.mxu0
        %v3459 = vadd.f32 %v3324, %v3458
        %v3460 = vpop.f32.mrf.mxu0
        %v3461 = vadd.f32 %v3324, %v3460
        %3462 = vmatmul.bf16.gmra.mxu0 %v3288
        %v3463 = vpop.f32.mrf.mxu0
        %v3464 = vadd.f32 %v3324, %v3463
        %v3465 = vpop.f32.mrf.mxu0
        %v3466 = vadd.f32 %v3324, %v3465
        %3467 = vmatmul.bf16.gmra.mxu0 %v3289
        %v3468 = vpop.f32.mrf.mxu0
        %v3469 = vadd.f32 %v3324, %v3468
        %v3470 = vpop.f32.mrf.mxu0
        %v3471 = vadd.f32 %v3324, %v3470
        %3472 = vmatmul.bf16.gmra.mxu0 %v3290
        %v3473 = vpop.f32.mrf.mxu0
        %v3474 = vadd.f32 %v3324, %v3473
        %v3475 = vpop.f32.mrf.mxu0
        %v3476 = vadd.f32 %v3324, %v3475
        %3477 = vmatmul.bf16.gmra.mxu0 %v3291
        %v3478 = vpop.f32.mrf.mxu0
        %v3479 = vadd.f32 %v3324, %v3478
        %v3480 = vpop.f32.mrf.mxu0
        %v3481 = vadd.f32 %v3324, %v3480
        %3482 = vmatmul.bf16.gmra.mxu0 %v3292
        %v3483 = vpop.f32.mrf.mxu0
        %v3484 = vadd.f32 %v3324, %v3483
        %v3485 = vpop.f32.mrf.mxu0
        %v3486 = vadd.f32 %v3324, %v3485
        %3487 = vmatmul.bf16.gmra.mxu0 %v3293
        %v3488 = vpop.f32.mrf.mxu0
        %v3489 = vadd.f32 %v3324, %v3488
        %v3490 = vpop.f32.mrf.mxu0
        %v3491 = vadd.f32 %v3324, %v3490
        %3492 = vmatmul.bf16.gmra.mxu0 %v3294
        %v3493 = vpop.f32.mrf.mxu0
        %v3494 = vadd.f32 %v3324, %v3493
        %v3495 = vpop.f32.mrf.mxu0
        %v3496 = vadd.f32 %v3324, %v3495
        %3497 = vmatmul.bf16.gmra.mxu0 %v3295
        %v3498 = vpop.f32.mrf.mxu0
        %v3499 = vadd.f32 %v3324, %v3498
        %v3500 = vpop.f32.mrf.mxu0
        %v3501 = vadd.f32 %v3324, %v3500
        %3502 = vmatmul.bf16.gmra.mxu0 %v3296
        %v3503 = vpop.f32.mrf.mxu0
        %v3504 = vadd.f32 %v3324, %v3503
        %v3505 = vpop.f32.mrf.mxu0
        %v3506 = vadd.f32 %v3324, %v3505
        %3507 = vmatmul.bf16.gmra.mxu0 %v3297
        %v3508 = vpop.f32.mrf.mxu0
        %v3509 = vadd.f32 %v3324, %v3508
        %v3510 = vpop.f32.mrf.mxu0
        %v3511 = vadd.f32 %v3324, %v3510
        %3512 = vmatmul.bf16.gmra.mxu0 %v3298
        %v3513 = vpop.f32.mrf.mxu0
        %v3514 = vadd.f32 %v3324, %v3513
        %v3515 = vpop.f32.mrf.mxu0
        %v3516 = vadd.f32 %v3324, %v3515
        %3517 = vmatmul.bf16.gmra.mxu0 %v3299
        %v3518 = vpop.f32.mrf.mxu0
        %v3519 = vadd.f32 %v3324, %v3518
        %v3520 = vpop.f32.mrf.mxu0
        %v3521 = vadd.f32 %v3324, %v3520
        %3522 = vmatmul.bf16.gmra.mxu0 %v3300
        %v3523 = vpop.f32.mrf.mxu0
        %v3524 = vadd.f32 %v3324, %v3523
        %v3525 = vpop.f32.mrf.mxu0
        %v3526 = vadd.f32 %v3324, %v3525
        %3527 = vmatmul.bf16.gmra.mxu0 %v3301
        %v3528 = vpop.f32.mrf.mxu0
        %v3529 = vadd.f32 %v3324, %v3528
        %v3530 = vpop.f32.mrf.mxu0
        %v3531 = vadd.f32 %v3324, %v3530
        %3532 = vmatmul.bf16.gmra.mxu0 %v3302
        %v3533 = vpop.f32.mrf.mxu0
        %v3534 = vadd.f32 %v3324, %v3533
        %v3535 = vpop.f32.mrf.mxu0
        %v3536 = vadd.f32 %v3324, %v3535
        %3537 = vmatmul.bf16.gmra.mxu0 %v3303
        %v3538 = vpop.f32.mrf.mxu0
        %v3539 = vadd.f32 %v3324, %v3538
        %v3540 = vpop.f32.mrf.mxu0
        %v3541 = vadd.f32 %v3324, %v3540
        %3542 = vdwg.mxu0
        %v3543 = vmax.f32 %v3384, 0.0
        %v3544 = vmax.f32 %v3386, 0.0
        %v3545 = vmax.f32 %v3389, 0.0
        %v3546 = vmax.f32 %v3391, 0.0
        %v3547 = vmax.f32 %v3394, 0.0
        %v3548 = vmax.f32 %v3396, 0.0
        %v3549 = vmax.f32 %v3399, 0.0
        %v3550 = vmax.f32 %v3401, 0.0
        %v3551 = vmax.f32 %v3404, 0.0
        %v3552 = vmax.f32 %v3406, 0.0
        %v3553 = vmax.f32 %v3409, 0.0
        %v3554 = vmax.f32 %v3411, 0.0
        %v3555 = vmax.f32 %v3414, 0.0
        %v3556 = vmax.f32 %v3416, 0.0
        %v3557 = vmax.f32 %v3419, 0.0
        %v3558 = vmax.f32 %v3421, 0.0
        %v3559 = vmax.f32 %v3424, 0.0
        %v3560 = vmax.f32 %v3426, 0.0
        %v3561 = vmax.f32 %v3429, 0.0
        %v3562 = vmax.f32 %v3431, 0.0
        %v3563 = vmax.f32 %v3434, 0.0
        %v3564 = vmax.f32 %v3436, 0.0
        %v3565 = vmax.f32 %v3439, 0.0
        %v3566 = vmax.f32 %v3441, 0.0
        %v3567 = vmax.f32 %v3444, 0.0
        %v3568 = vmax.f32 %v3446, 0.0
        %v3569 = vmax.f32 %v3449, 0.0
        %v3570 = vmax.f32 %v3451, 0.0
        %v3571 = vmax.f32 %v3454, 0.0
        %v3572 = vmax.f32 %v3456, 0.0
        %v3573 = vmax.f32 %v3459, 0.0
        %v3574 = vmax.f32 %v3461, 0.0
        %v3575 = vmax.f32 %v3464, 0.0
        %v3576 = vmax.f32 %v3466, 0.0
        %v3577 = vmax.f32 %v3469, 0.0
        %v3578 = vmax.f32 %v3471, 0.0
        %v3579 = vmax.f32 %v3474, 0.0
        %v3580 = vmax.f32 %v3476, 0.0
        %v3581 = vmax.f32 %v3479, 0.0
        %v3582 = vmax.f32 %v3481, 0.0
        %v3583 = vmax.f32 %v3484, 0.0
        %v3584 = vmax.f32 %v3486, 0.0
        %v3585 = vmax.f32 %v3489, 0.0
        %v3586 = vmax.f32 %v3491, 0.0
        %v3587 = vmax.f32 %v3494, 0.0
        %v3588 = vmax.f32 %v3496, 0.0
        %v3589 = vmax.f32 %v3499, 0.0
        %v3590 = vmax.f32 %v3501, 0.0
        %v3591 = vmax.f32 %v3504, 0.0
        %v3592 = vmax.f32 %v3506, 0.0
        %v3593 = vmax.f32 %v3509, 0.0
        %v3594 = vmax.f32 %v3511, 0.0
        %v3595 = vmax.f32 %v3514, 0.0
        %v3596 = vmax.f32 %v3516, 0.0
        %v3597 = vmax.f32 %v3519, 0.0
        %v3598 = vmax.f32 %v3521, 0.0
        %v3599 = vmax.f32 %v3524, 0.0
        %v3600 = vmax.f32 %v3526, 0.0
        %v3601 = vmax.f32 %v3529, 0.0
        %v3602 = vmax.f32 %v3531, 0.0
        %v3603 = vmax.f32 %v3534, 0.0
        %v3604 = vmax.f32 %v3536, 0.0
        %v3605 = vmax.f32 %v3539, 0.0
        %v3606 = vmax.f32 %v3541, 0.0
        %v3607 = vpack.c.bf16 %v3544, %v3543
        %v3608 = vpack.c.bf16 %v3546, %v3545
        %v3609 = vpack.c.bf16 %v3548, %v3547
        %v3610 = vpack.c.bf16 %v3550, %v3549
        %v3611 = vpack.c.bf16 %v3552, %v3551
        %v3612 = vpack.c.bf16 %v3554, %v3553
        %v3613 = vpack.c.bf16 %v3556, %v3555
        %v3614 = vpack.c.bf16 %v3558, %v3557
        %v3615 = vpack.c.bf16 %v3560, %v3559
        %v3616 = vpack.c.bf16 %v3562, %v3561
        %v3617 = vpack.c.bf16 %v3564, %v3563
        %v3618 = vpack.c.bf16 %v3566, %v3565
        %v3619 = vpack.c.bf16 %v3568, %v3567
        %v3620 = vpack.c.bf16 %v3570, %v3569
        %v3621 = vpack.c.bf16 %v3572, %v3571
        %v3622 = vpack.c.bf16 %v3574, %v3573
        %v3623 = vpack.c.bf16 %v3576, %v3575
        %v3624 = vpack.c.bf16 %v3578, %v3577
        %v3625 = vpack.c.bf16 %v3580, %v3579
        %v3626 = vpack.c.bf16 %v3582, %v3581
        %v3627 = vpack.c.bf16 %v3584, %v3583
        %v3628 = vpack.c.bf16 %v3586, %v3585
        %v3629 = vpack.c.bf16 %v3588, %v3587
        %v3630 = vpack.c.bf16 %v3590, %v3589
        %v3631 = vpack.c.bf16 %v3592, %v3591
        %v3632 = vpack.c.bf16 %v3594, %v3593
        %v3633 = vpack.c.bf16 %v3596, %v3595
        %v3634 = vpack.c.bf16 %v3598, %v3597
        %v3635 = vpack.c.bf16 %v3600, %v3599
        %v3636 = vpack.c.bf16 %v3602, %v3601
        %v3637 = vpack.c.bf16 %v3604, %v3603
        %v3638 = vpack.c.bf16 %v3606, %v3605
        %s3639 = scalar_lea.vmem %s2, 512
        %v3640 = vld [vmem:[%s3639] sm:$0xf]
        %v3641 = vld [vmem:[%s3639 + $0x4] sm:$0xf]
        %v3642 = vld [vmem:[%s3639 + $0x8] sm:$0xf]
        %v3643 = vld [vmem:[%s3639 + $0xc] sm:$0xf]
        %v3644 = vld [vmem:[%s3639 + $0x10] sm:$0xf]
        %v3645 = vld [vmem:[%s3639 + $0x14] sm:$0xf]
        %v3646 = vld [vmem:[%s3639 + $0x18] sm:$0xf]
        %v3647 = vld [vmem:[%s3639 + $0x1c] sm:$0xf]
        %v3648 = vld [vmem:[%s3639 + $0x20] sm:$0xf]
        %v3649 = vld [vmem:[%s3639 + $0x24] sm:$0xf]
        %v3650 = vld [vmem:[%s3639 + $0x28] sm:$0xf]
        %v3651 = vld [vmem:[%s3639 + $0x2c] sm:$0xf]
        %v3652 = vld [vmem:[%s3639 + $0x30] sm:$0xf]
        %v3653 = vld [vmem:[%s3639 + $0x34] sm:$0xf]
        %v3654 = vld [vmem:[%s3639 + $0x38] sm:$0xf]
        %v3655 = vld [vmem:[%s3639 + $0x3c] sm:$0xf]
        %s3656 = scalar_lea.vmem [#allocation5], 9
        %v3657 = vld [vmem:[%s3656] sm:$0x1]
        %v3659 = vperm.slane %v3657, 0
        %v3677 = vunpack.c.l.b16 %v3640
        %v3678 = vunpack.c.l.b16 %v3641
        %v3679 = vunpack.c.l.b16 %v3642
        %v3680 = vunpack.c.l.b16 %v3643
        %v3681 = vunpack.c.l.b16 %v3644
        %v3682 = vunpack.c.l.b16 %v3645
        %v3683 = vunpack.c.l.b16 %v3646
        %v3684 = vunpack.c.l.b16 %v3647
        %v3685 = vunpack.c.l.b16 %v3648
        %v3686 = vunpack.c.l.b16 %v3649
        %v3687 = vunpack.c.l.b16 %v3650
        %v3688 = vunpack.c.l.b16 %v3651
        %v3689 = vunpack.c.l.b16 %v3652
        %v3690 = vunpack.c.l.b16 %v3653
        %v3691 = vunpack.c.l.b16 %v3654
        %v3692 = vunpack.c.l.b16 %v3655
        %v3693 = vpack.c.b16 %v3678, %v3677
        %v3694 = vpack.c.b16 %v3680, %v3679
        %v3695 = vpack.c.b16 %v3682, %v3681
        %v3696 = vpack.c.b16 %v3684, %v3683
        %v3697 = vpack.c.b16 %v3686, %v3685
        %v3698 = vpack.c.b16 %v3688, %v3687
        %v3699 = vpack.c.b16 %v3690, %v3689
        %v3700 = vpack.c.b16 %v3692, %v3691
        %3709 = vmatpush.bf16.msra.mxu0 %v3700
        %3710 = vmatpush.bf16.msra.mxu0 %v3699
        %3711 = vmatpush.bf16.msra.mxu0 %v3698
        %3712 = vmatpush.bf16.msra.mxu0 %v3697
        %3713 = vmatpush.bf16.msra.mxu0 %v3696
        %3714 = vmatpush.bf16.msra.mxu0 %v3695
        %3715 = vmatpush.bf16.msra.mxu0 %v3694
        %3716 = vmatpush.bf16.msra.mxu0 %v3693
        %3717 = vmatmul.bf16.gmra.mxu0 %v3607
        %v3718 = vpop.f32.mrf.mxu0
        %v3719 = vadd.f32 %v3659, %v3718
        %v3720 = vpop.f32.mrf.mxu0
        %v3721 = vadd.f32 %v3659, %v3720
        %3722 = vmatmul.bf16.gmra.mxu0 %v3608
        %v3723 = vpop.f32.mrf.mxu0
        %v3724 = vadd.f32 %v3659, %v3723
        %v3725 = vpop.f32.mrf.mxu0
        %v3726 = vadd.f32 %v3659, %v3725
        %3727 = vmatmul.bf16.gmra.mxu0 %v3609
        %v3728 = vpop.f32.mrf.mxu0
        %v3729 = vadd.f32 %v3659, %v3728
        %v3730 = vpop.f32.mrf.mxu0
        %v3731 = vadd.f32 %v3659, %v3730
        %3732 = vmatmul.bf16.gmra.mxu0 %v3610
        %v3733 = vpop.f32.mrf.mxu0
        %v3734 = vadd.f32 %v3659, %v3733
        %v3735 = vpop.f32.mrf.mxu0
        %v3736 = vadd.f32 %v3659, %v3735
        %3737 = vmatmul.bf16.gmra.mxu0 %v3611
        %v3738 = vpop.f32.mrf.mxu0
        %v3739 = vadd.f32 %v3659, %v3738
        %v3740 = vpop.f32.mrf.mxu0
        %v3741 = vadd.f32 %v3659, %v3740
        %3742 = vmatmul.bf16.gmra.mxu0 %v3612
        %v3743 = vpop.f32.mrf.mxu0
        %v3744 = vadd.f32 %v3659, %v3743
        %v3745 = vpop.f32.mrf.mxu0
        %v3746 = vadd.f32 %v3659, %v3745
        %3747 = vmatmul.bf16.gmra.mxu0 %v3613
        %v3748 = vpop.f32.mrf.mxu0
        %v3749 = vadd.f32 %v3659, %v3748
        %v3750 = vpop.f32.mrf.mxu0
        %v3751 = vadd.f32 %v3659, %v3750
        %3752 = vmatmul.bf16.gmra.mxu0 %v3614
        %v3753 = vpop.f32.mrf.mxu0
        %v3754 = vadd.f32 %v3659, %v3753
        %v3755 = vpop.f32.mrf.mxu0
        %v3756 = vadd.f32 %v3659, %v3755
        %3757 = vmatmul.bf16.gmra.mxu0 %v3615
        %v3758 = vpop.f32.mrf.mxu0
        %v3759 = vadd.f32 %v3659, %v3758
        %v3760 = vpop.f32.mrf.mxu0
        %v3761 = vadd.f32 %v3659, %v3760
        %3762 = vmatmul.bf16.gmra.mxu0 %v3616
        %v3763 = vpop.f32.mrf.mxu0
        %v3764 = vadd.f32 %v3659, %v3763
        %v3765 = vpop.f32.mrf.mxu0
        %v3766 = vadd.f32 %v3659, %v3765
        %3767 = vmatmul.bf16.gmra.mxu0 %v3617
        %v3768 = vpop.f32.mrf.mxu0
        %v3769 = vadd.f32 %v3659, %v3768
        %v3770 = vpop.f32.mrf.mxu0
        %v3771 = vadd.f32 %v3659, %v3770
        %3772 = vmatmul.bf16.gmra.mxu0 %v3618
        %v3773 = vpop.f32.mrf.mxu0
        %v3774 = vadd.f32 %v3659, %v3773
        %v3775 = vpop.f32.mrf.mxu0
        %v3776 = vadd.f32 %v3659, %v3775
        %3777 = vmatmul.bf16.gmra.mxu0 %v3619
        %v3778 = vpop.f32.mrf.mxu0
        %v3779 = vadd.f32 %v3659, %v3778
        %v3780 = vpop.f32.mrf.mxu0
        %v3781 = vadd.f32 %v3659, %v3780
        %3782 = vmatmul.bf16.gmra.mxu0 %v3620
        %v3783 = vpop.f32.mrf.mxu0
        %v3784 = vadd.f32 %v3659, %v3783
        %v3785 = vpop.f32.mrf.mxu0
        %v3786 = vadd.f32 %v3659, %v3785
        %3787 = vmatmul.bf16.gmra.mxu0 %v3621
        %v3788 = vpop.f32.mrf.mxu0
        %v3789 = vadd.f32 %v3659, %v3788
        %v3790 = vpop.f32.mrf.mxu0
        %v3791 = vadd.f32 %v3659, %v3790
        %3792 = vmatmul.bf16.gmra.mxu0 %v3622
        %v3793 = vpop.f32.mrf.mxu0
        %v3794 = vadd.f32 %v3659, %v3793
        %v3795 = vpop.f32.mrf.mxu0
        %v3796 = vadd.f32 %v3659, %v3795
        %3797 = vmatmul.bf16.gmra.mxu0 %v3623
        %v3798 = vpop.f32.mrf.mxu0
        %v3799 = vadd.f32 %v3659, %v3798
        %v3800 = vpop.f32.mrf.mxu0
        %v3801 = vadd.f32 %v3659, %v3800
        %3802 = vmatmul.bf16.gmra.mxu0 %v3624
        %v3803 = vpop.f32.mrf.mxu0
        %v3804 = vadd.f32 %v3659, %v3803
        %v3805 = vpop.f32.mrf.mxu0
        %v3806 = vadd.f32 %v3659, %v3805
        %3807 = vmatmul.bf16.gmra.mxu0 %v3625
        %v3808 = vpop.f32.mrf.mxu0
        %v3809 = vadd.f32 %v3659, %v3808
        %v3810 = vpop.f32.mrf.mxu0
        %v3811 = vadd.f32 %v3659, %v3810
        %3812 = vmatmul.bf16.gmra.mxu0 %v3626
        %v3813 = vpop.f32.mrf.mxu0
        %v3814 = vadd.f32 %v3659, %v3813
        %v3815 = vpop.f32.mrf.mxu0
        %v3816 = vadd.f32 %v3659, %v3815
        %3817 = vmatmul.bf16.gmra.mxu0 %v3627
        %v3818 = vpop.f32.mrf.mxu0
        %v3819 = vadd.f32 %v3659, %v3818
        %v3820 = vpop.f32.mrf.mxu0
        %v3821 = vadd.f32 %v3659, %v3820
        %3822 = vmatmul.bf16.gmra.mxu0 %v3628
        %v3823 = vpop.f32.mrf.mxu0
        %v3824 = vadd.f32 %v3659, %v3823
        %v3825 = vpop.f32.mrf.mxu0
        %v3826 = vadd.f32 %v3659, %v3825
        %3827 = vmatmul.bf16.gmra.mxu0 %v3629
        %v3828 = vpop.f32.mrf.mxu0
        %v3829 = vadd.f32 %v3659, %v3828
        %v3830 = vpop.f32.mrf.mxu0
        %v3831 = vadd.f32 %v3659, %v3830
        %3832 = vmatmul.bf16.gmra.mxu0 %v3630
        %v3833 = vpop.f32.mrf.mxu0
        %v3834 = vadd.f32 %v3659, %v3833
        %v3835 = vpop.f32.mrf.mxu0
        %v3836 = vadd.f32 %v3659, %v3835
        %3837 = vmatmul.bf16.gmra.mxu0 %v3631
        %v3838 = vpop.f32.mrf.mxu0
        %v3839 = vadd.f32 %v3659, %v3838
        %v3840 = vpop.f32.mrf.mxu0
        %v3841 = vadd.f32 %v3659, %v3840
        %3842 = vmatmul.bf16.gmra.mxu0 %v3632
        %v3843 = vpop.f32.mrf.mxu0
        %v3844 = vadd.f32 %v3659, %v3843
        %v3845 = vpop.f32.mrf.mxu0
        %v3846 = vadd.f32 %v3659, %v3845
        %3847 = vmatmul.bf16.gmra.mxu0 %v3633
        %v3848 = vpop.f32.mrf.mxu0
        %v3849 = vadd.f32 %v3659, %v3848
        %v3850 = vpop.f32.mrf.mxu0
        %v3851 = vadd.f32 %v3659, %v3850
        %3852 = vmatmul.bf16.gmra.mxu0 %v3634
        %v3853 = vpop.f32.mrf.mxu0
        %v3854 = vadd.f32 %v3659, %v3853
        %v3855 = vpop.f32.mrf.mxu0
        %v3856 = vadd.f32 %v3659, %v3855
        %3857 = vmatmul.bf16.gmra.mxu0 %v3635
        %v3858 = vpop.f32.mrf.mxu0
        %v3859 = vadd.f32 %v3659, %v3858
        %v3860 = vpop.f32.mrf.mxu0
        %v3861 = vadd.f32 %v3659, %v3860
        %3862 = vmatmul.bf16.gmra.mxu0 %v3636
        %v3863 = vpop.f32.mrf.mxu0
        %v3864 = vadd.f32 %v3659, %v3863
        %v3865 = vpop.f32.mrf.mxu0
        %v3866 = vadd.f32 %v3659, %v3865
        %3867 = vmatmul.bf16.gmra.mxu0 %v3637
        %v3868 = vpop.f32.mrf.mxu0
        %v3869 = vadd.f32 %v3659, %v3868
        %v3870 = vpop.f32.mrf.mxu0
        %v3871 = vadd.f32 %v3659, %v3870
        %3872 = vmatmul.bf16.gmra.mxu0 %v3638
        %v3873 = vpop.f32.mrf.mxu0
        %v3874 = vadd.f32 %v3659, %v3873
        %v3875 = vpop.f32.mrf.mxu0
        %v3876 = vadd.f32 %v3659, %v3875
        %3877 = vdwg.mxu0
        %3878 = vst [vmem:[%s225] sm:$0xff] %v3719
        %3879 = vst [vmem:[%s225 + $0x8] sm:$0xff] %v3721
        %3880 = vst [vmem:[%s225 + $0x10] sm:$0xff] %v3724
        %3881 = vst [vmem:[%s225 + $0x18] sm:$0xff] %v3726
        %3882 = vst [vmem:[%s225 + $0x20] sm:$0xff] %v3729
        %3883 = vst [vmem:[%s225 + $0x28] sm:$0xff] %v3731
        %3884 = vst [vmem:[%s225 + $0x30] sm:$0xff] %v3734
        %3885 = vst [vmem:[%s225 + $0x38] sm:$0xff] %v3736
        %3886 = vst [vmem:[%s225 + $0x40] sm:$0xff] %v3739
        %3887 = vst [vmem:[%s225 + $0x48] sm:$0xff] %v3741
        %3888 = vst [vmem:[%s225 + $0x50] sm:$0xff] %v3744
        %3889 = vst [vmem:[%s225 + $0x58] sm:$0xff] %v3746
        %3890 = vst [vmem:[%s225 + $0x60] sm:$0xff] %v3749
        %3891 = vst [vmem:[%s225 + $0x68] sm:$0xff] %v3751
        %3892 = vst [vmem:[%s225 + $0x70] sm:$0xff] %v3754
        %3893 = vst [vmem:[%s225 + $0x78] sm:$0xff] %v3756
        %3894 = vst [vmem:[%s225 + $0x80] sm:$0xff] %v3759
        %3895 = vst [vmem:[%s225 + $0x88] sm:$0xff] %v3761
        %3896 = vst [vmem:[%s225 + $0x90] sm:$0xff] %v3764
        %3897 = vst [vmem:[%s225 + $0x98] sm:$0xff] %v3766
        %3898 = vst [vmem:[%s225 + $0xa0] sm:$0xff] %v3769
        %3899 = vst [vmem:[%s225 + $0xa8] sm:$0xff] %v3771
        %3900 = vst [vmem:[%s225 + $0xb0] sm:$0xff] %v3774
        %3901 = vst [vmem:[%s225 + $0xb8] sm:$0xff] %v3776
        %3902 = vst [vmem:[%s225 + $0xc0] sm:$0xff] %v3779
        %3903 = vst [vmem:[%s225 + $0xc8] sm:$0xff] %v3781
        %3904 = vst [vmem:[%s225 + $0xd0] sm:$0xff] %v3784
        %3905 = vst [vmem:[%s225 + $0xd8] sm:$0xff] %v3786
        %3906 = vst [vmem:[%s225 + $0xe0] sm:$0xff] %v3789
        %3907 = vst [vmem:[%s225 + $0xe8] sm:$0xff] %v3791
        %3908 = vst [vmem:[%s225 + $0xf0] sm:$0xff] %v3794
        %3909 = vst [vmem:[%s225 + $0xf8] sm:$0xff] %v3796
        %3910 = vst [vmem:[%s225 + $0x100] sm:$0xff] %v3799
        %3911 = vst [vmem:[%s225 + $0x108] sm:$0xff] %v3801
        %3912 = vst [vmem:[%s225 + $0x110] sm:$0xff] %v3804
        %3913 = vst [vmem:[%s225 + $0x118] sm:$0xff] %v3806
        %3914 = vst [vmem:[%s225 + $0x120] sm:$0xff] %v3809
        %3915 = vst [vmem:[%s225 + $0x128] sm:$0xff] %v3811
        %3916 = vst [vmem:[%s225 + $0x130] sm:$0xff] %v3814
        %3917 = vst [vmem:[%s225 + $0x138] sm:$0xff] %v3816
        %3918 = vst [vmem:[%s225 + $0x140] sm:$0xff] %v3819
        %3919 = vst [vmem:[%s225 + $0x148] sm:$0xff] %v3821
        %3920 = vst [vmem:[%s225 + $0x150] sm:$0xff] %v3824
        %3921 = vst [vmem:[%s225 + $0x158] sm:$0xff] %v3826
        %3922 = vst [vmem:[%s225 + $0x160] sm:$0xff] %v3829
        %3923 = vst [vmem:[%s225 + $0x168] sm:$0xff] %v3831
        %3924 = vst [vmem:[%s225 + $0x170] sm:$0xff] %v3834
        %3925 = vst [vmem:[%s225 + $0x178] sm:$0xff] %v3836
        %3926 = vst [vmem:[%s225 + $0x180] sm:$0xff] %v3839
        %3927 = vst [vmem:[%s225 + $0x188] sm:$0xff] %v3841
        %3928 = vst [vmem:[%s225 + $0x190] sm:$0xff] %v3844
        %3929 = vst [vmem:[%s225 + $0x198] sm:$0xff] %v3846
        %3930 = vst [vmem:[%s225 + $0x1a0] sm:$0xff] %v3849
        %3931 = vst [vmem:[%s225 + $0x1a8] sm:$0xff] %v3851
        %3932 = vst [vmem:[%s225 + $0x1b0] sm:$0xff] %v3854
        %3933 = vst [vmem:[%s225 + $0x1b8] sm:$0xff] %v3856
        %3934 = vst [vmem:[%s225 + $0x1c0] sm:$0xff] %v3859
        %3935 = vst [vmem:[%s225 + $0x1c8] sm:$0xff] %v3861
        %3936 = vst [vmem:[%s225 + $0x1d0] sm:$0xff] %v3864
        %3937 = vst [vmem:[%s225 + $0x1d8] sm:$0xff] %v3866
        %3938 = vst [vmem:[%s225 + $0x1e0] sm:$0xff] %v3869
        %3939 = vst [vmem:[%s225 + $0x1e8] sm:$0xff] %v3871
        %3940 = vst [vmem:[%s225 + $0x1f0] sm:$0xff] %v3874
        %3941 = vst [vmem:[%s225 + $0x1f8] sm:$0xff] %v3876
        %s3942 = sand.u32 %s117, 1
        %s3943 = scalar_lea.sflag [#allocation4], %s3942
        %s3944 = sand.u32 %s117, 1
        %s3945 = smul.addr %s3944, 512
        %s3946 = scalar_lea.vmem [#allocation7], %s3945
        // Predicated region
        $region45: #{tpu_custom_call.1} parent=35 // pred_check
          %p3947 = pneg %p127
        $region46: #{tpu_custom_call.1} parent=35 // pred_check_branch
          %3949 = sbr.rel (%p3947) target = $region48
        $region47: #{tpu_custom_call.1} parent=35 // pred_region
          %s3950 = smul.u32 64, %s20
          %3952 = vsyncadd %s3943, 0
          %s3953 = smul.addr %s3950, 8
          %s3954 = scalar_lea.hbm %s4, %s3953
          %s3955 = sshll.u32 %s3946, 4
          %s3956 = int_to_ptr.vmem [resolvable:$true] %s3955
          %s3957 = sshll.u32 %s3954, 4
          %s3958 = int_to_ptr.hbm [resolvable:$true] %s3957
          %3963 = dma.vmem_to_hbm [thread:$0]  %s3956, 8192, %s3958, %s3943, 128, 128, 8
        $region48: #{tpu_custom_call.1} parent=35 // pred_fallthru
          _
      $region36: #{tpu_custom_call.1} parent=5 // pred_fallthru
        _
      %p3964 = scmp.le.s32.totalorder 2, %s15
      // Predicated region
      $region49: #{tpu_custom_call.1} parent=5 // pred_check
        %p3965 = pneg %p3964
      $region50: #{tpu_custom_call.1} parent=5 // pred_check_branch
        %3967 = sbr.rel (%p3965) target = $region52
      $region51: #{tpu_custom_call.1} parent=5 // pred_region
        %s3968 = ssub.s32 %s15, 2
        // Predicated region
        $region53: #{tpu_custom_call.1} parent=51 // pred_check
          %p3969 = pneg %p133
        $region54: #{tpu_custom_call.1} parent=51 // pred_check_branch
          %3971 = sbr.rel (%p3969) target = $region56
        $region55: #{tpu_custom_call.1} parent=51 // pred_region
          %s3972 = sand.u32 %s118, 1
          %s3973 = scalar_lea.sflag [#allocation4], %s3972
          %s3974 = sand.u32 %s118, 1
          %s3975 = smul.addr %s3974, 512
          %s3976 = scalar_lea.vmem [#allocation7], %s3975
          %3978 = dma.done %s3973, 8192
        $region56: #{tpu_custom_call.1} parent=51 // pred_fallthru
          _
      $region52: #{tpu_custom_call.1} parent=5 // pred_fallthru
        _
    $region6: #{tpu_custom_call.1} parent=1 // loop_footer
      %s19 = sadd.s32 1, %s15
    $region7: #{tpu_custom_call.1} parent=1 // loop_footer_branch
      %14 = sbr.rel target = $region3
    $region8: #{tpu_custom_call.1} parent=1 // loop_exit
      _
    %3979 = vsyncpa [#allocation3], 1
    %s3980 = scalar_lea.sflag [#allocation3], 1
    %3981 = vsyncpa %s3980, 1
    %3982 = vsyncpa [#allocation6], 1
    %3983 = vsyncpa [#allocation4], 1
    %s3984 = scalar_lea.sflag [#allocation4], 1
    %3985 = vsyncpa %s3984, 1

</llo_original>
